<compile_context>
chip_gen: v7x
topology: tpu7x:2x2x1
jax: 0.10.0
libtpu: 0.0.40
codegen_flags: <defaults>
</compile_context>

<pallas_src>
import functools

import jax
import jax.numpy as jnp
from jax import lax
from jax.experimental import pallas as pl
from jax.experimental.pallas import tpu as pltpu


# ----------------------------------------------------------------------------
# Bidirectional LSTM layer kernel: both directions, in-kernel time loop.
# Inputs gx_f / gx_b already contain x @ W_ih^T + (b_ih + b_hh) (hoisted).
# ----------------------------------------------------------------------------
def _bilstm_layer_kernel(gxf_ref, gxb_ref, whhf_ref, whhb_ref, h0_ref, c0_ref,
                         y_ref, hn_ref, cn_ref,
                         hf_sc, cf_sc, hb_sc, cb_sc, *, T, H):
    # initial hidden / cell state for both directions
    hf_sc[...] = h0_ref[0]
    cf_sc[...] = c0_ref[0]
    hb_sc[...] = h0_ref[1]
    cb_sc[...] = c0_ref[1]

    def cell(gates, c_prev):
        # PyTorch gate order: i, f, g, o
        i_g = jax.nn.sigmoid(gates[:, 0 * H:1 * H])
        f_g = jax.nn.sigmoid(gates[:, 1 * H:2 * H])
        g_g = jnp.tanh(gates[:, 2 * H:3 * H])
        o_g = jax.nn.sigmoid(gates[:, 3 * H:4 * H])
        c_new = f_g * c_prev + i_g * g_g
        h_new = o_g * jnp.tanh(c_new)
        return h_new, c_new

    def step(t, carry):
        # forward direction, timestep t (only the recurrent matmul is here)
        gates_f = gxf_ref[t] + jnp.dot(hf_sc[...], whhf_ref[...],
                                       preferred_element_type=jnp.float32)
        h_f, c_f = cell(gates_f, cf_sc[...])
        hf_sc[...] = h_f
        cf_sc[...] = c_f
        y_ref[t, :, 0:H] = h_f

        # backward direction, timestep T-1-t (time reversal done via indexing)
        tb = T - 1 - t
        gates_b = gxb_ref[tb] + jnp.dot(hb_sc[...], whhb_ref[...],
                                        preferred_element_type=jnp.float32)
        h_b, c_b = cell(gates_b, cb_sc[...])
        hb_sc[...] = h_b
        cb_sc[...] = c_b
        y_ref[tb, :, H:2 * H] = h_b
        return carry

    lax.fori_loop(0, T, step, 0, unroll=True)

    # final hidden / cell states written once (not every timestep)
    hn_ref[0] = hf_sc[...]
    hn_ref[1] = hb_sc[...]
    cn_ref[0] = cf_sc[...]
    cn_ref[1] = cb_sc[...]


def bilstm_layer(gx_f, gx_b, whh_f_t, whh_b_t, h0, c0):
    """gx_*: (T, B, 4H) pre-projected inputs; whh_*_t: (H, 4H); h0/c0: (2, B, H)."""
    T, B, G = gx_f.shape
    H = G // 4
    kernel = functools.partial(_bilstm_layer_kernel, T=T, H=H)
    out_shapes = (
        jax.ShapeDtypeStruct((T, B, 2 * H), jnp.float32),
        jax.ShapeDtypeStruct((2, B, H), jnp.float32),
        jax.ShapeDtypeStruct((2, B, H), jnp.float32),
    )
    return pl.pallas_call(
        kernel,
        out_shape=out_shapes,
        grid_spec=pltpu.PrefetchScalarGridSpec(
            num_scalar_prefetch=0,
            grid=(1,),                       # single invocation: whole layer in VMEM
            in_specs=[
                pl.BlockSpec((T, B, 4 * H), lambda i: (0, 0, 0)),
                pl.BlockSpec((T, B, 4 * H), lambda i: (0, 0, 0)),
                pl.BlockSpec((H, 4 * H), lambda i: (0, 0)),
                pl.BlockSpec((H, 4 * H), lambda i: (0, 0)),
                pl.BlockSpec((2, B, H), lambda i: (0, 0, 0)),
                pl.BlockSpec((2, B, H), lambda i: (0, 0, 0)),
            ],
            out_specs=[
                pl.BlockSpec((T, B, 2 * H), lambda i: (0, 0, 0)),
                pl.BlockSpec((2, B, H), lambda i: (0, 0, 0)),
                pl.BlockSpec((2, B, H), lambda i: (0, 0, 0)),
            ],
            scratch_shapes=[pltpu.VMEM((B, H), jnp.float32)] * 4,
        ),
        compiler_params=pltpu.CompilerParams(
            dimension_semantics=("arbitrary",)),
    )(gx_f, gx_b, whh_f_t, whh_b_t, h0, c0)


# ----------------------------------------------------------------------------
# GlobalAttention (attn_type='mlp') kernel: batched projections + softmax.
# ----------------------------------------------------------------------------
def _mlp_attn_kernel(q_ref, ctx_ref, wq_t_ref, bq_ref, wc_t_ref, v_ref,
                     align_ref, *, B, T, S):
    # Hoisted projections: single batched matmuls over ALL (batch*time) and
    # (batch*source) rows instead of per-batch tiny matmuls.
    wq_all = jnp.dot(q_ref[...], wq_t_ref[...],
                     preferred_element_type=jnp.float32) + bq_ref[...]    # (B*T, D)
    uh_all = jnp.dot(ctx_ref[...], wc_t_ref[...],
                     preferred_element_type=jnp.float32)                  # (B*S, D)
    v = v_ref[...]                                                        # (1, D)

    # B is tiny and static -> unrolled python loop (no per-batch grid overhead).
    for b in range(B):
        wq_b = wq_all[b * T:(b + 1) * T, :]                               # (T, D)
        uh_b = uh_all[b * S:(b + 1) * S, :]                               # (S, D)
        wquh = jnp.tanh(wq_b[:, None, :] + uh_b[None, :, :])              # (T, S, D)
        scores = jnp.sum(wquh * v[None, :, :], axis=-1)                   # (T, S)
        # softmax over the source dimension
        m = jnp.max(scores, axis=-1, keepdims=True)
        e = jnp.exp(scores - m)
        denom = jnp.sum(e, axis=-1, keepdims=True)
        align_ref[b] = e * pl.reciprocal(denom, approx=True)
    # TODO(synk): for production src_len, tile over S with an online softmax so
    # the (T, S, D) temporary stays within VMEM (matters first on v7x 64 MiB).


def mlp_attention(query, context, wq, bq, wc, v):
    """query: (B, T, D); context: (B, S, D); returns align (B, T, S)."""
    B, T, D = query.shape
    S = context.shape[1]
    kernel = functools.partial(_mlp_attn_kernel, B=B, T=T, S=S)
    return pl.pallas_call(
        kernel,
        out_shape=jax.ShapeDtypeStruct((B, T, S), jnp.float32),
        grid_spec=pltpu.PrefetchScalarGridSpec(
            num_scalar_prefetch=0,
            grid=(1,),
            in_specs=[
                pl.BlockSpec((B * T, D), lambda i: (0, 0)),
                pl.BlockSpec((B * S, D), lambda i: (0, 0)),
                pl.BlockSpec((D, D), lambda i: (0, 0)),
                pl.BlockSpec((1, D), lambda i: (0, 0)),
                pl.BlockSpec((D, D), lambda i: (0, 0)),
                pl.BlockSpec((1, D), lambda i: (0, 0)),
            ],
            out_specs=pl.BlockSpec((B, T, S), lambda i: (0, 0, 0)),
        ),
        compiler_params=pltpu.CompilerParams(
            dimension_semantics=("arbitrary",)),
    )(query.reshape(B * T, D), context.reshape(B * S, D),
      jnp.transpose(wq), bq.reshape(1, D), jnp.transpose(wc), v)


# ----------------------------------------------------------------------------
# Full PointerNetRNNDecoder.forward
# ----------------------------------------------------------------------------
def pointer_net_rnn_decoder(tgt, src, hidden, params, *, num_layers):
    T, B, _ = tgt.shape
    h0_all, c0_all = hidden
    H = h0_all.shape[2]

    layer_input = tgt                                   # (T, B, Din)
    h_n_list, c_n_list = [], []

    for layer in range(num_layers):
        p_f = params["lstm"][layer]["fwd"]
        p_b = params["lstm"][layer]["bwd"]
        din = layer_input.shape[2]
        x2 = layer_input.reshape(T * B, din)
        # Hoisted input projection: one big MXU-friendly matmul per direction;
        # only h @ W_hh remains inside the sequential recurrence.
        gx_f = (jnp.dot(x2, p_f["w_ih"].T)
                + (p_f["b_ih"] + p_f["b_hh"])).reshape(T, B, 4 * H)
        gx_b = (jnp.dot(x2, p_b["w_ih"].T)
                + (p_b["b_ih"] + p_b["b_hh"])).reshape(T, B, 4 * H)

        y, hn, cn = bilstm_layer(
            gx_f, gx_b,
            jnp.transpose(p_f["w_hh"]), jnp.transpose(p_b["w_hh"]),
            h0_all[2 * layer:2 * layer + 2], c0_all[2 * layer:2 * layer + 2])

        layer_input = y                                 # (T, B, 2H)
        h_n_list.append(hn)
        c_n_list.append(cn)
        # TODO(synk): inter-layer dropout (args.dropout_p) omitted — inference semantics.

    rnn_output = jnp.transpose(layer_input, (1, 0, 2))  # (B, T, 2H)
    h_n = jnp.concatenate(h_n_list, axis=0)             # (num_layers*2, B, H)
    c_n = jnp.concatenate(c_n_list, axis=0)

    att = params["attn"]
    align_score = mlp_attention(rnn_output, src, att["wq"], att["bq"],
                                att["wc"], att["v"])
    # attn_h = linear_out([c; rnn_output]) is not part of the module's return.
    return align_score, rnn_output, (h_n, c_n)


# ----------------------------------------------------------------------------
# Deterministic parameter construction + example run
# ----------------------------------------------------------------------------
def make_params(key, input_dim, hidden_size, num_layers):
    D = 2 * hidden_size
    params = {"lstm": [], "attn": {}}
    k = key
    for layer in range(num_layers):
        din = input_dim if layer == 0 else 2 * hidden_size
        layer_p = {}
        for dname in ("fwd", "bwd"):
            k, k1, k2, k3, k4 = jax.random.split(k, 5)
            layer_p[dname] = {
                "w_ih": 0.1 * jax.random.normal(k1, (4 * hidden_size, din),
                                                jnp.float32),
                "w_hh": 0.1 * jax.random.normal(k2, (4 * hidden_size,
                                                     hidden_size), jnp.float32),
                "b_ih": 0.1 * jax.random.normal(k3, (4 * hidden_size,),
                                                jnp.float32),
                "b_hh": 0.1 * jax.random.normal(k4, (4 * hidden_size,),
                                                jnp.float32),
            }
        params["lstm"].append(layer_p)
    k, kq, kqb, kc, kv = jax.random.split(k, 5)
    params["attn"] = {
        "wq": 0.1 * jax.random.normal(kq, (D, D), jnp.float32),   # linear_query
        "bq": 0.1 * jax.random.normal(kqb, (D,), jnp.float32),
        "wc": 0.1 * jax.random.normal(kc, (D, D), jnp.float32),   # linear_context
        "v": 0.1 * jax.random.normal(kv, (1, D), jnp.float32),    # v (Linear(D,1))
    }
    return params


if __name__ == "__main__":
    B, T, S = 2, 8, 8          # batch, tgt_len, src_len
    input_dim = 16
    hidden_size = 32
    num_layers = 2
    D = 2 * hidden_size

    key = jax.random.PRNGKey(0)
    k_tgt, k_src, k_h0, k_c0, k_par = jax.random.split(key, 5)

    tgt = jax.random.normal(k_tgt, (T, B, input_dim), jnp.float32)
    src = jax.random.normal(k_src, (B, S, D), jnp.float32)
    h0 = jax.random.normal(k_h0, (num_layers * 2, B, hidden_size), jnp.float32)
    c0 = jax.random.normal(k_c0, (num_layers * 2, B, hidden_size), jnp.float32)
    params = make_params(k_par, input_dim, hidden_size, num_layers)

    align_score, rnn_output, (h_n, c_n) = pointer_net_rnn_decoder(
        tgt, src, (h0, c0), params, num_layers=num_layers)

    jax.block_until_ready((align_score, rnn_output, h_n, c_n))
    assert align_score.shape == (B, T, S)
    assert rnn_output.shape == (B, T, D)
    assert h_n.shape == (num_layers * 2, B, hidden_size)
    assert c_n.shape == (num_layers * 2, B, hidden_size)
    print("KERNEL_OK")
</pallas_src>

<mosaic_0001>
module attributes {stable_mosaic.version = 11 : i64} {
  func.func @_bilstm_layer_kernel(%arg0: i32, %arg1: memref<8x2x128xf32, #tpu.memory_space<vmem>>, %arg2: memref<8x2x128xf32, #tpu.memory_space<vmem>>, %arg3: memref<32x128xf32, #tpu.memory_space<vmem>>, %arg4: memref<32x128xf32, #tpu.memory_space<vmem>>, %arg5: memref<2x2x32xf32, #tpu.memory_space<vmem>>, %arg6: memref<2x2x32xf32, #tpu.memory_space<vmem>>, %arg7: memref<8x2x64xf32, #tpu.memory_space<vmem>>, %arg8: memref<2x2x32xf32, #tpu.memory_space<vmem>>, %arg9: memref<2x2x32xf32, #tpu.memory_space<vmem>>, %arg10: memref<2x32xf32, #tpu.memory_space<vmem>>, %arg11: memref<2x32xf32, #tpu.memory_space<vmem>>, %arg12: memref<2x32xf32, #tpu.memory_space<vmem>>, %arg13: memref<2x32xf32, #tpu.memory_space<vmem>>) attributes {dimension_semantics = [#tpu.dimension_semantics<arbitrary>], iteration_bounds = array<i64: 1>, scalar_prefetch = 0 : i64, scratch_operands = 4 : i64, tpu.core_type = #tpu.core_type<tc>, window_params = [{pipeline_mode = #tpu.pipeline_mode<synchronous>, transform_indices = @transform_0, window_bounds = array<i64: 8, 2, 128>}, {pipeline_mode = #tpu.pipeline_mode<synchronous>, transform_indices = @transform_1, window_bounds = array<i64: 8, 2, 128>}, {pipeline_mode = #tpu.pipeline_mode<synchronous>, transform_indices = @transform_2, window_bounds = array<i64: 32, 128>}, {pipeline_mode = #tpu.pipeline_mode<synchronous>, transform_indices = @transform_3, window_bounds = array<i64: 32, 128>}, {pipeline_mode = #tpu.pipeline_mode<synchronous>, transform_indices = @transform_4, window_bounds = array<i64: 2, 2, 32>}, {pipeline_mode = #tpu.pipeline_mode<synchronous>, transform_indices = @transform_5, window_bounds = array<i64: 2, 2, 32>}, {pipeline_mode = #tpu.pipeline_mode<synchronous>, transform_indices = @transform_6, window_bounds = array<i64: 8, 2, 64>}, {pipeline_mode = #tpu.pipeline_mode<synchronous>, transform_indices = @transform_7, window_bounds = array<i64: 2, 2, 32>}, {pipeline_mode = #tpu.pipeline_mode<synchronous>, transform_indices = @transform_8, window_bounds = array<i64: 2, 2, 32>}]} {
    %c0 = arith.constant 0 : index
    %c0_0 = arith.constant 0 : index
    %c0_1 = arith.constant 0 : index
    %0 = vector.load %arg5[%c0, %c0_0, %c0_1] : memref<2x2x32xf32, #tpu.memory_space<vmem>>, vector<1x2x32xf32>
    %1 = vector.shape_cast %0 : vector<1x2x32xf32> to vector<2x32xf32>
    %c0_2 = arith.constant 0 : index
    %c0_3 = arith.constant 0 : index
    %2 = vector.load %arg10[%c0_2, %c0_3] : memref<2x32xf32, #tpu.memory_space<vmem>>, vector<2x32xf32>
    tpu.vector_store %arg10[%c0_2, %c0_3], %1 {strides = array<i32>} : memref<2x32xf32, #tpu.memory_space<vmem>>, vector<2x32xf32>,
    %c0_4 = arith.constant 0 : index
    %c0_5 = arith.constant 0 : index
    %c0_6 = arith.constant 0 : index
    %3 = vector.load %arg6[%c0_4, %c0_5, %c0_6] : memref<2x2x32xf32, #tpu.memory_space<vmem>>, vector<1x2x32xf32>
    %4 = vector.shape_cast %3 : vector<1x2x32xf32> to vector<2x32xf32>
    %c0_7 = arith.constant 0 : index
    %c0_8 = arith.constant 0 : index
    %5 = vector.load %arg11[%c0_7, %c0_8] : memref<2x32xf32, #tpu.memory_space<vmem>>, vector<2x32xf32>
    tpu.vector_store %arg11[%c0_7, %c0_8], %4 {strides = array<i32>} : memref<2x32xf32, #tpu.memory_space<vmem>>, vector<2x32xf32>,
    %c1 = arith.constant 1 : index
    %c0_9 = arith.constant 0 : index
    %c0_10 = arith.constant 0 : index
    %6 = vector.load %arg5[%c1, %c0_9, %c0_10] : memref<2x2x32xf32, #tpu.memory_space<vmem>>, vector<1x2x32xf32>
    %7 = vector.shape_cast %6 : vector<1x2x32xf32> to vector<2x32xf32>
    %c0_11 = arith.constant 0 : index
    %c0_12 = arith.constant 0 : index
    %8 = vector.load %arg12[%c0_11, %c0_12] : memref<2x32xf32, #tpu.memory_space<vmem>>, vector<2x32xf32>
    tpu.vector_store %arg12[%c0_11, %c0_12], %7 {strides = array<i32>} : memref<2x32xf32, #tpu.memory_space<vmem>>, vector<2x32xf32>,
    %c1_13 = arith.constant 1 : index
    %c0_14 = arith.constant 0 : index
    %c0_15 = arith.constant 0 : index
    %9 = vector.load %arg6[%c1_13, %c0_14, %c0_15] : memref<2x2x32xf32, #tpu.memory_space<vmem>>, vector<1x2x32xf32>
    %10 = vector.shape_cast %9 : vector<1x2x32xf32> to vector<2x32xf32>
    %c0_16 = arith.constant 0 : index
    %c0_17 = arith.constant 0 : index
    %11 = vector.load %arg13[%c0_16, %c0_17] : memref<2x32xf32, #tpu.memory_space<vmem>>, vector<2x32xf32>
    tpu.vector_store %arg13[%c0_16, %c0_17], %10 {strides = array<i32>} : memref<2x32xf32, #tpu.memory_space<vmem>>, vector<2x32xf32>,
    %c0_i32 = arith.constant 0 : i32
    %12 = arith.index_cast %c0_i32 : i32 to index
    %c0_18 = arith.constant 0 : index
    %c0_19 = arith.constant 0 : index
    %13 = vector.load %arg1[%12, %c0_18, %c0_19] : memref<8x2x128xf32, #tpu.memory_space<vmem>>, vector<1x2x128xf32>
    %14 = vector.shape_cast %13 : vector<1x2x128xf32> to vector<2x128xf32>
    %c0_20 = arith.constant 0 : index
    %c0_21 = arith.constant 0 : index
    %15 = vector.load %arg10[%c0_20, %c0_21] : memref<2x32xf32, #tpu.memory_space<vmem>>, vector<2x32xf32>
    %c0_22 = arith.constant 0 : index
    %c0_23 = arith.constant 0 : index
    %16 = vector.load %arg3[%c0_22, %c0_23] : memref<32x128xf32, #tpu.memory_space<vmem>>, vector<32x128xf32>
    %cst = arith.constant dense<0.000000e+00> : vector<2x128xf32>
    %17 = tpu.matmul %15, %16, %cst {dimension_numbers = #tpu.dot_dimension_numbers<[1], [0], [0], [1], [0, 0, 1, 1], [], []>} : vector<2x32xf32>, vector<32x128xf32>, vector<2x128xf32> -> vector<2x128xf32>
    %18 = arith.addf %14, %17 : vector<2x128xf32>
    %c0_24 = arith.constant 0 : index
    %c0_25 = arith.constant 0 : index
    %19 = vector.load %arg11[%c0_24, %c0_25] : memref<2x32xf32, #tpu.memory_space<vmem>>, vector<2x32xf32>
    %20 = vector.extract_strided_slice %18 {offsets = [0, 0], sizes = [2, 32], strides = [1, 1]} : vector<2x128xf32> to vector<2x32xf32>
    %21 = arith.negf %20 : vector<2x32xf32>
    %22 = math.exp %21 : vector<2x32xf32>
    %cst_26 = arith.constant 1.000000e+00 : f32
    %23 = vector.broadcast %cst_26 : f32 to vector<2x32xf32>
    %24 = arith.addf %23, %22 : vector<2x32xf32>
    %25 = arith.divf %23, %24 : vector<2x32xf32>
    %26 = vector.extract_strided_slice %18 {offsets = [0, 32], sizes = [2, 32], strides = [1, 1]} : vector<2x128xf32> to vector<2x32xf32>
    %27 = arith.negf %26 : vector<2x32xf32>
    %28 = math.exp %27 : vector<2x32xf32>
    %cst_27 = arith.constant 1.000000e+00 : f32
    %29 = vector.broadcast %cst_27 : f32 to vector<2x32xf32>
    %30 = arith.addf %29, %28 : vector<2x32xf32>
    %31 = arith.divf %29, %30 : vector<2x32xf32>
    %32 = vector.extract_strided_slice %18 {offsets = [0, 64], sizes = [2, 32], strides = [1, 1]} : vector<2x128xf32> to vector<2x32xf32>
    %33 = math.tanh %32 : vector<2x32xf32>
    %34 = vector.extract_strided_slice %18 {offsets = [0, 96], sizes = [2, 32], strides = [1, 1]} : vector<2x128xf32> to vector<2x32xf32>
    %35 = arith.negf %34 : vector<2x32xf32>
    %36 = math.exp %35 : vector<2x32xf32>
    %cst_28 = arith.constant 1.000000e+00 : f32
    %37 = vector.broadcast %cst_28 : f32 to vector<2x32xf32>
    %38 = arith.addf %37, %36 : vector<2x32xf32>
    %39 = arith.divf %37, %38 : vector<2x32xf32>
    %40 = arith.mulf %31, %19 : vector<2x32xf32>
    %41 = arith.mulf %25, %33 : vector<2x32xf32>
    %42 = arith.addf %40, %41 : vector<2x32xf32>
    %43 = math.tanh %42 : vector<2x32xf32>
    %44 = arith.mulf %39, %43 : vector<2x32xf32>
    %c0_29 = arith.constant 0 : index
    %c0_30 = arith.constant 0 : index
    %45 = vector.load %arg10[%c0_29, %c0_30] : memref<2x32xf32, #tpu.memory_space<vmem>>, vector<2x32xf32>
    tpu.vector_store %arg10[%c0_29, %c0_30], %44 {strides = array<i32>} : memref<2x32xf32, #tpu.memory_space<vmem>>, vector<2x32xf32>,
    %c0_31 = arith.constant 0 : index
    %c0_32 = arith.constant 0 : index
    %46 = vector.load %arg11[%c0_31, %c0_32] : memref<2x32xf32, #tpu.memory_space<vmem>>, vector<2x32xf32>
    tpu.vector_store %arg11[%c0_31, %c0_32], %42 {strides = array<i32>} : memref<2x32xf32, #tpu.memory_space<vmem>>, vector<2x32xf32>,
    %47 = arith.index_cast %c0_i32 : i32 to index
    %c0_33 = arith.constant 0 : index
    %c0_34 = arith.constant 0 : index
    %48 = vector.load %arg7[%47, %c0_33, %c0_34] : memref<8x2x64xf32, #tpu.memory_space<vmem>>, vector<1x2x32xf32>
    %49 = vector.shape_cast %48 : vector<1x2x32xf32> to vector<2x32xf32>
    %50 = vector.shape_cast %44 : vector<2x32xf32> to vector<1x2x32xf32>
    tpu.vector_store %arg7[%47, %c0_33, %c0_34], %50 {strides = array<i32>} : memref<8x2x64xf32, #tpu.memory_space<vmem>>, vector<1x2x32xf32>,
    %c7_i32 = arith.constant 7 : i32
    %51 = arith.subi %c7_i32, %c0_i32 : i32
    %52 = arith.index_cast %51 : i32 to index
    %c0_35 = arith.constant 0 : index
    %c0_36 = arith.constant 0 : index
    %53 = vector.load %arg2[%52, %c0_35, %c0_36] : memref<8x2x128xf32, #tpu.memory_space<vmem>>, vector<1x2x128xf32>
    %54 = vector.shape_cast %53 : vector<1x2x128xf32> to vector<2x128xf32>
    %c0_37 = arith.constant 0 : index
    %c0_38 = arith.constant 0 : index
    %55 = vector.load %arg12[%c0_37, %c0_38] : memref<2x32xf32, #tpu.memory_space<vmem>>, vector<2x32xf32>
    %c0_39 = arith.constant 0 : index
    %c0_40 = arith.constant 0 : index
    %56 = vector.load %arg4[%c0_39, %c0_40] : memref<32x128xf32, #tpu.memory_space<vmem>>, vector<32x128xf32>
    %cst_41 = arith.constant dense<0.000000e+00> : vector<2x128xf32>
    %57 = tpu.matmul %55, %56, %cst_41 {dimension_numbers = #tpu.dot_dimension_numbers<[1], [0], [0], [1], [0, 0, 1, 1], [], []>} : vector<2x32xf32>, vector<32x128xf32>, vector<2x128xf32> -> vector<2x128xf32>
    %58 = arith.addf %54, %57 : vector<2x128xf32>
    %c0_42 = arith.constant 0 : index
    %c0_43 = arith.constant 0 : index
    %59 = vector.load %arg13[%c0_42, %c0_43] : memref<2x32xf32, #tpu.memory_space<vmem>>, vector<2x32xf32>
    %60 = vector.extract_strided_slice %58 {offsets = [0, 0], sizes = [2, 32], strides = [1, 1]} : vector<2x128xf32> to vector<2x32xf32>
    %61 = arith.negf %60 : vector<2x32xf32>
    %62 = math.exp %61 : vector<2x32xf32>
    %cst_44 = arith.constant 1.000000e+00 : f32
    %63 = vector.broadcast %cst_44 : f32 to vector<2x32xf32>
    %64 = arith.addf %63, %62 : vector<2x32xf32>
    %65 = arith.divf %63, %64 : vector<2x32xf32>
    %66 = vector.extract_strided_slice %58 {offsets = [0, 32], sizes = [2, 32], strides = [1, 1]} : vector<2x128xf32> to vector<2x32xf32>
    %67 = arith.negf %66 : vector<2x32xf32>
    %68 = math.exp %67 : vector<2x32xf32>
    %cst_45 = arith.constant 1.000000e+00 : f32
    %69 = vector.broadcast %cst_45 : f32 to vector<2x32xf32>
    %70 = arith.addf %69, %68 : vector<2x32xf32>
    %71 = arith.divf %69, %70 : vector<2x32xf32>
    %72 = vector.extract_strided_slice %58 {offsets = [0, 64], sizes = [2, 32], strides = [1, 1]} : vector<2x128xf32> to vector<2x32xf32>
    %73 = math.tanh %72 : vector<2x32xf32>
    %74 = vector.extract_strided_slice %58 {offsets = [0, 96], sizes = [2, 32], strides = [1, 1]} : vector<2x128xf32> to vector<2x32xf32>
    %75 = arith.negf %74 : vector<2x32xf32>
    %76 = math.exp %75 : vector<2x32xf32>
    %cst_46 = arith.constant 1.000000e+00 : f32
    %77 = vector.broadcast %cst_46 : f32 to vector<2x32xf32>
    %78 = arith.addf %77, %76 : vector<2x32xf32>
    %79 = arith.divf %77, %78 : vector<2x32xf32>
    %80 = arith.mulf %71, %59 : vector<2x32xf32>
    %81 = arith.mulf %65, %73 : vector<2x32xf32>
    %82 = arith.addf %80, %81 : vector<2x32xf32>
    %83 = math.tanh %82 : vector<2x32xf32>
    %84 = arith.mulf %79, %83 : vector<2x32xf32>
    %c0_47 = arith.constant 0 : index
    %c0_48 = arith.constant 0 : index
    %85 = vector.load %arg12[%c0_47, %c0_48] : memref<2x32xf32, #tpu.memory_space<vmem>>, vector<2x32xf32>
    tpu.vector_store %arg12[%c0_47, %c0_48], %84 {strides = array<i32>} : memref<2x32xf32, #tpu.memory_space<vmem>>, vector<2x32xf32>,
    %c0_49 = arith.constant 0 : index
    %c0_50 = arith.constant 0 : index
    %86 = vector.load %arg13[%c0_49, %c0_50] : memref<2x32xf32, #tpu.memory_space<vmem>>, vector<2x32xf32>
    tpu.vector_store %arg13[%c0_49, %c0_50], %82 {strides = array<i32>} : memref<2x32xf32, #tpu.memory_space<vmem>>, vector<2x32xf32>,
    %87 = arith.index_cast %51 : i32 to index
    %c0_51 = arith.constant 0 : index
    %c32 = arith.constant 32 : index
    %88 = vector.load %arg7[%87, %c0_51, %c32] : memref<8x2x64xf32, #tpu.memory_space<vmem>>, vector<1x2x32xf32>
    %89 = vector.shape_cast %88 : vector<1x2x32xf32> to vector<2x32xf32>
    %90 = vector.shape_cast %84 : vector<2x32xf32> to vector<1x2x32xf32>
    tpu.vector_store %arg7[%87, %c0_51, %c32], %90 {strides = array<i32>} : memref<8x2x64xf32, #tpu.memory_space<vmem>>, vector<1x2x32xf32>,
    %c1_i32 = arith.constant 1 : i32
    %91 = arith.index_cast %c1_i32 : i32 to index
    %c0_52 = arith.constant 0 : index
    %c0_53 = arith.constant 0 : index
    %92 = vector.load %arg1[%91, %c0_52, %c0_53] : memref<8x2x128xf32, #tpu.memory_space<vmem>>, vector<1x2x128xf32>
    %93 = vector.shape_cast %92 : vector<1x2x128xf32> to vector<2x128xf32>
    %c0_54 = arith.constant 0 : index
    %c0_55 = arith.constant 0 : index
    %94 = vector.load %arg10[%c0_54, %c0_55] : memref<2x32xf32, #tpu.memory_space<vmem>>, vector<2x32xf32>
    %c0_56 = arith.constant 0 : index
    %c0_57 = arith.constant 0 : index
    %95 = vector.load %arg3[%c0_56, %c0_57] : memref<32x128xf32, #tpu.memory_space<vmem>>, vector<32x128xf32>
    %cst_58 = arith.constant dense<0.000000e+00> : vector<2x128xf32>
    %96 = tpu.matmul %94, %95, %cst_58 {dimension_numbers = #tpu.dot_dimension_numbers<[1], [0], [0], [1], [0, 0, 1, 1], [], []>} : vector<2x32xf32>, vector<32x128xf32>, vector<2x128xf32> -> vector<2x128xf32>
    %97 = arith.addf %93, %96 : vector<2x128xf32>
    %c0_59 = arith.constant 0 : index
    %c0_60 = arith.constant 0 : index
    %98 = vector.load %arg11[%c0_59, %c0_60] : memref<2x32xf32, #tpu.memory_space<vmem>>, vector<2x32xf32>
    %99 = vector.extract_strided_slice %97 {offsets = [0, 0], sizes = [2, 32], strides = [1, 1]} : vector<2x128xf32> to vector<2x32xf32>
    %100 = arith.negf %99 : vector<2x32xf32>
    %101 = math.exp %100 : vector<2x32xf32>
    %cst_61 = arith.constant 1.000000e+00 : f32
    %102 = vector.broadcast %cst_61 : f32 to vector<2x32xf32>
    %103 = arith.addf %102, %101 : vector<2x32xf32>
    %104 = arith.divf %102, %103 : vector<2x32xf32>
    %105 = vector.extract_strided_slice %97 {offsets = [0, 32], sizes = [2, 32], strides = [1, 1]} : vector<2x128xf32> to vector<2x32xf32>
    %106 = arith.negf %105 : vector<2x32xf32>
    %107 = math.exp %106 : vector<2x32xf32>
    %cst_62 = arith.constant 1.000000e+00 : f32
    %108 = vector.broadcast %cst_62 : f32 to vector<2x32xf32>
    %109 = arith.addf %108, %107 : vector<2x32xf32>
    %110 = arith.divf %108, %109 : vector<2x32xf32>
    %111 = vector.extract_strided_slice %97 {offsets = [0, 64], sizes = [2, 32], strides = [1, 1]} : vector<2x128xf32> to vector<2x32xf32>
    %112 = math.tanh %111 : vector<2x32xf32>
    %113 = vector.extract_strided_slice %97 {offsets = [0, 96], sizes = [2, 32], strides = [1, 1]} : vector<2x128xf32> to vector<2x32xf32>
    %114 = arith.negf %113 : vector<2x32xf32>
    %115 = math.exp %114 : vector<2x32xf32>
    %cst_63 = arith.constant 1.000000e+00 : f32
    %116 = vector.broadcast %cst_63 : f32 to vector<2x32xf32>
    %117 = arith.addf %116, %115 : vector<2x32xf32>
    %118 = arith.divf %116, %117 : vector<2x32xf32>
    %119 = arith.mulf %110, %98 : vector<2x32xf32>
    %120 = arith.mulf %104, %112 : vector<2x32xf32>
    %121 = arith.addf %119, %120 : vector<2x32xf32>
    %122 = math.tanh %121 : vector<2x32xf32>
    %123 = arith.mulf %118, %122 : vector<2x32xf32>
    %c0_64 = arith.constant 0 : index
    %c0_65 = arith.constant 0 : index
    %124 = vector.load %arg10[%c0_64, %c0_65] : memref<2x32xf32, #tpu.memory_space<vmem>>, vector<2x32xf32>
    tpu.vector_store %arg10[%c0_64, %c0_65], %123 {strides = array<i32>} : memref<2x32xf32, #tpu.memory_space<vmem>>, vector<2x32xf32>,
    %c0_66 = arith.constant 0 : index
    %c0_67 = arith.constant 0 : index
    %125 = vector.load %arg11[%c0_66, %c0_67] : memref<2x32xf32, #tpu.memory_space<vmem>>, vector<2x32xf32>
    tpu.vector_store %arg11[%c0_66, %c0_67], %121 {strides = array<i32>} : memref<2x32xf32, #tpu.memory_space<vmem>>, vector<2x32xf32>,
    %126 = arith.index_cast %c1_i32 : i32 to index
    %c0_68 = arith.constant 0 : index
    %c0_69 = arith.constant 0 : index
    %127 = vector.load %arg7[%126, %c0_68, %c0_69] : memref<8x2x64xf32, #tpu.memory_space<vmem>>, vector<1x2x32xf32>
    %128 = vector.shape_cast %127 : vector<1x2x32xf32> to vector<2x32xf32>
    %129 = vector.shape_cast %123 : vector<2x32xf32> to vector<1x2x32xf32>
    tpu.vector_store %arg7[%126, %c0_68, %c0_69], %129 {strides = array<i32>} : memref<8x2x64xf32, #tpu.memory_space<vmem>>, vector<1x2x32xf32>,
    %c7_i32_70 = arith.constant 7 : i32
    %130 = arith.subi %c7_i32_70, %c1_i32 : i32
    %131 = arith.index_cast %130 : i32 to index
    %c0_71 = arith.constant 0 : index
    %c0_72 = arith.constant 0 : index
    %132 = vector.load %arg2[%131, %c0_71, %c0_72] : memref<8x2x128xf32, #tpu.memory_space<vmem>>, vector<1x2x128xf32>
    %133 = vector.shape_cast %132 : vector<1x2x128xf32> to vector<2x128xf32>
    %c0_73 = arith.constant 0 : index
    %c0_74 = arith.constant 0 : index
    %134 = vector.load %arg12[%c0_73, %c0_74] : memref<2x32xf32, #tpu.memory_space<vmem>>, vector<2x32xf32>
    %c0_75 = arith.constant 0 : index
    %c0_76 = arith.constant 0 : index
    %135 = vector.load %arg4[%c0_75, %c0_76] : memref<32x128xf32, #tpu.memory_space<vmem>>, vector<32x128xf32>
    %cst_77 = arith.constant dense<0.000000e+00> : vector<2x128xf32>
    %136 = tpu.matmul %134, %135, %cst_77 {dimension_numbers = #tpu.dot_dimension_numbers<[1], [0], [0], [1], [0, 0, 1, 1], [], []>} : vector<2x32xf32>, vector<32x128xf32>, vector<2x128xf32> -> vector<2x128xf32>
    %137 = arith.addf %133, %136 : vector<2x128xf32>
    %c0_78 = arith.constant 0 : index
    %c0_79 = arith.constant 0 : index
    %138 = vector.load %arg13[%c0_78, %c0_79] : memref<2x32xf32, #tpu.memory_space<vmem>>, vector<2x32xf32>
    %139 = vector.extract_strided_slice %137 {offsets = [0, 0], sizes = [2, 32], strides = [1, 1]} : vector<2x128xf32> to vector<2x32xf32>
    %140 = arith.negf %139 : vector<2x32xf32>
    %141 = math.exp %140 : vector<2x32xf32>
    %cst_80 = arith.constant 1.000000e+00 : f32
    %142 = vector.broadcast %cst_80 : f32 to vector<2x32xf32>
    %143 = arith.addf %142, %141 : vector<2x32xf32>
    %144 = arith.divf %142, %143 : vector<2x32xf32>
    %145 = vector.extract_strided_slice %137 {offsets = [0, 32], sizes = [2, 32], strides = [1, 1]} : vector<2x128xf32> to vector<2x32xf32>
    %146 = arith.negf %145 : vector<2x32xf32>
    %147 = math.exp %146 : vector<2x32xf32>
    %cst_81 = arith.constant 1.000000e+00 : f32
    %148 = vector.broadcast %cst_81 : f32 to vector<2x32xf32>
    %149 = arith.addf %148, %147 : vector<2x32xf32>
    %150 = arith.divf %148, %149 : vector<2x32xf32>
    %151 = vector.extract_strided_slice %137 {offsets = [0, 64], sizes = [2, 32], strides = [1, 1]} : vector<2x128xf32> to vector<2x32xf32>
    %152 = math.tanh %151 : vector<2x32xf32>
    %153 = vector.extract_strided_slice %137 {offsets = [0, 96], sizes = [2, 32], strides = [1, 1]} : vector<2x128xf32> to vector<2x32xf32>
    %154 = arith.negf %153 : vector<2x32xf32>
    %155 = math.exp %154 : vector<2x32xf32>
    %cst_82 = arith.constant 1.000000e+00 : f32
    %156 = vector.broadcast %cst_82 : f32 to vector<2x32xf32>
    %157 = arith.addf %156, %155 : vector<2x32xf32>
    %158 = arith.divf %156, %157 : vector<2x32xf32>
    %159 = arith.mulf %150, %138 : vector<2x32xf32>
    %160 = arith.mulf %144, %152 : vector<2x32xf32>
    %161 = arith.addf %159, %160 : vector<2x32xf32>
    %162 = math.tanh %161 : vector<2x32xf32>
    %163 = arith.mulf %158, %162 : vector<2x32xf32>
    %c0_83 = arith.constant 0 : index
    %c0_84 = arith.constant 0 : index
    %164 = vector.load %arg12[%c0_83, %c0_84] : memref<2x32xf32, #tpu.memory_space<vmem>>, vector<2x32xf32>
    tpu.vector_store %arg12[%c0_83, %c0_84], %163 {strides = array<i32>} : memref<2x32xf32, #tpu.memory_space<vmem>>, vector<2x32xf32>,
    %c0_85 = arith.constant 0 : index
    %c0_86 = arith.constant 0 : index
    %165 = vector.load %arg13[%c0_85, %c0_86] : memref<2x32xf32, #tpu.memory_space<vmem>>, vector<2x32xf32>
    tpu.vector_store %arg13[%c0_85, %c0_86], %161 {strides = array<i32>} : memref<2x32xf32, #tpu.memory_space<vmem>>, vector<2x32xf32>,
    %166 = arith.index_cast %130 : i32 to index
    %c0_87 = arith.constant 0 : index
    %c32_88 = arith.constant 32 : index
    %167 = vector.load %arg7[%166, %c0_87, %c32_88] : memref<8x2x64xf32, #tpu.memory_space<vmem>>, vector<1x2x32xf32>
    %168 = vector.shape_cast %167 : vector<1x2x32xf32> to vector<2x32xf32>
    %169 = vector.shape_cast %163 : vector<2x32xf32> to vector<1x2x32xf32>
    tpu.vector_store %arg7[%166, %c0_87, %c32_88], %169 {strides = array<i32>} : memref<8x2x64xf32, #tpu.memory_space<vmem>>, vector<1x2x32xf32>,
    %c2_i32 = arith.constant 2 : i32
    %170 = arith.index_cast %c2_i32 : i32 to index
    %c0_89 = arith.constant 0 : index
    %c0_90 = arith.constant 0 : index
    %171 = vector.load %arg1[%170, %c0_89, %c0_90] : memref<8x2x128xf32, #tpu.memory_space<vmem>>, vector<1x2x128xf32>
    %172 = vector.shape_cast %171 : vector<1x2x128xf32> to vector<2x128xf32>
    %c0_91 = arith.constant 0 : index
    %c0_92 = arith.constant 0 : index
    %173 = vector.load %arg10[%c0_91, %c0_92] : memref<2x32xf32, #tpu.memory_space<vmem>>, vector<2x32xf32>
    %c0_93 = arith.constant 0 : index
    %c0_94 = arith.constant 0 : index
    %174 = vector.load %arg3[%c0_93, %c0_94] : memref<32x128xf32, #tpu.memory_space<vmem>>, vector<32x128xf32>
    %cst_95 = arith.constant dense<0.000000e+00> : vector<2x128xf32>
    %175 = tpu.matmul %173, %174, %cst_95 {dimension_numbers = #tpu.dot_dimension_numbers<[1], [0], [0], [1], [0, 0, 1, 1], [], []>} : vector<2x32xf32>, vector<32x128xf32>, vector<2x128xf32> -> vector<2x128xf32>
    %176 = arith.addf %172, %175 : vector<2x128xf32>
    %c0_96 = arith.constant 0 : index
    %c0_97 = arith.constant 0 : index
    %177 = vector.load %arg11[%c0_96, %c0_97] : memref<2x32xf32, #tpu.memory_space<vmem>>, vector<2x32xf32>
    %178 = vector.extract_strided_slice %176 {offsets = [0, 0], sizes = [2, 32], strides = [1, 1]} : vector<2x128xf32> to vector<2x32xf32>
    %179 = arith.negf %178 : vector<2x32xf32>
    %180 = math.exp %179 : vector<2x32xf32>
    %cst_98 = arith.constant 1.000000e+00 : f32
    %181 = vector.broadcast %cst_98 : f32 to vector<2x32xf32>
    %182 = arith.addf %181, %180 : vector<2x32xf32>
    %183 = arith.divf %181, %182 : vector<2x32xf32>
    %184 = vector.extract_strided_slice %176 {offsets = [0, 32], sizes = [2, 32], strides = [1, 1]} : vector<2x128xf32> to vector<2x32xf32>
    %185 = arith.negf %184 : vector<2x32xf32>
    %186 = math.exp %185 : vector<2x32xf32>
    %cst_99 = arith.constant 1.000000e+00 : f32
    %187 = vector.broadcast %cst_99 : f32 to vector<2x32xf32>
    %188 = arith.addf %187, %186 : vector<2x32xf32>
    %189 = arith.divf %187, %188 : vector<2x32xf32>
    %190 = vector.extract_strided_slice %176 {offsets = [0, 64], sizes = [2, 32], strides = [1, 1]} : vector<2x128xf32> to vector<2x32xf32>
    %191 = math.tanh %190 : vector<2x32xf32>
    %192 = vector.extract_strided_slice %176 {offsets = [0, 96], sizes = [2, 32], strides = [1, 1]} : vector<2x128xf32> to vector<2x32xf32>
    %193 = arith.negf %192 : vector<2x32xf32>
    %194 = math.exp %193 : vector<2x32xf32>
    %cst_100 = arith.constant 1.000000e+00 : f32
    %195 = vector.broadcast %cst_100 : f32 to vector<2x32xf32>
    %196 = arith.addf %195, %194 : vector<2x32xf32>
    %197 = arith.divf %195, %196 : vector<2x32xf32>
    %198 = arith.mulf %189, %177 : vector<2x32xf32>
    %199 = arith.mulf %183, %191 : vector<2x32xf32>
    %200 = arith.addf %198, %199 : vector<2x32xf32>
    %201 = math.tanh %200 : vector<2x32xf32>
    %202 = arith.mulf %197, %201 : vector<2x32xf32>
    %c0_101 = arith.constant 0 : index
    %c0_102 = arith.constant 0 : index
    %203 = vector.load %arg10[%c0_101, %c0_102] : memref<2x32xf32, #tpu.memory_space<vmem>>, vector<2x32xf32>
    tpu.vector_store %arg10[%c0_101, %c0_102], %202 {strides = array<i32>} : memref<2x32xf32, #tpu.memory_space<vmem>>, vector<2x32xf32>,
    %c0_103 = arith.constant 0 : index
    %c0_104 = arith.constant 0 : index
    %204 = vector.load %arg11[%c0_103, %c0_104] : memref<2x32xf32, #tpu.memory_space<vmem>>, vector<2x32xf32>
    tpu.vector_store %arg11[%c0_103, %c0_104], %200 {strides = array<i32>} : memref<2x32xf32, #tpu.memory_space<vmem>>, vector<2x32xf32>,
    %205 = arith.index_cast %c2_i32 : i32 to index
    %c0_105 = arith.constant 0 : index
    %c0_106 = arith.constant 0 : index
    %206 = vector.load %arg7[%205, %c0_105, %c0_106] : memref<8x2x64xf32, #tpu.memory_space<vmem>>, vector<1x2x32xf32>
    %207 = vector.shape_cast %206 : vector<1x2x32xf32> to vector<2x32xf32>
    %208 = vector.shape_cast %202 : vector<2x32xf32> to vector<1x2x32xf32>
    tpu.vector_store %arg7[%205, %c0_105, %c0_106], %208 {strides = array<i32>} : memref<8x2x64xf32, #tpu.memory_space<vmem>>, vector<1x2x32xf32>,
    %c7_i32_107 = arith.constant 7 : i32
    %209 = arith.subi %c7_i32_107, %c2_i32 : i32
    %210 = arith.index_cast %209 : i32 to index
    %c0_108 = arith.constant 0 : index
    %c0_109 = arith.constant 0 : index
    %211 = vector.load %arg2[%210, %c0_108, %c0_109] : memref<8x2x128xf32, #tpu.memory_space<vmem>>, vector<1x2x128xf32>
    %212 = vector.shape_cast %211 : vector<1x2x128xf32> to vector<2x128xf32>
    %c0_110 = arith.constant 0 : index
    %c0_111 = arith.constant 0 : index
    %213 = vector.load %arg12[%c0_110, %c0_111] : memref<2x32xf32, #tpu.memory_space<vmem>>, vector<2x32xf32>
    %c0_112 = arith.constant 0 : index
    %c0_113 = arith.constant 0 : index
    %214 = vector.load %arg4[%c0_112, %c0_113] : memref<32x128xf32, #tpu.memory_space<vmem>>, vector<32x128xf32>
    %cst_114 = arith.constant dense<0.000000e+00> : vector<2x128xf32>
    %215 = tpu.matmul %213, %214, %cst_114 {dimension_numbers = #tpu.dot_dimension_numbers<[1], [0], [0], [1], [0, 0, 1, 1], [], []>} : vector<2x32xf32>, vector<32x128xf32>, vector<2x128xf32> -> vector<2x128xf32>
    %216 = arith.addf %212, %215 : vector<2x128xf32>
    %c0_115 = arith.constant 0 : index
    %c0_116 = arith.constant 0 : index
    %217 = vector.load %arg13[%c0_115, %c0_116] : memref<2x32xf32, #tpu.memory_space<vmem>>, vector<2x32xf32>
    %218 = vector.extract_strided_slice %216 {offsets = [0, 0], sizes = [2, 32], strides = [1, 1]} : vector<2x128xf32> to vector<2x32xf32>
    %219 = arith.negf %218 : vector<2x32xf32>
    %220 = math.exp %219 : vector<2x32xf32>
    %cst_117 = arith.constant 1.000000e+00 : f32
    %221 = vector.broadcast %cst_117 : f32 to vector<2x32xf32>
    %222 = arith.addf %221, %220 : vector<2x32xf32>
    %223 = arith.divf %221, %222 : vector<2x32xf32>
    %224 = vector.extract_strided_slice %216 {offsets = [0, 32], sizes = [2, 32], strides = [1, 1]} : vector<2x128xf32> to vector<2x32xf32>
    %225 = arith.negf %224 : vector<2x32xf32>
    %226 = math.exp %225 : vector<2x32xf32>
    %cst_118 = arith.constant 1.000000e+00 : f32
    %227 = vector.broadcast %cst_118 : f32 to vector<2x32xf32>
    %228 = arith.addf %227, %226 : vector<2x32xf32>
    %229 = arith.divf %227, %228 : vector<2x32xf32>
    %230 = vector.extract_strided_slice %216 {offsets = [0, 64], sizes = [2, 32], strides = [1, 1]} : vector<2x128xf32> to vector<2x32xf32>
    %231 = math.tanh %230 : vector<2x32xf32>
    %232 = vector.extract_strided_slice %216 {offsets = [0, 96], sizes = [2, 32], strides = [1, 1]} : vector<2x128xf32> to vector<2x32xf32>
    %233 = arith.negf %232 : vector<2x32xf32>
    %234 = math.exp %233 : vector<2x32xf32>
    %cst_119 = arith.constant 1.000000e+00 : f32
    %235 = vector.broadcast %cst_119 : f32 to vector<2x32xf32>
    %236 = arith.addf %235, %234 : vector<2x32xf32>
    %237 = arith.divf %235, %236 : vector<2x32xf32>
    %238 = arith.mulf %229, %217 : vector<2x32xf32>
    %239 = arith.mulf %223, %231 : vector<2x32xf32>
    %240 = arith.addf %238, %239 : vector<2x32xf32>
    %241 = math.tanh %240 : vector<2x32xf32>
    %242 = arith.mulf %237, %241 : vector<2x32xf32>
    %c0_120 = arith.constant 0 : index
    %c0_121 = arith.constant 0 : index
    %243 = vector.load %arg12[%c0_120, %c0_121] : memref<2x32xf32, #tpu.memory_space<vmem>>, vector<2x32xf32>
    tpu.vector_store %arg12[%c0_120, %c0_121], %242 {strides = array<i32>} : memref<2x32xf32, #tpu.memory_space<vmem>>, vector<2x32xf32>,
    %c0_122 = arith.constant 0 : index
    %c0_123 = arith.constant 0 : index
    %244 = vector.load %arg13[%c0_122, %c0_123] : memref<2x32xf32, #tpu.memory_space<vmem>>, vector<2x32xf32>
    tpu.vector_store %arg13[%c0_122, %c0_123], %240 {strides = array<i32>} : memref<2x32xf32, #tpu.memory_space<vmem>>, vector<2x32xf32>,
    %245 = arith.index_cast %209 : i32 to index
    %c0_124 = arith.constant 0 : index
    %c32_125 = arith.constant 32 : index
    %246 = vector.load %arg7[%245, %c0_124, %c32_125] : memref<8x2x64xf32, #tpu.memory_space<vmem>>, vector<1x2x32xf32>
    %247 = vector.shape_cast %246 : vector<1x2x32xf32> to vector<2x32xf32>
    %248 = vector.shape_cast %242 : vector<2x32xf32> to vector<1x2x32xf32>
    tpu.vector_store %arg7[%245, %c0_124, %c32_125], %248 {strides = array<i32>} : memref<8x2x64xf32, #tpu.memory_space<vmem>>, vector<1x2x32xf32>,
    %c3_i32 = arith.constant 3 : i32
    %249 = arith.index_cast %c3_i32 : i32 to index
    %c0_126 = arith.constant 0 : index
    %c0_127 = arith.constant 0 : index
    %250 = vector.load %arg1[%249, %c0_126, %c0_127] : memref<8x2x128xf32, #tpu.memory_space<vmem>>, vector<1x2x128xf32>
    %251 = vector.shape_cast %250 : vector<1x2x128xf32> to vector<2x128xf32>
    %c0_128 = arith.constant 0 : index
    %c0_129 = arith.constant 0 : index
    %252 = vector.load %arg10[%c0_128, %c0_129] : memref<2x32xf32, #tpu.memory_space<vmem>>, vector<2x32xf32>
    %c0_130 = arith.constant 0 : index
    %c0_131 = arith.constant 0 : index
    %253 = vector.load %arg3[%c0_130, %c0_131] : memref<32x128xf32, #tpu.memory_space<vmem>>, vector<32x128xf32>
    %cst_132 = arith.constant dense<0.000000e+00> : vector<2x128xf32>
    %254 = tpu.matmul %252, %253, %cst_132 {dimension_numbers = #tpu.dot_dimension_numbers<[1], [0], [0], [1], [0, 0, 1, 1], [], []>} : vector<2x32xf32>, vector<32x128xf32>, vector<2x128xf32> -> vector<2x128xf32>
    %255 = arith.addf %251, %254 : vector<2x128xf32>
    %c0_133 = arith.constant 0 : index
    %c0_134 = arith.constant 0 : index
    %256 = vector.load %arg11[%c0_133, %c0_134] : memref<2x32xf32, #tpu.memory_space<vmem>>, vector<2x32xf32>
    %257 = vector.extract_strided_slice %255 {offsets = [0, 0], sizes = [2, 32], strides = [1, 1]} : vector<2x128xf32> to vector<2x32xf32>
    %258 = arith.negf %257 : vector<2x32xf32>
    %259 = math.exp %258 : vector<2x32xf32>
    %cst_135 = arith.constant 1.000000e+00 : f32
    %260 = vector.broadcast %cst_135 : f32 to vector<2x32xf32>
    %261 = arith.addf %260, %259 : vector<2x32xf32>
    %262 = arith.divf %260, %261 : vector<2x32xf32>
    %263 = vector.extract_strided_slice %255 {offsets = [0, 32], sizes = [2, 32], strides = [1, 1]} : vector<2x128xf32> to vector<2x32xf32>
    %264 = arith.negf %263 : vector<2x32xf32>
    %265 = math.exp %264 : vector<2x32xf32>
    %cst_136 = arith.constant 1.000000e+00 : f32
    %266 = vector.broadcast %cst_136 : f32 to vector<2x32xf32>
    %267 = arith.addf %266, %265 : vector<2x32xf32>
    %268 = arith.divf %266, %267 : vector<2x32xf32>
    %269 = vector.extract_strided_slice %255 {offsets = [0, 64], sizes = [2, 32], strides = [1, 1]} : vector<2x128xf32> to vector<2x32xf32>
    %270 = math.tanh %269 : vector<2x32xf32>
    %271 = vector.extract_strided_slice %255 {offsets = [0, 96], sizes = [2, 32], strides = [1, 1]} : vector<2x128xf32> to vector<2x32xf32>
    %272 = arith.negf %271 : vector<2x32xf32>
    %273 = math.exp %272 : vector<2x32xf32>
    %cst_137 = arith.constant 1.000000e+00 : f32
    %274 = vector.broadcast %cst_137 : f32 to vector<2x32xf32>
    %275 = arith.addf %274, %273 : vector<2x32xf32>
    %276 = arith.divf %274, %275 : vector<2x32xf32>
    %277 = arith.mulf %268, %256 : vector<2x32xf32>
    %278 = arith.mulf %262, %270 : vector<2x32xf32>
    %279 = arith.addf %277, %278 : vector<2x32xf32>
    %280 = math.tanh %279 : vector<2x32xf32>
    %281 = arith.mulf %276, %280 : vector<2x32xf32>
    %c0_138 = arith.constant 0 : index
    %c0_139 = arith.constant 0 : index
    %282 = vector.load %arg10[%c0_138, %c0_139] : memref<2x32xf32, #tpu.memory_space<vmem>>, vector<2x32xf32>
    tpu.vector_store %arg10[%c0_138, %c0_139], %281 {strides = array<i32>} : memref<2x32xf32, #tpu.memory_space<vmem>>, vector<2x32xf32>,
    %c0_140 = arith.constant 0 : index
    %c0_141 = arith.constant 0 : index
    %283 = vector.load %arg11[%c0_140, %c0_141] : memref<2x32xf32, #tpu.memory_space<vmem>>, vector<2x32xf32>
    tpu.vector_store %arg11[%c0_140, %c0_141], %279 {strides = array<i32>} : memref<2x32xf32, #tpu.memory_space<vmem>>, vector<2x32xf32>,
    %284 = arith.index_cast %c3_i32 : i32 to index
    %c0_142 = arith.constant 0 : index
    %c0_143 = arith.constant 0 : index
    %285 = vector.load %arg7[%284, %c0_142, %c0_143] : memref<8x2x64xf32, #tpu.memory_space<vmem>>, vector<1x2x32xf32>
    %286 = vector.shape_cast %285 : vector<1x2x32xf32> to vector<2x32xf32>
    %287 = vector.shape_cast %281 : vector<2x32xf32> to vector<1x2x32xf32>
    tpu.vector_store %arg7[%284, %c0_142, %c0_143], %287 {strides = array<i32>} : memref<8x2x64xf32, #tpu.memory_space<vmem>>, vector<1x2x32xf32>,
    %c7_i32_144 = arith.constant 7 : i32
    %288 = arith.subi %c7_i32_144, %c3_i32 : i32
    %289 = arith.index_cast %288 : i32 to index
    %c0_145 = arith.constant 0 : index
    %c0_146 = arith.constant 0 : index
    %290 = vector.load %arg2[%289, %c0_145, %c0_146] : memref<8x2x128xf32, #tpu.memory_space<vmem>>, vector<1x2x128xf32>
    %291 = vector.shape_cast %290 : vector<1x2x128xf32> to vector<2x128xf32>
    %c0_147 = arith.constant 0 : index
    %c0_148 = arith.constant 0 : index
    %292 = vector.load %arg12[%c0_147, %c0_148] : memref<2x32xf32, #tpu.memory_space<vmem>>, vector<2x32xf32>
    %c0_149 = arith.constant 0 : index
    %c0_150 = arith.constant 0 : index
    %293 = vector.load %arg4[%c0_149, %c0_150] : memref<32x128xf32, #tpu.memory_space<vmem>>, vector<32x128xf32>
    %cst_151 = arith.constant dense<0.000000e+00> : vector<2x128xf32>
    %294 = tpu.matmul %292, %293, %cst_151 {dimension_numbers = #tpu.dot_dimension_numbers<[1], [0], [0], [1], [0, 0, 1, 1], [], []>} : vector<2x32xf32>, vector<32x128xf32>, vector<2x128xf32> -> vector<2x128xf32>
    %295 = arith.addf %291, %294 : vector<2x128xf32>
    %c0_152 = arith.constant 0 : index
    %c0_153 = arith.constant 0 : index
    %296 = vector.load %arg13[%c0_152, %c0_153] : memref<2x32xf32, #tpu.memory_space<vmem>>, vector<2x32xf32>
    %297 = vector.extract_strided_slice %295 {offsets = [0, 0], sizes = [2, 32], strides = [1, 1]} : vector<2x128xf32> to vector<2x32xf32>
    %298 = arith.negf %297 : vector<2x32xf32>
    %299 = math.exp %298 : vector<2x32xf32>
    %cst_154 = arith.constant 1.000000e+00 : f32
    %300 = vector.broadcast %cst_154 : f32 to vector<2x32xf32>
    %301 = arith.addf %300, %299 : vector<2x32xf32>
    %302 = arith.divf %300, %301 : vector<2x32xf32>
    %303 = vector.extract_strided_slice %295 {offsets = [0, 32], sizes = [2, 32], strides = [1, 1]} : vector<2x128xf32> to vector<2x32xf32>
    %304 = arith.negf %303 : vector<2x32xf32>
    %305 = math.exp %304 : vector<2x32xf32>
    %cst_155 = arith.constant 1.000000e+00 : f32
    %306 = vector.broadcast %cst_155 : f32 to vector<2x32xf32>
    %307 = arith.addf %306, %305 : vector<2x32xf32>
    %308 = arith.divf %306, %307 : vector<2x32xf32>
    %309 = vector.extract_strided_slice %295 {offsets = [0, 64], sizes = [2, 32], strides = [1, 1]} : vector<2x128xf32> to vector<2x32xf32>
    %310 = math.tanh %309 : vector<2x32xf32>
    %311 = vector.extract_strided_slice %295 {offsets = [0, 96], sizes = [2, 32], strides = [1, 1]} : vector<2x128xf32> to vector<2x32xf32>
    %312 = arith.negf %311 : vector<2x32xf32>
    %313 = math.exp %312 : vector<2x32xf32>
    %cst_156 = arith.constant 1.000000e+00 : f32
    %314 = vector.broadcast %cst_156 : f32 to vector<2x32xf32>
    %315 = arith.addf %314, %313 : vector<2x32xf32>
    %316 = arith.divf %314, %315 : vector<2x32xf32>
    %317 = arith.mulf %308, %296 : vector<2x32xf32>
    %318 = arith.mulf %302, %310 : vector<2x32xf32>
    %319 = arith.addf %317, %318 : vector<2x32xf32>
    %320 = math.tanh %319 : vector<2x32xf32>
    %321 = arith.mulf %316, %320 : vector<2x32xf32>
    %c0_157 = arith.constant 0 : index
    %c0_158 = arith.constant 0 : index
    %322 = vector.load %arg12[%c0_157, %c0_158] : memref<2x32xf32, #tpu.memory_space<vmem>>, vector<2x32xf32>
    tpu.vector_store %arg12[%c0_157, %c0_158], %321 {strides = array<i32>} : memref<2x32xf32, #tpu.memory_space<vmem>>, vector<2x32xf32>,
    %c0_159 = arith.constant 0 : index
    %c0_160 = arith.constant 0 : index
    %323 = vector.load %arg13[%c0_159, %c0_160] : memref<2x32xf32, #tpu.memory_space<vmem>>, vector<2x32xf32>
    tpu.vector_store %arg13[%c0_159, %c0_160], %319 {strides = array<i32>} : memref<2x32xf32, #tpu.memory_space<vmem>>, vector<2x32xf32>,
    %324 = arith.index_cast %288 : i32 to index
    %c0_161 = arith.constant 0 : index
    %c32_162 = arith.constant 32 : index
    %325 = vector.load %arg7[%324, %c0_161, %c32_162] : memref<8x2x64xf32, #tpu.memory_space<vmem>>, vector<1x2x32xf32>
    %326 = vector.shape_cast %325 : vector<1x2x32xf32> to vector<2x32xf32>
    %327 = vector.shape_cast %321 : vector<2x32xf32> to vector<1x2x32xf32>
    tpu.vector_store %arg7[%324, %c0_161, %c32_162], %327 {strides = array<i32>} : memref<8x2x64xf32, #tpu.memory_space<vmem>>, vector<1x2x32xf32>,
    %c4_i32 = arith.constant 4 : i32
    %328 = arith.index_cast %c4_i32 : i32 to index
    %c0_163 = arith.constant 0 : index
    %c0_164 = arith.constant 0 : index
    %329 = vector.load %arg1[%328, %c0_163, %c0_164] : memref<8x2x128xf32, #tpu.memory_space<vmem>>, vector<1x2x128xf32>
    %330 = vector.shape_cast %329 : vector<1x2x128xf32> to vector<2x128xf32>
    %c0_165 = arith.constant 0 : index
    %c0_166 = arith.constant 0 : index
    %331 = vector.load %arg10[%c0_165, %c0_166] : memref<2x32xf32, #tpu.memory_space<vmem>>, vector<2x32xf32>
    %c0_167 = arith.constant 0 : index
    %c0_168 = arith.constant 0 : index
    %332 = vector.load %arg3[%c0_167, %c0_168] : memref<32x128xf32, #tpu.memory_space<vmem>>, vector<32x128xf32>
    %cst_169 = arith.constant dense<0.000000e+00> : vector<2x128xf32>
    %333 = tpu.matmul %331, %332, %cst_169 {dimension_numbers = #tpu.dot_dimension_numbers<[1], [0], [0], [1], [0, 0, 1, 1], [], []>} : vector<2x32xf32>, vector<32x128xf32>, vector<2x128xf32> -> vector<2x128xf32>
    %334 = arith.addf %330, %333 : vector<2x128xf32>
    %c0_170 = arith.constant 0 : index
    %c0_171 = arith.constant 0 : index
    %335 = vector.load %arg11[%c0_170, %c0_171] : memref<2x32xf32, #tpu.memory_space<vmem>>, vector<2x32xf32>
    %336 = vector.extract_strided_slice %334 {offsets = [0, 0], sizes = [2, 32], strides = [1, 1]} : vector<2x128xf32> to vector<2x32xf32>
    %337 = arith.negf %336 : vector<2x32xf32>
    %338 = math.exp %337 : vector<2x32xf32>
    %cst_172 = arith.constant 1.000000e+00 : f32
    %339 = vector.broadcast %cst_172 : f32 to vector<2x32xf32>
    %340 = arith.addf %339, %338 : vector<2x32xf32>
    %341 = arith.divf %339, %340 : vector<2x32xf32>
    %342 = vector.extract_strided_slice %334 {offsets = [0, 32], sizes = [2, 32], strides = [1, 1]} : vector<2x128xf32> to vector<2x32xf32>
    %343 = arith.negf %342 : vector<2x32xf32>
    %344 = math.exp %343 : vector<2x32xf32>
    %cst_173 = arith.constant 1.000000e+00 : f32
    %345 = vector.broadcast %cst_173 : f32 to vector<2x32xf32>
    %346 = arith.addf %345, %344 : vector<2x32xf32>
    %347 = arith.divf %345, %346 : vector<2x32xf32>
    %348 = vector.extract_strided_slice %334 {offsets = [0, 64], sizes = [2, 32], strides = [1, 1]} : vector<2x128xf32> to vector<2x32xf32>
    %349 = math.tanh %348 : vector<2x32xf32>
    %350 = vector.extract_strided_slice %334 {offsets = [0, 96], sizes = [2, 32], strides = [1, 1]} : vector<2x128xf32> to vector<2x32xf32>
    %351 = arith.negf %350 : vector<2x32xf32>
    %352 = math.exp %351 : vector<2x32xf32>
    %cst_174 = arith.constant 1.000000e+00 : f32
    %353 = vector.broadcast %cst_174 : f32 to vector<2x32xf32>
    %354 = arith.addf %353, %352 : vector<2x32xf32>
    %355 = arith.divf %353, %354 : vector<2x32xf32>
    %356 = arith.mulf %347, %335 : vector<2x32xf32>
    %357 = arith.mulf %341, %349 : vector<2x32xf32>
    %358 = arith.addf %356, %357 : vector<2x32xf32>
    %359 = math.tanh %358 : vector<2x32xf32>
    %360 = arith.mulf %355, %359 : vector<2x32xf32>
    %c0_175 = arith.constant 0 : index
    %c0_176 = arith.constant 0 : index
    %361 = vector.load %arg10[%c0_175, %c0_176] : memref<2x32xf32, #tpu.memory_space<vmem>>, vector<2x32xf32>
    tpu.vector_store %arg10[%c0_175, %c0_176], %360 {strides = array<i32>} : memref<2x32xf32, #tpu.memory_space<vmem>>, vector<2x32xf32>,
    %c0_177 = arith.constant 0 : index
    %c0_178 = arith.constant 0 : index
    %362 = vector.load %arg11[%c0_177, %c0_178] : memref<2x32xf32, #tpu.memory_space<vmem>>, vector<2x32xf32>
    tpu.vector_store %arg11[%c0_177, %c0_178], %358 {strides = array<i32>} : memref<2x32xf32, #tpu.memory_space<vmem>>, vector<2x32xf32>,
    %363 = arith.index_cast %c4_i32 : i32 to index
    %c0_179 = arith.constant 0 : index
    %c0_180 = arith.constant 0 : index
    %364 = vector.load %arg7[%363, %c0_179, %c0_180] : memref<8x2x64xf32, #tpu.memory_space<vmem>>, vector<1x2x32xf32>
    %365 = vector.shape_cast %364 : vector<1x2x32xf32> to vector<2x32xf32>
    %366 = vector.shape_cast %360 : vector<2x32xf32> to vector<1x2x32xf32>
    tpu.vector_store %arg7[%363, %c0_179, %c0_180], %366 {strides = array<i32>} : memref<8x2x64xf32, #tpu.memory_space<vmem>>, vector<1x2x32xf32>,
    %c7_i32_181 = arith.constant 7 : i32
    %367 = arith.subi %c7_i32_181, %c4_i32 : i32
    %368 = arith.index_cast %367 : i32 to index
    %c0_182 = arith.constant 0 : index
    %c0_183 = arith.constant 0 : index
    %369 = vector.load %arg2[%368, %c0_182, %c0_183] : memref<8x2x128xf32, #tpu.memory_space<vmem>>, vector<1x2x128xf32>
    %370 = vector.shape_cast %369 : vector<1x2x128xf32> to vector<2x128xf32>
    %c0_184 = arith.constant 0 : index
    %c0_185 = arith.constant 0 : index
    %371 = vector.load %arg12[%c0_184, %c0_185] : memref<2x32xf32, #tpu.memory_space<vmem>>, vector<2x32xf32>
    %c0_186 = arith.constant 0 : index
    %c0_187 = arith.constant 0 : index
    %372 = vector.load %arg4[%c0_186, %c0_187] : memref<32x128xf32, #tpu.memory_space<vmem>>, vector<32x128xf32>
    %cst_188 = arith.constant dense<0.000000e+00> : vector<2x128xf32>
    %373 = tpu.matmul %371, %372, %cst_188 {dimension_numbers = #tpu.dot_dimension_numbers<[1], [0], [0], [1], [0, 0, 1, 1], [], []>} : vector<2x32xf32>, vector<32x128xf32>, vector<2x128xf32> -> vector<2x128xf32>
    %374 = arith.addf %370, %373 : vector<2x128xf32>
    %c0_189 = arith.constant 0 : index
    %c0_190 = arith.constant 0 : index
    %375 = vector.load %arg13[%c0_189, %c0_190] : memref<2x32xf32, #tpu.memory_space<vmem>>, vector<2x32xf32>
    %376 = vector.extract_strided_slice %374 {offsets = [0, 0], sizes = [2, 32], strides = [1, 1]} : vector<2x128xf32> to vector<2x32xf32>
    %377 = arith.negf %376 : vector<2x32xf32>
    %378 = math.exp %377 : vector<2x32xf32>
    %cst_191 = arith.constant 1.000000e+00 : f32
    %379 = vector.broadcast %cst_191 : f32 to vector<2x32xf32>
    %380 = arith.addf %379, %378 : vector<2x32xf32>
    %381 = arith.divf %379, %380 : vector<2x32xf32>
    %382 = vector.extract_strided_slice %374 {offsets = [0, 32], sizes = [2, 32], strides = [1, 1]} : vector<2x128xf32> to vector<2x32xf32>
    %383 = arith.negf %382 : vector<2x32xf32>
    %384 = math.exp %383 : vector<2x32xf32>
    %cst_192 = arith.constant 1.000000e+00 : f32
    %385 = vector.broadcast %cst_192 : f32 to vector<2x32xf32>
    %386 = arith.addf %385, %384 : vector<2x32xf32>
    %387 = arith.divf %385, %386 : vector<2x32xf32>
    %388 = vector.extract_strided_slice %374 {offsets = [0, 64], sizes = [2, 32], strides = [1, 1]} : vector<2x128xf32> to vector<2x32xf32>
    %389 = math.tanh %388 : vector<2x32xf32>
    %390 = vector.extract_strided_slice %374 {offsets = [0, 96], sizes = [2, 32], strides = [1, 1]} : vector<2x128xf32> to vector<2x32xf32>
    %391 = arith.negf %390 : vector<2x32xf32>
    %392 = math.exp %391 : vector<2x32xf32>
    %cst_193 = arith.constant 1.000000e+00 : f32
    %393 = vector.broadcast %cst_193 : f32 to vector<2x32xf32>
    %394 = arith.addf %393, %392 : vector<2x32xf32>
    %395 = arith.divf %393, %394 : vector<2x32xf32>
    %396 = arith.mulf %387, %375 : vector<2x32xf32>
    %397 = arith.mulf %381, %389 : vector<2x32xf32>
    %398 = arith.addf %396, %397 : vector<2x32xf32>
    %399 = math.tanh %398 : vector<2x32xf32>
    %400 = arith.mulf %395, %399 : vector<2x32xf32>
    %c0_194 = arith.constant 0 : index
    %c0_195 = arith.constant 0 : index
    %401 = vector.load %arg12[%c0_194, %c0_195] : memref<2x32xf32, #tpu.memory_space<vmem>>, vector<2x32xf32>
    tpu.vector_store %arg12[%c0_194, %c0_195], %400 {strides = array<i32>} : memref<2x32xf32, #tpu.memory_space<vmem>>, vector<2x32xf32>,
    %c0_196 = arith.constant 0 : index
    %c0_197 = arith.constant 0 : index
    %402 = vector.load %arg13[%c0_196, %c0_197] : memref<2x32xf32, #tpu.memory_space<vmem>>, vector<2x32xf32>
    tpu.vector_store %arg13[%c0_196, %c0_197], %398 {strides = array<i32>} : memref<2x32xf32, #tpu.memory_space<vmem>>, vector<2x32xf32>,
    %403 = arith.index_cast %367 : i32 to index
    %c0_198 = arith.constant 0 : index
    %c32_199 = arith.constant 32 : index
    %404 = vector.load %arg7[%403, %c0_198, %c32_199] : memref<8x2x64xf32, #tpu.memory_space<vmem>>, vector<1x2x32xf32>
    %405 = vector.shape_cast %404 : vector<1x2x32xf32> to vector<2x32xf32>
    %406 = vector.shape_cast %400 : vector<2x32xf32> to vector<1x2x32xf32>
    tpu.vector_store %arg7[%403, %c0_198, %c32_199], %406 {strides = array<i32>} : memref<8x2x64xf32, #tpu.memory_space<vmem>>, vector<1x2x32xf32>,
    %c5_i32 = arith.constant 5 : i32
    %407 = arith.index_cast %c5_i32 : i32 to index
    %c0_200 = arith.constant 0 : index
    %c0_201 = arith.constant 0 : index
    %408 = vector.load %arg1[%407, %c0_200, %c0_201] : memref<8x2x128xf32, #tpu.memory_space<vmem>>, vector<1x2x128xf32>
    %409 = vector.shape_cast %408 : vector<1x2x128xf32> to vector<2x128xf32>
    %c0_202 = arith.constant 0 : index
    %c0_203 = arith.constant 0 : index
    %410 = vector.load %arg10[%c0_202, %c0_203] : memref<2x32xf32, #tpu.memory_space<vmem>>, vector<2x32xf32>
    %c0_204 = arith.constant 0 : index
    %c0_205 = arith.constant 0 : index
    %411 = vector.load %arg3[%c0_204, %c0_205] : memref<32x128xf32, #tpu.memory_space<vmem>>, vector<32x128xf32>
    %cst_206 = arith.constant dense<0.000000e+00> : vector<2x128xf32>
    %412 = tpu.matmul %410, %411, %cst_206 {dimension_numbers = #tpu.dot_dimension_numbers<[1], [0], [0], [1], [0, 0, 1, 1], [], []>} : vector<2x32xf32>, vector<32x128xf32>, vector<2x128xf32> -> vector<2x128xf32>
    %413 = arith.addf %409, %412 : vector<2x128xf32>
    %c0_207 = arith.constant 0 : index
    %c0_208 = arith.constant 0 : index
    %414 = vector.load %arg11[%c0_207, %c0_208] : memref<2x32xf32, #tpu.memory_space<vmem>>, vector<2x32xf32>
    %415 = vector.extract_strided_slice %413 {offsets = [0, 0], sizes = [2, 32], strides = [1, 1]} : vector<2x128xf32> to vector<2x32xf32>
    %416 = arith.negf %415 : vector<2x32xf32>
    %417 = math.exp %416 : vector<2x32xf32>
    %cst_209 = arith.constant 1.000000e+00 : f32
    %418 = vector.broadcast %cst_209 : f32 to vector<2x32xf32>
    %419 = arith.addf %418, %417 : vector<2x32xf32>
    %420 = arith.divf %418, %419 : vector<2x32xf32>
    %421 = vector.extract_strided_slice %413 {offsets = [0, 32], sizes = [2, 32], strides = [1, 1]} : vector<2x128xf32> to vector<2x32xf32>
    %422 = arith.negf %421 : vector<2x32xf32>
    %423 = math.exp %422 : vector<2x32xf32>
    %cst_210 = arith.constant 1.000000e+00 : f32
    %424 = vector.broadcast %cst_210 : f32 to vector<2x32xf32>
    %425 = arith.addf %424, %423 : vector<2x32xf32>
    %426 = arith.divf %424, %425 : vector<2x32xf32>
    %427 = vector.extract_strided_slice %413 {offsets = [0, 64], sizes = [2, 32], strides = [1, 1]} : vector<2x128xf32> to vector<2x32xf32>
    %428 = math.tanh %427 : vector<2x32xf32>
    %429 = vector.extract_strided_slice %413 {offsets = [0, 96], sizes = [2, 32], strides = [1, 1]} : vector<2x128xf32> to vector<2x32xf32>
    %430 = arith.negf %429 : vector<2x32xf32>
    %431 = math.exp %430 : vector<2x32xf32>
    %cst_211 = arith.constant 1.000000e+00 : f32
    %432 = vector.broadcast %cst_211 : f32 to vector<2x32xf32>
    %433 = arith.addf %432, %431 : vector<2x32xf32>
    %434 = arith.divf %432, %433 : vector<2x32xf32>
    %435 = arith.mulf %426, %414 : vector<2x32xf32>
    %436 = arith.mulf %420, %428 : vector<2x32xf32>
    %437 = arith.addf %435, %436 : vector<2x32xf32>
    %438 = math.tanh %437 : vector<2x32xf32>
    %439 = arith.mulf %434, %438 : vector<2x32xf32>
    %c0_212 = arith.constant 0 : index
    %c0_213 = arith.constant 0 : index
    %440 = vector.load %arg10[%c0_212, %c0_213] : memref<2x32xf32, #tpu.memory_space<vmem>>, vector<2x32xf32>
    tpu.vector_store %arg10[%c0_212, %c0_213], %439 {strides = array<i32>} : memref<2x32xf32, #tpu.memory_space<vmem>>, vector<2x32xf32>,
    %c0_214 = arith.constant 0 : index
    %c0_215 = arith.constant 0 : index
    %441 = vector.load %arg11[%c0_214, %c0_215] : memref<2x32xf32, #tpu.memory_space<vmem>>, vector<2x32xf32>
    tpu.vector_store %arg11[%c0_214, %c0_215], %437 {strides = array<i32>} : memref<2x32xf32, #tpu.memory_space<vmem>>, vector<2x32xf32>,
    %442 = arith.index_cast %c5_i32 : i32 to index
    %c0_216 = arith.constant 0 : index
    %c0_217 = arith.constant 0 : index
    %443 = vector.load %arg7[%442, %c0_216, %c0_217] : memref<8x2x64xf32, #tpu.memory_space<vmem>>, vector<1x2x32xf32>
    %444 = vector.shape_cast %443 : vector<1x2x32xf32> to vector<2x32xf32>
    %445 = vector.shape_cast %439 : vector<2x32xf32> to vector<1x2x32xf32>
    tpu.vector_store %arg7[%442, %c0_216, %c0_217], %445 {strides = array<i32>} : memref<8x2x64xf32, #tpu.memory_space<vmem>>, vector<1x2x32xf32>,
    %c7_i32_218 = arith.constant 7 : i32
    %446 = arith.subi %c7_i32_218, %c5_i32 : i32
    %447 = arith.index_cast %446 : i32 to index
    %c0_219 = arith.constant 0 : index
    %c0_220 = arith.constant 0 : index
    %448 = vector.load %arg2[%447, %c0_219, %c0_220] : memref<8x2x128xf32, #tpu.memory_space<vmem>>, vector<1x2x128xf32>
    %449 = vector.shape_cast %448 : vector<1x2x128xf32> to vector<2x128xf32>
    %c0_221 = arith.constant 0 : index
    %c0_222 = arith.constant 0 : index
    %450 = vector.load %arg12[%c0_221, %c0_222] : memref<2x32xf32, #tpu.memory_space<vmem>>, vector<2x32xf32>
    %c0_223 = arith.constant 0 : index
    %c0_224 = arith.constant 0 : index
    %451 = vector.load %arg4[%c0_223, %c0_224] : memref<32x128xf32, #tpu.memory_space<vmem>>, vector<32x128xf32>
    %cst_225 = arith.constant dense<0.000000e+00> : vector<2x128xf32>
    %452 = tpu.matmul %450, %451, %cst_225 {dimension_numbers = #tpu.dot_dimension_numbers<[1], [0], [0], [1], [0, 0, 1, 1], [], []>} : vector<2x32xf32>, vector<32x128xf32>, vector<2x128xf32> -> vector<2x128xf32>
    %453 = arith.addf %449, %452 : vector<2x128xf32>
    %c0_226 = arith.constant 0 : index
    %c0_227 = arith.constant 0 : index
    %454 = vector.load %arg13[%c0_226, %c0_227] : memref<2x32xf32, #tpu.memory_space<vmem>>, vector<2x32xf32>
    %455 = vector.extract_strided_slice %453 {offsets = [0, 0], sizes = [2, 32], strides = [1, 1]} : vector<2x128xf32> to vector<2x32xf32>
    %456 = arith.negf %455 : vector<2x32xf32>
    %457 = math.exp %456 : vector<2x32xf32>
    %cst_228 = arith.constant 1.000000e+00 : f32
    %458 = vector.broadcast %cst_228 : f32 to vector<2x32xf32>
    %459 = arith.addf %458, %457 : vector<2x32xf32>
    %460 = arith.divf %458, %459 : vector<2x32xf32>
    %461 = vector.extract_strided_slice %453 {offsets = [0, 32], sizes = [2, 32], strides = [1, 1]} : vector<2x128xf32> to vector<2x32xf32>
    %462 = arith.negf %461 : vector<2x32xf32>
    %463 = math.exp %462 : vector<2x32xf32>
    %cst_229 = arith.constant 1.000000e+00 : f32
    %464 = vector.broadcast %cst_229 : f32 to vector<2x32xf32>
    %465 = arith.addf %464, %463 : vector<2x32xf32>
    %466 = arith.divf %464, %465 : vector<2x32xf32>
    %467 = vector.extract_strided_slice %453 {offsets = [0, 64], sizes = [2, 32], strides = [1, 1]} : vector<2x128xf32> to vector<2x32xf32>
    %468 = math.tanh %467 : vector<2x32xf32>
    %469 = vector.extract_strided_slice %453 {offsets = [0, 96], sizes = [2, 32], strides = [1, 1]} : vector<2x128xf32> to vector<2x32xf32>
    %470 = arith.negf %469 : vector<2x32xf32>
    %471 = math.exp %470 : vector<2x32xf32>
    %cst_230 = arith.constant 1.000000e+00 : f32
    %472 = vector.broadcast %cst_230 : f32 to vector<2x32xf32>
    %473 = arith.addf %472, %471 : vector<2x32xf32>
    %474 = arith.divf %472, %473 : vector<2x32xf32>
    %475 = arith.mulf %466, %454 : vector<2x32xf32>
    %476 = arith.mulf %460, %468 : vector<2x32xf32>
    %477 = arith.addf %475, %476 : vector<2x32xf32>
    %478 = math.tanh %477 : vector<2x32xf32>
    %479 = arith.mulf %474, %478 : vector<2x32xf32>
    %c0_231 = arith.constant 0 : index
    %c0_232 = arith.constant 0 : index
    %480 = vector.load %arg12[%c0_231, %c0_232] : memref<2x32xf32, #tpu.memory_space<vmem>>, vector<2x32xf32>
    tpu.vector_store %arg12[%c0_231, %c0_232], %479 {strides = array<i32>} : memref<2x32xf32, #tpu.memory_space<vmem>>, vector<2x32xf32>,
    %c0_233 = arith.constant 0 : index
    %c0_234 = arith.constant 0 : index
    %481 = vector.load %arg13[%c0_233, %c0_234] : memref<2x32xf32, #tpu.memory_space<vmem>>, vector<2x32xf32>
    tpu.vector_store %arg13[%c0_233, %c0_234], %477 {strides = array<i32>} : memref<2x32xf32, #tpu.memory_space<vmem>>, vector<2x32xf32>,
    %482 = arith.index_cast %446 : i32 to index
    %c0_235 = arith.constant 0 : index
    %c32_236 = arith.constant 32 : index
    %483 = vector.load %arg7[%482, %c0_235, %c32_236] : memref<8x2x64xf32, #tpu.memory_space<vmem>>, vector<1x2x32xf32>
    %484 = vector.shape_cast %483 : vector<1x2x32xf32> to vector<2x32xf32>
    %485 = vector.shape_cast %479 : vector<2x32xf32> to vector<1x2x32xf32>
    tpu.vector_store %arg7[%482, %c0_235, %c32_236], %485 {strides = array<i32>} : memref<8x2x64xf32, #tpu.memory_space<vmem>>, vector<1x2x32xf32>,
    %c6_i32 = arith.constant 6 : i32
    %486 = arith.index_cast %c6_i32 : i32 to index
    %c0_237 = arith.constant 0 : index
    %c0_238 = arith.constant 0 : index
    %487 = vector.load %arg1[%486, %c0_237, %c0_238] : memref<8x2x128xf32, #tpu.memory_space<vmem>>, vector<1x2x128xf32>
    %488 = vector.shape_cast %487 : vector<1x2x128xf32> to vector<2x128xf32>
    %c0_239 = arith.constant 0 : index
    %c0_240 = arith.constant 0 : index
    %489 = vector.load %arg10[%c0_239, %c0_240] : memref<2x32xf32, #tpu.memory_space<vmem>>, vector<2x32xf32>
    %c0_241 = arith.constant 0 : index
    %c0_242 = arith.constant 0 : index
    %490 = vector.load %arg3[%c0_241, %c0_242] : memref<32x128xf32, #tpu.memory_space<vmem>>, vector<32x128xf32>
    %cst_243 = arith.constant dense<0.000000e+00> : vector<2x128xf32>
    %491 = tpu.matmul %489, %490, %cst_243 {dimension_numbers = #tpu.dot_dimension_numbers<[1], [0], [0], [1], [0, 0, 1, 1], [], []>} : vector<2x32xf32>, vector<32x128xf32>, vector<2x128xf32> -> vector<2x128xf32>
    %492 = arith.addf %488, %491 : vector<2x128xf32>
    %c0_244 = arith.constant 0 : index
    %c0_245 = arith.constant 0 : index
    %493 = vector.load %arg11[%c0_244, %c0_245] : memref<2x32xf32, #tpu.memory_space<vmem>>, vector<2x32xf32>
    %494 = vector.extract_strided_slice %492 {offsets = [0, 0], sizes = [2, 32], strides = [1, 1]} : vector<2x128xf32> to vector<2x32xf32>
    %495 = arith.negf %494 : vector<2x32xf32>
    %496 = math.exp %495 : vector<2x32xf32>
    %cst_246 = arith.constant 1.000000e+00 : f32
    %497 = vector.broadcast %cst_246 : f32 to vector<2x32xf32>
    %498 = arith.addf %497, %496 : vector<2x32xf32>
    %499 = arith.divf %497, %498 : vector<2x32xf32>
    %500 = vector.extract_strided_slice %492 {offsets = [0, 32], sizes = [2, 32], strides = [1, 1]} : vector<2x128xf32> to vector<2x32xf32>
    %501 = arith.negf %500 : vector<2x32xf32>
    %502 = math.exp %501 : vector<2x32xf32>
    %cst_247 = arith.constant 1.000000e+00 : f32
    %503 = vector.broadcast %cst_247 : f32 to vector<2x32xf32>
    %504 = arith.addf %503, %502 : vector<2x32xf32>
    %505 = arith.divf %503, %504 : vector<2x32xf32>
    %506 = vector.extract_strided_slice %492 {offsets = [0, 64], sizes = [2, 32], strides = [1, 1]} : vector<2x128xf32> to vector<2x32xf32>
    %507 = math.tanh %506 : vector<2x32xf32>
    %508 = vector.extract_strided_slice %492 {offsets = [0, 96], sizes = [2, 32], strides = [1, 1]} : vector<2x128xf32> to vector<2x32xf32>
    %509 = arith.negf %508 : vector<2x32xf32>
    %510 = math.exp %509 : vector<2x32xf32>
    %cst_248 = arith.constant 1.000000e+00 : f32
    %511 = vector.broadcast %cst_248 : f32 to vector<2x32xf32>
    %512 = arith.addf %511, %510 : vector<2x32xf32>
    %513 = arith.divf %511, %512 : vector<2x32xf32>
    %514 = arith.mulf %505, %493 : vector<2x32xf32>
    %515 = arith.mulf %499, %507 : vector<2x32xf32>
    %516 = arith.addf %514, %515 : vector<2x32xf32>
    %517 = math.tanh %516 : vector<2x32xf32>
    %518 = arith.mulf %513, %517 : vector<2x32xf32>
    %c0_249 = arith.constant 0 : index
    %c0_250 = arith.constant 0 : index
    %519 = vector.load %arg10[%c0_249, %c0_250] : memref<2x32xf32, #tpu.memory_space<vmem>>, vector<2x32xf32>
    tpu.vector_store %arg10[%c0_249, %c0_250], %518 {strides = array<i32>} : memref<2x32xf32, #tpu.memory_space<vmem>>, vector<2x32xf32>,
    %c0_251 = arith.constant 0 : index
    %c0_252 = arith.constant 0 : index
    %520 = vector.load %arg11[%c0_251, %c0_252] : memref<2x32xf32, #tpu.memory_space<vmem>>, vector<2x32xf32>
    tpu.vector_store %arg11[%c0_251, %c0_252], %516 {strides = array<i32>} : memref<2x32xf32, #tpu.memory_space<vmem>>, vector<2x32xf32>,
    %521 = arith.index_cast %c6_i32 : i32 to index
    %c0_253 = arith.constant 0 : index
    %c0_254 = arith.constant 0 : index
    %522 = vector.load %arg7[%521, %c0_253, %c0_254] : memref<8x2x64xf32, #tpu.memory_space<vmem>>, vector<1x2x32xf32>
    %523 = vector.shape_cast %522 : vector<1x2x32xf32> to vector<2x32xf32>
    %524 = vector.shape_cast %518 : vector<2x32xf32> to vector<1x2x32xf32>
    tpu.vector_store %arg7[%521, %c0_253, %c0_254], %524 {strides = array<i32>} : memref<8x2x64xf32, #tpu.memory_space<vmem>>, vector<1x2x32xf32>,
    %c7_i32_255 = arith.constant 7 : i32
    %525 = arith.subi %c7_i32_255, %c6_i32 : i32
    %526 = arith.index_cast %525 : i32 to index
    %c0_256 = arith.constant 0 : index
    %c0_257 = arith.constant 0 : index
    %527 = vector.load %arg2[%526, %c0_256, %c0_257] : memref<8x2x128xf32, #tpu.memory_space<vmem>>, vector<1x2x128xf32>
    %528 = vector.shape_cast %527 : vector<1x2x128xf32> to vector<2x128xf32>
    %c0_258 = arith.constant 0 : index
    %c0_259 = arith.constant 0 : index
    %529 = vector.load %arg12[%c0_258, %c0_259] : memref<2x32xf32, #tpu.memory_space<vmem>>, vector<2x32xf32>
    %c0_260 = arith.constant 0 : index
    %c0_261 = arith.constant 0 : index
    %530 = vector.load %arg4[%c0_260, %c0_261] : memref<32x128xf32, #tpu.memory_space<vmem>>, vector<32x128xf32>
    %cst_262 = arith.constant dense<0.000000e+00> : vector<2x128xf32>
    %531 = tpu.matmul %529, %530, %cst_262 {dimension_numbers = #tpu.dot_dimension_numbers<[1], [0], [0], [1], [0, 0, 1, 1], [], []>} : vector<2x32xf32>, vector<32x128xf32>, vector<2x128xf32> -> vector<2x128xf32>
    %532 = arith.addf %528, %531 : vector<2x128xf32>
    %c0_263 = arith.constant 0 : index
    %c0_264 = arith.constant 0 : index
    %533 = vector.load %arg13[%c0_263, %c0_264] : memref<2x32xf32, #tpu.memory_space<vmem>>, vector<2x32xf32>
    %534 = vector.extract_strided_slice %532 {offsets = [0, 0], sizes = [2, 32], strides = [1, 1]} : vector<2x128xf32> to vector<2x32xf32>
    %535 = arith.negf %534 : vector<2x32xf32>
    %536 = math.exp %535 : vector<2x32xf32>
    %cst_265 = arith.constant 1.000000e+00 : f32
    %537 = vector.broadcast %cst_265 : f32 to vector<2x32xf32>
    %538 = arith.addf %537, %536 : vector<2x32xf32>
    %539 = arith.divf %537, %538 : vector<2x32xf32>
    %540 = vector.extract_strided_slice %532 {offsets = [0, 32], sizes = [2, 32], strides = [1, 1]} : vector<2x128xf32> to vector<2x32xf32>
    %541 = arith.negf %540 : vector<2x32xf32>
    %542 = math.exp %541 : vector<2x32xf32>
    %cst_266 = arith.constant 1.000000e+00 : f32
    %543 = vector.broadcast %cst_266 : f32 to vector<2x32xf32>
    %544 = arith.addf %543, %542 : vector<2x32xf32>
    %545 = arith.divf %543, %544 : vector<2x32xf32>
    %546 = vector.extract_strided_slice %532 {offsets = [0, 64], sizes = [2, 32], strides = [1, 1]} : vector<2x128xf32> to vector<2x32xf32>
    %547 = math.tanh %546 : vector<2x32xf32>
    %548 = vector.extract_strided_slice %532 {offsets = [0, 96], sizes = [2, 32], strides = [1, 1]} : vector<2x128xf32> to vector<2x32xf32>
    %549 = arith.negf %548 : vector<2x32xf32>
    %550 = math.exp %549 : vector<2x32xf32>
    %cst_267 = arith.constant 1.000000e+00 : f32
    %551 = vector.broadcast %cst_267 : f32 to vector<2x32xf32>
    %552 = arith.addf %551, %550 : vector<2x32xf32>
    %553 = arith.divf %551, %552 : vector<2x32xf32>
    %554 = arith.mulf %545, %533 : vector<2x32xf32>
    %555 = arith.mulf %539, %547 : vector<2x32xf32>
    %556 = arith.addf %554, %555 : vector<2x32xf32>
    %557 = math.tanh %556 : vector<2x32xf32>
    %558 = arith.mulf %553, %557 : vector<2x32xf32>
    %c0_268 = arith.constant 0 : index
    %c0_269 = arith.constant 0 : index
    %559 = vector.load %arg12[%c0_268, %c0_269] : memref<2x32xf32, #tpu.memory_space<vmem>>, vector<2x32xf32>
    tpu.vector_store %arg12[%c0_268, %c0_269], %558 {strides = array<i32>} : memref<2x32xf32, #tpu.memory_space<vmem>>, vector<2x32xf32>,
    %c0_270 = arith.constant 0 : index
    %c0_271 = arith.constant 0 : index
    %560 = vector.load %arg13[%c0_270, %c0_271] : memref<2x32xf32, #tpu.memory_space<vmem>>, vector<2x32xf32>
    tpu.vector_store %arg13[%c0_270, %c0_271], %556 {strides = array<i32>} : memref<2x32xf32, #tpu.memory_space<vmem>>, vector<2x32xf32>,
    %561 = arith.index_cast %525 : i32 to index
    %c0_272 = arith.constant 0 : index
    %c32_273 = arith.constant 32 : index
    %562 = vector.load %arg7[%561, %c0_272, %c32_273] : memref<8x2x64xf32, #tpu.memory_space<vmem>>, vector<1x2x32xf32>
    %563 = vector.shape_cast %562 : vector<1x2x32xf32> to vector<2x32xf32>
    %564 = vector.shape_cast %558 : vector<2x32xf32> to vector<1x2x32xf32>
    tpu.vector_store %arg7[%561, %c0_272, %c32_273], %564 {strides = array<i32>} : memref<8x2x64xf32, #tpu.memory_space<vmem>>, vector<1x2x32xf32>,
    %c7_i32_274 = arith.constant 7 : i32
    %565 = arith.index_cast %c7_i32_274 : i32 to index
    %c0_275 = arith.constant 0 : index
    %c0_276 = arith.constant 0 : index
    %566 = vector.load %arg1[%565, %c0_275, %c0_276] : memref<8x2x128xf32, #tpu.memory_space<vmem>>, vector<1x2x128xf32>
    %567 = vector.shape_cast %566 : vector<1x2x128xf32> to vector<2x128xf32>
    %c0_277 = arith.constant 0 : index
    %c0_278 = arith.constant 0 : index
    %568 = vector.load %arg10[%c0_277, %c0_278] : memref<2x32xf32, #tpu.memory_space<vmem>>, vector<2x32xf32>
    %c0_279 = arith.constant 0 : index
    %c0_280 = arith.constant 0 : index
    %569 = vector.load %arg3[%c0_279, %c0_280] : memref<32x128xf32, #tpu.memory_space<vmem>>, vector<32x128xf32>
    %cst_281 = arith.constant dense<0.000000e+00> : vector<2x128xf32>
    %570 = tpu.matmul %568, %569, %cst_281 {dimension_numbers = #tpu.dot_dimension_numbers<[1], [0], [0], [1], [0, 0, 1, 1], [], []>} : vector<2x32xf32>, vector<32x128xf32>, vector<2x128xf32> -> vector<2x128xf32>
    %571 = arith.addf %567, %570 : vector<2x128xf32>
    %c0_282 = arith.constant 0 : index
    %c0_283 = arith.constant 0 : index
    %572 = vector.load %arg11[%c0_282, %c0_283] : memref<2x32xf32, #tpu.memory_space<vmem>>, vector<2x32xf32>
    %573 = vector.extract_strided_slice %571 {offsets = [0, 0], sizes = [2, 32], strides = [1, 1]} : vector<2x128xf32> to vector<2x32xf32>
    %574 = arith.negf %573 : vector<2x32xf32>
    %575 = math.exp %574 : vector<2x32xf32>
    %cst_284 = arith.constant 1.000000e+00 : f32
    %576 = vector.broadcast %cst_284 : f32 to vector<2x32xf32>
    %577 = arith.addf %576, %575 : vector<2x32xf32>
    %578 = arith.divf %576, %577 : vector<2x32xf32>
    %579 = vector.extract_strided_slice %571 {offsets = [0, 32], sizes = [2, 32], strides = [1, 1]} : vector<2x128xf32> to vector<2x32xf32>
    %580 = arith.negf %579 : vector<2x32xf32>
    %581 = math.exp %580 : vector<2x32xf32>
    %cst_285 = arith.constant 1.000000e+00 : f32
    %582 = vector.broadcast %cst_285 : f32 to vector<2x32xf32>
    %583 = arith.addf %582, %581 : vector<2x32xf32>
    %584 = arith.divf %582, %583 : vector<2x32xf32>
    %585 = vector.extract_strided_slice %571 {offsets = [0, 64], sizes = [2, 32], strides = [1, 1]} : vector<2x128xf32> to vector<2x32xf32>
    %586 = math.tanh %585 : vector<2x32xf32>
    %587 = vector.extract_strided_slice %571 {offsets = [0, 96], sizes = [2, 32], strides = [1, 1]} : vector<2x128xf32> to vector<2x32xf32>
    %588 = arith.negf %587 : vector<2x32xf32>
    %589 = math.exp %588 : vector<2x32xf32>
    %cst_286 = arith.constant 1.000000e+00 : f32
    %590 = vector.broadcast %cst_286 : f32 to vector<2x32xf32>
    %591 = arith.addf %590, %589 : vector<2x32xf32>
    %592 = arith.divf %590, %591 : vector<2x32xf32>
    %593 = arith.mulf %584, %572 : vector<2x32xf32>
    %594 = arith.mulf %578, %586 : vector<2x32xf32>
    %595 = arith.addf %593, %594 : vector<2x32xf32>
    %596 = math.tanh %595 : vector<2x32xf32>
    %597 = arith.mulf %592, %596 : vector<2x32xf32>
    %c0_287 = arith.constant 0 : index
    %c0_288 = arith.constant 0 : index
    %598 = vector.load %arg10[%c0_287, %c0_288] : memref<2x32xf32, #tpu.memory_space<vmem>>, vector<2x32xf32>
    tpu.vector_store %arg10[%c0_287, %c0_288], %597 {strides = array<i32>} : memref<2x32xf32, #tpu.memory_space<vmem>>, vector<2x32xf32>,
    %c0_289 = arith.constant 0 : index
    %c0_290 = arith.constant 0 : index
    %599 = vector.load %arg11[%c0_289, %c0_290] : memref<2x32xf32, #tpu.memory_space<vmem>>, vector<2x32xf32>
    tpu.vector_store %arg11[%c0_289, %c0_290], %595 {strides = array<i32>} : memref<2x32xf32, #tpu.memory_space<vmem>>, vector<2x32xf32>,
    %600 = arith.index_cast %c7_i32_274 : i32 to index
    %c0_291 = arith.constant 0 : index
    %c0_292 = arith.constant 0 : index
    %601 = vector.load %arg7[%600, %c0_291, %c0_292] : memref<8x2x64xf32, #tpu.memory_space<vmem>>, vector<1x2x32xf32>
    %602 = vector.shape_cast %601 : vector<1x2x32xf32> to vector<2x32xf32>
    %603 = vector.shape_cast %597 : vector<2x32xf32> to vector<1x2x32xf32>
    tpu.vector_store %arg7[%600, %c0_291, %c0_292], %603 {strides = array<i32>} : memref<8x2x64xf32, #tpu.memory_space<vmem>>, vector<1x2x32xf32>,
    %c7_i32_293 = arith.constant 7 : i32
    %604 = arith.subi %c7_i32_293, %c7_i32_274 : i32
    %605 = arith.index_cast %604 : i32 to index
    %c0_294 = arith.constant 0 : index
    %c0_295 = arith.constant 0 : index
    %606 = vector.load %arg2[%605, %c0_294, %c0_295] : memref<8x2x128xf32, #tpu.memory_space<vmem>>, vector<1x2x128xf32>
    %607 = vector.shape_cast %606 : vector<1x2x128xf32> to vector<2x128xf32>
    %c0_296 = arith.constant 0 : index
    %c0_297 = arith.constant 0 : index
    %608 = vector.load %arg12[%c0_296, %c0_297] : memref<2x32xf32, #tpu.memory_space<vmem>>, vector<2x32xf32>
    %c0_298 = arith.constant 0 : index
    %c0_299 = arith.constant 0 : index
    %609 = vector.load %arg4[%c0_298, %c0_299] : memref<32x128xf32, #tpu.memory_space<vmem>>, vector<32x128xf32>
    %cst_300 = arith.constant dense<0.000000e+00> : vector<2x128xf32>
    %610 = tpu.matmul %608, %609, %cst_300 {dimension_numbers = #tpu.dot_dimension_numbers<[1], [0], [0], [1], [0, 0, 1, 1], [], []>} : vector<2x32xf32>, vector<32x128xf32>, vector<2x128xf32> -> vector<2x128xf32>
    %611 = arith.addf %607, %610 : vector<2x128xf32>
    %c0_301 = arith.constant 0 : index
    %c0_302 = arith.constant 0 : index
    %612 = vector.load %arg13[%c0_301, %c0_302] : memref<2x32xf32, #tpu.memory_space<vmem>>, vector<2x32xf32>
    %613 = vector.extract_strided_slice %611 {offsets = [0, 0], sizes = [2, 32], strides = [1, 1]} : vector<2x128xf32> to vector<2x32xf32>
    %614 = arith.negf %613 : vector<2x32xf32>
    %615 = math.exp %614 : vector<2x32xf32>
    %cst_303 = arith.constant 1.000000e+00 : f32
    %616 = vector.broadcast %cst_303 : f32 to vector<2x32xf32>
    %617 = arith.addf %616, %615 : vector<2x32xf32>
    %618 = arith.divf %616, %617 : vector<2x32xf32>
    %619 = vector.extract_strided_slice %611 {offsets = [0, 32], sizes = [2, 32], strides = [1, 1]} : vector<2x128xf32> to vector<2x32xf32>
    %620 = arith.negf %619 : vector<2x32xf32>
    %621 = math.exp %620 : vector<2x32xf32>
    %cst_304 = arith.constant 1.000000e+00 : f32
    %622 = vector.broadcast %cst_304 : f32 to vector<2x32xf32>
    %623 = arith.addf %622, %621 : vector<2x32xf32>
    %624 = arith.divf %622, %623 : vector<2x32xf32>
    %625 = vector.extract_strided_slice %611 {offsets = [0, 64], sizes = [2, 32], strides = [1, 1]} : vector<2x128xf32> to vector<2x32xf32>
    %626 = math.tanh %625 : vector<2x32xf32>
    %627 = vector.extract_strided_slice %611 {offsets = [0, 96], sizes = [2, 32], strides = [1, 1]} : vector<2x128xf32> to vector<2x32xf32>
    %628 = arith.negf %627 : vector<2x32xf32>
    %629 = math.exp %628 : vector<2x32xf32>
    %cst_305 = arith.constant 1.000000e+00 : f32
    %630 = vector.broadcast %cst_305 : f32 to vector<2x32xf32>
    %631 = arith.addf %630, %629 : vector<2x32xf32>
    %632 = arith.divf %630, %631 : vector<2x32xf32>
    %633 = arith.mulf %624, %612 : vector<2x32xf32>
    %634 = arith.mulf %618, %626 : vector<2x32xf32>
    %635 = arith.addf %633, %634 : vector<2x32xf32>
    %636 = math.tanh %635 : vector<2x32xf32>
    %637 = arith.mulf %632, %636 : vector<2x32xf32>
    %c0_306 = arith.constant 0 : index
    %c0_307 = arith.constant 0 : index
    %638 = vector.load %arg12[%c0_306, %c0_307] : memref<2x32xf32, #tpu.memory_space<vmem>>, vector<2x32xf32>
    tpu.vector_store %arg12[%c0_306, %c0_307], %637 {strides = array<i32>} : memref<2x32xf32, #tpu.memory_space<vmem>>, vector<2x32xf32>,
    %c0_308 = arith.constant 0 : index
    %c0_309 = arith.constant 0 : index
    %639 = vector.load %arg13[%c0_308, %c0_309] : memref<2x32xf32, #tpu.memory_space<vmem>>, vector<2x32xf32>
    tpu.vector_store %arg13[%c0_308, %c0_309], %635 {strides = array<i32>} : memref<2x32xf32, #tpu.memory_space<vmem>>, vector<2x32xf32>,
    %640 = arith.index_cast %604 : i32 to index
    %c0_310 = arith.constant 0 : index
    %c32_311 = arith.constant 32 : index
    %641 = vector.load %arg7[%640, %c0_310, %c32_311] : memref<8x2x64xf32, #tpu.memory_space<vmem>>, vector<1x2x32xf32>
    %642 = vector.shape_cast %641 : vector<1x2x32xf32> to vector<2x32xf32>
    %643 = vector.shape_cast %637 : vector<2x32xf32> to vector<1x2x32xf32>
    tpu.vector_store %arg7[%640, %c0_310, %c32_311], %643 {strides = array<i32>} : memref<8x2x64xf32, #tpu.memory_space<vmem>>, vector<1x2x32xf32>,
    %c8_i32 = arith.constant 8 : i32
    %c0_312 = arith.constant 0 : index
    %c0_313 = arith.constant 0 : index
    %644 = vector.load %arg10[%c0_312, %c0_313] : memref<2x32xf32, #tpu.memory_space<vmem>>, vector<2x32xf32>
    %c0_314 = arith.constant 0 : index
    %c0_315 = arith.constant 0 : index
    %c0_316 = arith.constant 0 : index
    %645 = vector.load %arg8[%c0_314, %c0_315, %c0_316] : memref<2x2x32xf32, #tpu.memory_space<vmem>>, vector<1x2x32xf32>
    %646 = vector.shape_cast %645 : vector<1x2x32xf32> to vector<2x32xf32>
    %647 = vector.shape_cast %644 : vector<2x32xf32> to vector<1x2x32xf32>
    tpu.vector_store %arg8[%c0_314, %c0_315, %c0_316], %647 {strides = array<i32>} : memref<2x2x32xf32, #tpu.memory_space<vmem>>, vector<1x2x32xf32>,
    %c0_317 = arith.constant 0 : index
    %c0_318 = arith.constant 0 : index
    %648 = vector.load %arg12[%c0_317, %c0_318] : memref<2x32xf32, #tpu.memory_space<vmem>>, vector<2x32xf32>
    %c1_319 = arith.constant 1 : index
    %c0_320 = arith.constant 0 : index
    %c0_321 = arith.constant 0 : index
    %649 = vector.load %arg8[%c1_319, %c0_320, %c0_321] : memref<2x2x32xf32, #tpu.memory_space<vmem>>, vector<1x2x32xf32>
    %650 = vector.shape_cast %649 : vector<1x2x32xf32> to vector<2x32xf32>
    %651 = vector.shape_cast %648 : vector<2x32xf32> to vector<1x2x32xf32>
    tpu.vector_store %arg8[%c1_319, %c0_320, %c0_321], %651 {strides = array<i32>} : memref<2x2x32xf32, #tpu.memory_space<vmem>>, vector<1x2x32xf32>,
    %c0_322 = arith.constant 0 : index
    %c0_323 = arith.constant 0 : index
    %652 = vector.load %arg11[%c0_322, %c0_323] : memref<2x32xf32, #tpu.memory_space<vmem>>, vector<2x32xf32>
    %c0_324 = arith.constant 0 : index
    %c0_325 = arith.constant 0 : index
    %c0_326 = arith.constant 0 : index
    %653 = vector.load %arg9[%c0_324, %c0_325, %c0_326] : memref<2x2x32xf32, #tpu.memory_space<vmem>>, vector<1x2x32xf32>
    %654 = vector.shape_cast %653 : vector<1x2x32xf32> to vector<2x32xf32>
    %655 = vector.shape_cast %652 : vector<2x32xf32> to vector<1x2x32xf32>
    tpu.vector_store %arg9[%c0_324, %c0_325, %c0_326], %655 {strides = array<i32>} : memref<2x2x32xf32, #tpu.memory_space<vmem>>, vector<1x2x32xf32>,
    %c0_327 = arith.constant 0 : index
    %c0_328 = arith.constant 0 : index
    %656 = vector.load %arg13[%c0_327, %c0_328] : memref<2x32xf32, #tpu.memory_space<vmem>>, vector<2x32xf32>
    %c1_329 = arith.constant 1 : index
    %c0_330 = arith.constant 0 : index
    %c0_331 = arith.constant 0 : index
    %657 = vector.load %arg9[%c1_329, %c0_330, %c0_331] : memref<2x2x32xf32, #tpu.memory_space<vmem>>, vector<1x2x32xf32>
    %658 = vector.shape_cast %657 : vector<1x2x32xf32> to vector<2x32xf32>
    %659 = vector.shape_cast %656 : vector<2x32xf32> to vector<1x2x32xf32>
    tpu.vector_store %arg9[%c1_329, %c0_330, %c0_331], %659 {strides = array<i32>} : memref<2x2x32xf32, #tpu.memory_space<vmem>>, vector<1x2x32xf32>,
    return
  }
  func.func @transform_0(%arg0: i32) -> (i32, i32, i32) {
    %c0_i32 = arith.constant 0 : i32
    %c0_i32_0 = arith.constant 0 : i32
    %c0_i32_1 = arith.constant 0 : i32
    %c0_i32_2 = arith.constant 0 : i32
    return %c0_i32, %c0_i32_0, %c0_i32_1 : i32, i32, i32
  }
  func.func @transform_1(%arg0: i32) -> (i32, i32, i32) {
    %c0_i32 = arith.constant 0 : i32
    %c0_i32_0 = arith.constant 0 : i32
    %c0_i32_1 = arith.constant 0 : i32
    %c0_i32_2 = arith.constant 0 : i32
    return %c0_i32, %c0_i32_0, %c0_i32_1 : i32, i32, i32
  }
  func.func @transform_2(%arg0: i32) -> (i32, i32) {
    %c0_i32 = arith.constant 0 : i32
    %c0_i32_0 = arith.constant 0 : i32
    %c0_i32_1 = arith.constant 0 : i32
    return %c0_i32, %c0_i32_0 : i32, i32
  }
  func.func @transform_3(%arg0: i32) -> (i32, i32) {
    %c0_i32 = arith.constant 0 : i32
    %c0_i32_0 = arith.constant 0 : i32
    %c0_i32_1 = arith.constant 0 : i32
    return %c0_i32, %c0_i32_0 : i32, i32
  }
  func.func @transform_4(%arg0: i32) -> (i32, i32, i32) {
    %c0_i32 = arith.constant 0 : i32
    %c0_i32_0 = arith.constant 0 : i32
    %c0_i32_1 = arith.constant 0 : i32
    %c0_i32_2 = arith.constant 0 : i32
    return %c0_i32, %c0_i32_0, %c0_i32_1 : i32, i32, i32
  }
  func.func @transform_5(%arg0: i32) -> (i32, i32, i32) {
    %c0_i32 = arith.constant 0 : i32
    %c0_i32_0 = arith.constant 0 : i32
    %c0_i32_1 = arith.constant 0 : i32
    %c0_i32_2 = arith.constant 0 : i32
    return %c0_i32, %c0_i32_0, %c0_i32_1 : i32, i32, i32
  }
  func.func @transform_6(%arg0: i32) -> (i32, i32, i32) {
    %c0_i32 = arith.constant 0 : i32
    %c0_i32_0 = arith.constant 0 : i32
    %c0_i32_1 = arith.constant 0 : i32
    %c0_i32_2 = arith.constant 0 : i32
    return %c0_i32, %c0_i32_0, %c0_i32_1 : i32, i32, i32
  }
  func.func @transform_7(%arg0: i32) -> (i32, i32, i32) {
    %c0_i32 = arith.constant 0 : i32
    %c0_i32_0 = arith.constant 0 : i32
    %c0_i32_1 = arith.constant 0 : i32
    %c0_i32_2 = arith.constant 0 : i32
    return %c0_i32, %c0_i32_0, %c0_i32_1 : i32, i32, i32
  }
  func.func @transform_8(%arg0: i32) -> (i32, i32, i32) {
    %c0_i32 = arith.constant 0 : i32
    %c0_i32_0 = arith.constant 0 : i32
    %c0_i32_1 = arith.constant 0 : i32
    %c0_i32_2 = arith.constant 0 : i32
    return %c0_i32, %c0_i32_0, %c0_i32_1 : i32, i32, i32
  }
}

</mosaic_0001>

<llo_original>
// kernel: tpu_custom_call.1
$region0: #{tpu_custom_call.1}
  #allocation0 [shape = 'u32[]', space=smem, size = 0x4, offset = 0x4, fixed_abs, tag = 'smem constant byte address 0x4 - core index']
  #allocation1 [shape = 'u32[144,128]{1,0:T(1,128)}', space=vmem, size = 0x12000, scoped, tag = 'internal scratch']
  #allocation2 [shape = 'f32[2,32]{1,0:T(2,128)}', space=vmem, size = 0x400, scoped, tag = 'scratch operand']
  #allocation3 [shape = 'f32[2,32]{1,0:T(2,128)}', space=vmem, size = 0x400, scoped, tag = 'scratch operand']
  #allocation4 [shape = 'f32[2,32]{1,0:T(2,128)}', space=vmem, size = 0x400, scoped, tag = 'scratch operand']
  #allocation5 [shape = 'f32[2,32]{1,0:T(2,128)}', space=vmem, size = 0x400, scoped, tag = 'scratch operand']
  %s0 = inlined_call_operand.hbm [shape: f32[8,2,128], index: 0, kind: input, shape index: {}]
  %s1 = inlined_call_operand.hbm [shape: f32[8,2,128], index: 1, kind: input, shape index: {}]
  %s2 = inlined_call_operand.hbm [shape: f32[32,128], index: 2, kind: input, shape index: {}]
  %s3 = inlined_call_operand.hbm [shape: f32[32,128], index: 3, kind: input, shape index: {}]
  %s4 = inlined_call_operand.vmem [shape: f32[2,2,32], index: 4, kind: input, shape index: {}]
  %s5 = inlined_call_operand.vmem [shape: f32[2,2,32], index: 5, kind: input, shape index: {}]
  %s6 = inlined_call_operand.hbm [shape: f32[8,2,64], index: 6, kind: output, shape index: {0}]
  %s7 = inlined_call_operand.hbm [shape: f32[2,2,32], index: 7, kind: output, shape index: {1}]
  %s8 = inlined_call_operand.hbm [shape: f32[2,2,32], index: 8, kind: output, shape index: {2}]
  %9 = xla_tuple %s6, %s7, %s8
  %s10 = sld [smem:[#allocation0]]
  $region66: #{tpu_custom_call.1} parent=0
    _
  %s12 = ssub.s32 1, %s10
  %s13 = scalar_select 0, %s12, %s10
  $region1: #{tpu_custom_call.1} parent=0
    #allocation6 [shape = 'u8[8192]{0}', space=vmem, size = 0x2000, scoped, tag = 'input window, operand 0, single buffered']
    #allocation7 [shape = 's32[1]{0}', space=sflag, size = 0x4, scoped, tag = 'scoped memory for tpu_custom_call.1']
    #allocation8 [shape = 's32[1]{0}', space=sflag, size = 0x4, scoped, tag = 'scoped memory for tpu_custom_call.1']
    #allocation9 [shape = 'u8[8192]{0}', space=vmem, size = 0x2000, scoped, tag = 'input window, operand 1, single buffered']
    #allocation10 [shape = 's32[1]{0}', space=sflag, size = 0x4, scoped, tag = 'scoped memory for tpu_custom_call.1']
    #allocation11 [shape = 'u8[16384]{0}', space=vmem, size = 0x4000, scoped, tag = 'input window, operand 2, single buffered']
    #allocation12 [shape = 'u8[16384]{0}', space=vmem, size = 0x4000, scoped, tag = 'input window, operand 3, single buffered']
    #allocation13 [shape = 's32[1]{0}', space=sflag, size = 0x4, scoped, tag = 'scoped memory for tpu_custom_call.1']
    #allocation14 [shape = 'u8[8192]{0}', space=vmem, size = 0x2000, scoped, tag = 'output window, operand 0, single buffered']
    #allocation15 [shape = 'u8[2048]{0}', space=vmem, size = 0x800, scoped, tag = 'output window, operand 1, single buffered']
    #allocation16 [shape = 's32[1]{0}', space=sflag, size = 0x4, scoped, tag = 'scoped memory for tpu_custom_call.1']
    #allocation17 [shape = 'u8[2048]{0}', space=vmem, size = 0x800, scoped, tag = 'output window, operand 2, single buffered']
    %14 = vsyncpa [#allocation7], 0
    %15 = vsyncpa [#allocation10], 0
    %16 = vsyncpa [#allocation13], 0
    %17 = vsyncpa [#allocation8], 0
    %18 = vsyncpa [#allocation16], 0
    // Predicated region
    $region2: #{tpu_custom_call.1} parent=1 // pred_check
      _
    $region3: #{tpu_custom_call.1} parent=1 // pred_check_branch
      %20 = sbr.rel (0) target = $region5
    $region4: #{tpu_custom_call.1} parent=1 // pred_region
      %s22 = ssub.s32 256, 256
      %23 = vsyncadd [#allocation7], %s22
      %s24 = sshll.u32 [#allocation6], 4
      %s25 = int_to_ptr.vmem [resolvable:$true] %s24
      %30 = dma.hbm_to_vmem [thread:$0]  %s0, 256, %s25, [#allocation7], 32, 32, 2
    $region5: #{tpu_custom_call.1} parent=1 // pred_fallthru
      _
    // Predicated region
    $region6: #{tpu_custom_call.1} parent=1 // pred_check
      _
    $region7: #{tpu_custom_call.1} parent=1 // pred_check_branch
      %32 = sbr.rel (0) target = $region9
    $region8: #{tpu_custom_call.1} parent=1 // pred_region
      %s34 = ssub.s32 256, 256
      %35 = vsyncadd [#allocation10], %s34
      %s36 = sshll.u32 [#allocation9], 4
      %s37 = int_to_ptr.vmem [resolvable:$true] %s36
      %42 = dma.hbm_to_vmem [thread:$0]  %s1, 256, %s37, [#allocation10], 32, 32, 2
    $region9: #{tpu_custom_call.1} parent=1 // pred_fallthru
      _
    // Predicated region
    $region10: #{tpu_custom_call.1} parent=1 // pred_check
      _
    $region11: #{tpu_custom_call.1} parent=1 // pred_check_branch
      %44 = sbr.rel (0) target = $region13
    $region12: #{tpu_custom_call.1} parent=1 // pred_region
      %s46 = ssub.s32 512, 512
      %47 = vsyncadd [#allocation10], %s46
      %s48 = sshll.u32 [#allocation11], 4
      %s49 = int_to_ptr.vmem [resolvable:$true] %s48
      %54 = dma.hbm_to_vmem [thread:$0]  %s2, 512, %s49, [#allocation10], 128, 128, 8
    $region13: #{tpu_custom_call.1} parent=1 // pred_fallthru
      _
    // Predicated region
    $region14: #{tpu_custom_call.1} parent=1 // pred_check
      _
    $region15: #{tpu_custom_call.1} parent=1 // pred_check_branch
      %56 = sbr.rel (0) target = $region17
    $region16: #{tpu_custom_call.1} parent=1 // pred_region
      %s58 = ssub.s32 512, 512
      %59 = vsyncadd [#allocation13], %s58
      %s60 = sshll.u32 [#allocation12], 4
      %s61 = int_to_ptr.vmem [resolvable:$true] %s60
      %66 = dma.hbm_to_vmem [thread:$0]  %s3, 512, %s61, [#allocation13], 128, 128, 8
    $region17: #{tpu_custom_call.1} parent=1 // pred_fallthru
      _
    // Predicated region
    $region18: #{tpu_custom_call.1} parent=1 // pred_check
      _
    $region19: #{tpu_custom_call.1} parent=1 // pred_check_branch
      %68 = sbr.rel (0) target = $region21
    $region20: #{tpu_custom_call.1} parent=1 // pred_region
      _
    $region21: #{tpu_custom_call.1} parent=1 // pred_fallthru
      _
    // Predicated region
    $region22: #{tpu_custom_call.1} parent=1 // pred_check
      _
    $region23: #{tpu_custom_call.1} parent=1 // pred_check_branch
      %70 = sbr.rel (0) target = $region25
    $region24: #{tpu_custom_call.1} parent=1 // pred_region
      _
    $region25: #{tpu_custom_call.1} parent=1 // pred_fallthru
      _
    // Predicated region
    $region26: #{tpu_custom_call.1} parent=1 // pred_check
      _
    $region27: #{tpu_custom_call.1} parent=1 // pred_check_branch
      %72 = sbr.rel (0) target = $region29
    $region28: #{tpu_custom_call.1} parent=1 // pred_region
      %73 = dma.done [#allocation7], 256
    $region29: #{tpu_custom_call.1} parent=1 // pred_fallthru
      _
    // Predicated region
    $region30: #{tpu_custom_call.1} parent=1 // pred_check
      _
    $region31: #{tpu_custom_call.1} parent=1 // pred_check_branch
      %75 = sbr.rel (0) target = $region33
    $region32: #{tpu_custom_call.1} parent=1 // pred_region
      %76 = dma.done [#allocation10], 256
    $region33: #{tpu_custom_call.1} parent=1 // pred_fallthru
      _
    // Predicated region
    $region34: #{tpu_custom_call.1} parent=1 // pred_check
      _
    $region35: #{tpu_custom_call.1} parent=1 // pred_check_branch
      %78 = sbr.rel (0) target = $region37
    $region36: #{tpu_custom_call.1} parent=1 // pred_region
      %79 = dma.done [#allocation10], 512
    $region37: #{tpu_custom_call.1} parent=1 // pred_fallthru
      _
    // Predicated region
    $region38: #{tpu_custom_call.1} parent=1 // pred_check
      _
    $region39: #{tpu_custom_call.1} parent=1 // pred_check_branch
      %81 = sbr.rel (0) target = $region41
    $region40: #{tpu_custom_call.1} parent=1 // pred_region
      %82 = dma.done [#allocation13], 512
    $region41: #{tpu_custom_call.1} parent=1 // pred_fallthru
      _
    %v83 = vld [vmem:[%s4] sm:$0x3]
    %vm84 = vcmask 254976
    %85 = vst.msk [vmem:[#allocation2] sm:$0x3] %vm84, %v83
    %v86 = vld [vmem:[%s5] sm:$0x3]
    %87 = vst.msk [vmem:[#allocation3] sm:$0x3] %vm84, %v86
    %s88 = scalar_lea.vmem %s4, 2
    %v89 = vld [vmem:[%s88] sm:$0x3]
    %90 = vst.msk [vmem:[#allocation4] sm:$0x3] %vm84, %v89
    %s91 = scalar_lea.vmem %s5, 2
    %v92 = vld [vmem:[%s91] sm:$0x3]
    %93 = vst.msk [vmem:[#allocation5] sm:$0x3] %vm84, %v92
    %v94 = vld [vmem:[#allocation6] sm:$0x3]
    %v95 = vld [vmem:[#allocation2] sm:$0x3]
    %v96 = vld [vmem:[#allocation11] sm:$0xff]
    %v97 = vld [vmem:[#allocation11 + $0x8] sm:$0xff]
    %v98 = vld [vmem:[#allocation11 + $0x10] sm:$0xff]
    %v99 = vld [vmem:[#allocation11 + $0x18] sm:$0xff]
    %vm100 = vcmask 261120
    %v102 = vsel %vm100, %v95, 0
    %104 = vmatprep.subr.mxu0 0.0
    %105 = vmatpush1.msra.mxu0 %v96
    %106 = vmatprep.subr.mxu0 0.0
    %107 = vmatpush1.msra.mxu0 %v97
    %108 = vmatprep.subr.mxu0 0.0
    %109 = vmatpush1.msra.mxu0 %v98
    %110 = vmatprep.subr.mxu0 0.0
    %111 = vmatpush1.msra.mxu0 %v99
    %112 = vmatprep.subr.mxu0 0.0
    %113 = vmatpush1.msra.mxu0 0.0
    %114 = vmatprep.subr.mxu0 0.0
    %115 = vmatpush1.msra.mxu0 0.0
    %116 = vmatprep.subr.mxu0 0.0
    %117 = vmatpush1.msra.mxu0 0.0
    %118 = vmatprep.subr.mxu0 0.0
    %119 = vmatpush1.msra.mxu0 0.0
    %120 = vmatprep.subr.mxu0 0.0
    %121 = vmatpush1.msra.mxu0 0.0
    %122 = vmatprep.subr.mxu0 0.0
    %123 = vmatpush1.msra.mxu0 0.0
    %124 = vmatprep.subr.mxu0 0.0
    %125 = vmatpush1.msra.mxu0 0.0
    %126 = vmatprep.subr.mxu0 0.0
    %127 = vmatpush1.msra.mxu0 0.0
    %128 = vmatprep.subr.mxu0 0.0
    %129 = vmatpush1.msra.mxu0 0.0
    %130 = vmatprep.subr.mxu0 0.0
    %131 = vmatpush1.msra.mxu0 0.0
    %132 = vmatprep.subr.mxu0 0.0
    %133 = vmatpush1.msra.mxu0 0.0
    %134 = vmatprep.subr.mxu0 0.0
    %135 = vmatpush1.msra.mxu0 0.0
    %136 = vmatprep.subr.mxu0 0.0
    %137 = vmatpush1.msra.mxu0 0.0
    %138 = vmatprep.subr.mxu0 0.0
    %139 = vmatpush1.msra.mxu0 0.0
    %140 = vmatprep.subr.mxu0 0.0
    %141 = vmatpush1.msra.mxu0 0.0
    %142 = vmatprep.subr.mxu0 0.0
    %143 = vmatpush1.msra.mxu0 0.0
    %144 = vmatprep.subr.mxu0 0.0
    %145 = vmatpush1.msra.mxu0 0.0
    %146 = vmatprep.subr.mxu0 0.0
    %147 = vmatpush1.msra.mxu0 0.0
    %148 = vmatprep.subr.mxu0 0.0
    %149 = vmatpush1.msra.mxu0 0.0
    %150 = vmatprep.subr.mxu0 0.0
    %151 = vmatpush1.msra.mxu0 0.0
    %152 = vmatprep.subr.mxu0 0.0
    %153 = vmatpush1.msra.mxu0 0.0
    %154 = vmatprep.subr.mxu0 0.0
    %155 = vmatpush1.msra.mxu0 0.0
    %156 = vmatprep.subr.mxu0 0.0
    %157 = vmatpush1.msra.mxu0 0.0
    %158 = vmatprep.subr.mxu0 0.0
    %159 = vmatpush1.msra.mxu0 0.0
    %160 = vmatprep.subr.mxu0 0.0
    %161 = vmatpush1.msra.mxu0 0.0
    %162 = vmatprep.subr.mxu0 0.0
    %163 = vmatpush1.msra.mxu0 0.0
    %164 = vmatprep.subr.mxu0 0.0
    %165 = vmatpush1.msra.mxu0 0.0
    %166 = vmatprep.subr.mxu0 0.0
    %167 = vmatpush1.msra.mxu0 0.0
    %168 = vmatprep.mubr.f32.mxu0 0.0
    %169 = vmatmul.mubr.f32.gmra.mrb[0].mxu0 %v102
    %v170 = vpop.f32.mrb[0].mxu0
    %v171 = vadd.f32 0.0, %v170
    %v172 = vpop.f32.mrb[0].mxu0
    %173 = vdwg.mxu0
    %v174 = vadd.f32 %v94, %v171
    %v175 = vld [vmem:[#allocation3] sm:$0x3]
    %v176 = vxor.u32 %v174, 2147483648
    %v177 = vmul.f32 %v176, 1.442695
    %v178 = vpow.pop %v177
    %v179 = vadd.f32 %v178, 1.0
    %v180 = vrcp.pop %v179
    %v181 = vmul.f32 1.0, %v180
    %v182 = vtanh.pop %v174
    %184 = vrot.lane.b32.xlu0 %v175, 32
    %v185 = vpop.permute.xlu0 %184
    %v187 = vmul.f32 %v181, %v185
    %189 = vrot.lane.b32.xlu0 %v182, 64
    %v190 = vpop.permute.xlu0 %189
    %v192 = vmul.f32 %v181, %v190
    %194 = vrot.lane.b32.xlu0 %v192, 32
    %v195 = vpop.permute.xlu0 %194
    %v197 = vadd.f32 %v187, %v195
    %v198 = vtanh.pop %v197
    %200 = vrot.lane.b32.xlu0 %v198, 64
    %v201 = vpop.permute.xlu0 %200
    %v203 = vmul.f32 %v181, %v201
    %205 = vrot.lane.b32.xlu0 %v203, 32
    %v206 = vpop.permute.xlu0 %205
    %208 = vst.msk [vmem:[#allocation2] sm:$0x3] %vm84, %v206
    %210 = vrot.lane.b32.xlu0 %v197, 96
    %v211 = vpop.permute.xlu0 %210
    %213 = vst.msk [vmem:[#allocation3] sm:$0x3] %vm84, %v211
    %214 = vst.msk [vmem:[#allocation14] sm:$0x3] %vm84, %v206
    %s215 = scalar_lea.vmem [#allocation9], 14
    %v216 = vld [vmem:[%s215] sm:$0x3]
    %v217 = vld [vmem:[#allocation4] sm:$0x3]
    %v218 = vld [vmem:[#allocation12] sm:$0xff]
    %v219 = vld [vmem:[#allocation12 + $0x8] sm:$0xff]
    %v220 = vld [vmem:[#allocation12 + $0x10] sm:$0xff]
    %v221 = vld [vmem:[#allocation12 + $0x18] sm:$0xff]
    %v223 = vsel %vm100, %v217, 0
    %225 = vmatprep.subr.mxu0 0.0
    %226 = vmatpush1.msra.mxu0 %v218
    %227 = vmatprep.subr.mxu0 0.0
    %228 = vmatpush1.msra.mxu0 %v219
    %229 = vmatprep.subr.mxu0 0.0
    %230 = vmatpush1.msra.mxu0 %v220
    %231 = vmatprep.subr.mxu0 0.0
    %232 = vmatpush1.msra.mxu0 %v221
    %233 = vmatprep.subr.mxu0 0.0
    %234 = vmatpush1.msra.mxu0 0.0
    %235 = vmatprep.subr.mxu0 0.0
    %236 = vmatpush1.msra.mxu0 0.0
    %237 = vmatprep.subr.mxu0 0.0
    %238 = vmatpush1.msra.mxu0 0.0
    %239 = vmatprep.subr.mxu0 0.0
    %240 = vmatpush1.msra.mxu0 0.0
    %241 = vmatprep.subr.mxu0 0.0
    %242 = vmatpush1.msra.mxu0 0.0
    %243 = vmatprep.subr.mxu0 0.0
    %244 = vmatpush1.msra.mxu0 0.0
    %245 = vmatprep.subr.mxu0 0.0
    %246 = vmatpush1.msra.mxu0 0.0
    %247 = vmatprep.subr.mxu0 0.0
    %248 = vmatpush1.msra.mxu0 0.0
    %249 = vmatprep.subr.mxu0 0.0
    %250 = vmatpush1.msra.mxu0 0.0
    %251 = vmatprep.subr.mxu0 0.0
    %252 = vmatpush1.msra.mxu0 0.0
    %253 = vmatprep.subr.mxu0 0.0
    %254 = vmatpush1.msra.mxu0 0.0
    %255 = vmatprep.subr.mxu0 0.0
    %256 = vmatpush1.msra.mxu0 0.0
    %257 = vmatprep.subr.mxu0 0.0
    %258 = vmatpush1.msra.mxu0 0.0
    %259 = vmatprep.subr.mxu0 0.0
    %260 = vmatpush1.msra.mxu0 0.0
    %261 = vmatprep.subr.mxu0 0.0
    %262 = vmatpush1.msra.mxu0 0.0
    %263 = vmatprep.subr.mxu0 0.0
    %264 = vmatpush1.msra.mxu0 0.0
    %265 = vmatprep.subr.mxu0 0.0
    %266 = vmatpush1.msra.mxu0 0.0
    %267 = vmatprep.subr.mxu0 0.0
    %268 = vmatpush1.msra.mxu0 0.0
    %269 = vmatprep.subr.mxu0 0.0
    %270 = vmatpush1.msra.mxu0 0.0
    %271 = vmatprep.subr.mxu0 0.0
    %272 = vmatpush1.msra.mxu0 0.0
    %273 = vmatprep.subr.mxu0 0.0
    %274 = vmatpush1.msra.mxu0 0.0
    %275 = vmatprep.subr.mxu0 0.0
    %276 = vmatpush1.msra.mxu0 0.0
    %277 = vmatprep.subr.mxu0 0.0
    %278 = vmatpush1.msra.mxu0 0.0
    %279 = vmatprep.subr.mxu0 0.0
    %280 = vmatpush1.msra.mxu0 0.0
    %281 = vmatprep.subr.mxu0 0.0
    %282 = vmatpush1.msra.mxu0 0.0
    %283 = vmatprep.subr.mxu0 0.0
    %284 = vmatpush1.msra.mxu0 0.0
    %285 = vmatprep.subr.mxu0 0.0
    %286 = vmatpush1.msra.mxu0 0.0
    %287 = vmatprep.subr.mxu0 0.0
    %288 = vmatpush1.msra.mxu0 0.0
    %289 = vmatprep.mubr.f32.mxu0 0.0
    %290 = vmatmul.mubr.f32.gmra.mrb[0].mxu0 %v223
    %v291 = vpop.f32.mrb[0].mxu0
    %v292 = vadd.f32 0.0, %v291
    %v293 = vpop.f32.mrb[0].mxu0
    %294 = vdwg.mxu0
    %v295 = vadd.f32 %v216, %v292
    %v296 = vld [vmem:[#allocation5] sm:$0x3]
    %v297 = vxor.u32 %v295, 2147483648
    %v298 = vmul.f32 %v297, 1.442695
    %v299 = vpow.pop %v298
    %v300 = vadd.f32 %v299, 1.0
    %v301 = vrcp.pop %v300
    %v302 = vmul.f32 1.0, %v301
    %v303 = vtanh.pop %v295
    %305 = vrot.lane.b32.xlu0 %v296, 32
    %v306 = vpop.permute.xlu0 %305
    %v308 = vmul.f32 %v302, %v306
    %310 = vrot.lane.b32.xlu0 %v303, 64
    %v311 = vpop.permute.xlu0 %310
    %v313 = vmul.f32 %v302, %v311
    %315 = vrot.lane.b32.xlu0 %v313, 32
    %v316 = vpop.permute.xlu0 %315
    %v318 = vadd.f32 %v308, %v316
    %v319 = vtanh.pop %v318
    %321 = vrot.lane.b32.xlu0 %v319, 64
    %v322 = vpop.permute.xlu0 %321
    %v324 = vmul.f32 %v302, %v322
    %326 = vrot.lane.b32.xlu0 %v324, 32
    %v327 = vpop.permute.xlu0 %326
    %329 = vst.msk [vmem:[#allocation4] sm:$0x3] %vm84, %v327
    %331 = vrot.lane.b32.xlu0 %v318, 96
    %v332 = vpop.permute.xlu0 %331
    %334 = vst.msk [vmem:[#allocation5] sm:$0x3] %vm84, %v332
    %335 = vrot.lane.b32.xlu0 %v324, 64
    %v336 = vpop.permute.xlu0 %335
    %s338 = scalar_lea.vmem [#allocation14], 14
    %vm339 = vcmask 517376
    %340 = vst.msk [vmem:[%s338] sm:$0x3] %vm339, %v336
    %s341 = scalar_lea.vmem [#allocation6], 2
    %v342 = vld [vmem:[%s341] sm:$0x3]
    %v343 = vld [vmem:[#allocation2] sm:$0x3]
    %v344 = vld [vmem:[#allocation11] sm:$0xff]
    %v345 = vld [vmem:[#allocation11 + $0x8] sm:$0xff]
    %v346 = vld [vmem:[#allocation11 + $0x10] sm:$0xff]
    %v347 = vld [vmem:[#allocation11 + $0x18] sm:$0xff]
    %v349 = vsel %vm100, %v343, 0
    %351 = vmatprep.subr.mxu0 0.0
    %352 = vmatpush1.msra.mxu0 %v344
    %353 = vmatprep.subr.mxu0 0.0
    %354 = vmatpush1.msra.mxu0 %v345
    %355 = vmatprep.subr.mxu0 0.0
    %356 = vmatpush1.msra.mxu0 %v346
    %357 = vmatprep.subr.mxu0 0.0
    %358 = vmatpush1.msra.mxu0 %v347
    %359 = vmatprep.subr.mxu0 0.0
    %360 = vmatpush1.msra.mxu0 0.0
    %361 = vmatprep.subr.mxu0 0.0
    %362 = vmatpush1.msra.mxu0 0.0
    %363 = vmatprep.subr.mxu0 0.0
    %364 = vmatpush1.msra.mxu0 0.0
    %365 = vmatprep.subr.mxu0 0.0
    %366 = vmatpush1.msra.mxu0 0.0
    %367 = vmatprep.subr.mxu0 0.0
    %368 = vmatpush1.msra.mxu0 0.0
    %369 = vmatprep.subr.mxu0 0.0
    %370 = vmatpush1.msra.mxu0 0.0
    %371 = vmatprep.subr.mxu0 0.0
    %372 = vmatpush1.msra.mxu0 0.0
    %373 = vmatprep.subr.mxu0 0.0
    %374 = vmatpush1.msra.mxu0 0.0
    %375 = vmatprep.subr.mxu0 0.0
    %376 = vmatpush1.msra.mxu0 0.0
    %377 = vmatprep.subr.mxu0 0.0
    %378 = vmatpush1.msra.mxu0 0.0
    %379 = vmatprep.subr.mxu0 0.0
    %380 = vmatpush1.msra.mxu0 0.0
    %381 = vmatprep.subr.mxu0 0.0
    %382 = vmatpush1.msra.mxu0 0.0
    %383 = vmatprep.subr.mxu0 0.0
    %384 = vmatpush1.msra.mxu0 0.0
    %385 = vmatprep.subr.mxu0 0.0
    %386 = vmatpush1.msra.mxu0 0.0
    %387 = vmatprep.subr.mxu0 0.0
    %388 = vmatpush1.msra.mxu0 0.0
    %389 = vmatprep.subr.mxu0 0.0
    %390 = vmatpush1.msra.mxu0 0.0
    %391 = vmatprep.subr.mxu0 0.0
    %392 = vmatpush1.msra.mxu0 0.0
    %393 = vmatprep.subr.mxu0 0.0
    %394 = vmatpush1.msra.mxu0 0.0
    %395 = vmatprep.subr.mxu0 0.0
    %396 = vmatpush1.msra.mxu0 0.0
    %397 = vmatprep.subr.mxu0 0.0
    %398 = vmatpush1.msra.mxu0 0.0
    %399 = vmatprep.subr.mxu0 0.0
    %400 = vmatpush1.msra.mxu0 0.0
    %401 = vmatprep.subr.mxu0 0.0
    %402 = vmatpush1.msra.mxu0 0.0
    %403 = vmatprep.subr.mxu0 0.0
    %404 = vmatpush1.msra.mxu0 0.0
    %405 = vmatprep.subr.mxu0 0.0
    %406 = vmatpush1.msra.mxu0 0.0
    %407 = vmatprep.subr.mxu0 0.0
    %408 = vmatpush1.msra.mxu0 0.0
    %409 = vmatprep.subr.mxu0 0.0
    %410 = vmatpush1.msra.mxu0 0.0
    %411 = vmatprep.subr.mxu0 0.0
    %412 = vmatpush1.msra.mxu0 0.0
    %413 = vmatprep.subr.mxu0 0.0
    %414 = vmatpush1.msra.mxu0 0.0
    %415 = vmatprep.mubr.f32.mxu0 0.0
    %416 = vmatmul.mubr.f32.gmra.mrb[0].mxu0 %v349
    %v417 = vpop.f32.mrb[0].mxu0
    %v418 = vadd.f32 0.0, %v417
    %v419 = vpop.f32.mrb[0].mxu0
    %420 = vdwg.mxu0
    %v421 = vadd.f32 %v342, %v418
    %v422 = vld [vmem:[#allocation3] sm:$0x3]
    %v423 = vxor.u32 %v421, 2147483648
    %v424 = vmul.f32 %v423, 1.442695
    %v425 = vpow.pop %v424
    %v426 = vadd.f32 %v425, 1.0
    %v427 = vrcp.pop %v426
    %v428 = vmul.f32 1.0, %v427
    %v429 = vtanh.pop %v421
    %431 = vrot.lane.b32.xlu0 %v422, 32
    %v432 = vpop.permute.xlu0 %431
    %v434 = vmul.f32 %v428, %v432
    %436 = vrot.lane.b32.xlu0 %v429, 64
    %v437 = vpop.permute.xlu0 %436
    %v439 = vmul.f32 %v428, %v437
    %441 = vrot.lane.b32.xlu0 %v439, 32
    %v442 = vpop.permute.xlu0 %441
    %v444 = vadd.f32 %v434, %v442
    %v445 = vtanh.pop %v444
    %447 = vrot.lane.b32.xlu0 %v445, 64
    %v448 = vpop.permute.xlu0 %447
    %v450 = vmul.f32 %v428, %v448
    %452 = vrot.lane.b32.xlu0 %v450, 32
    %v453 = vpop.permute.xlu0 %452
    %455 = vst.msk [vmem:[#allocation2] sm:$0x3] %vm84, %v453
    %457 = vrot.lane.b32.xlu0 %v444, 96
    %v458 = vpop.permute.xlu0 %457
    %460 = vst.msk [vmem:[#allocation3] sm:$0x3] %vm84, %v458
    %s461 = scalar_lea.vmem [#allocation14], 2
    %462 = vst.msk [vmem:[%s461] sm:$0x3] %vm84, %v453
    %s463 = scalar_lea.vmem [#allocation9], 12
    %v464 = vld [vmem:[%s463] sm:$0x3]
    %v465 = vld [vmem:[#allocation4] sm:$0x3]
    %v466 = vld [vmem:[#allocation12] sm:$0xff]
    %v467 = vld [vmem:[#allocation12 + $0x8] sm:$0xff]
    %v468 = vld [vmem:[#allocation12 + $0x10] sm:$0xff]
    %v469 = vld [vmem:[#allocation12 + $0x18] sm:$0xff]
    %v471 = vsel %vm100, %v465, 0
    %473 = vmatprep.subr.mxu0 0.0
    %474 = vmatpush1.msra.mxu0 %v466
    %475 = vmatprep.subr.mxu0 0.0
    %476 = vmatpush1.msra.mxu0 %v467
    %477 = vmatprep.subr.mxu0 0.0
    %478 = vmatpush1.msra.mxu0 %v468
    %479 = vmatprep.subr.mxu0 0.0
    %480 = vmatpush1.msra.mxu0 %v469
    %481 = vmatprep.subr.mxu0 0.0
    %482 = vmatpush1.msra.mxu0 0.0
    %483 = vmatprep.subr.mxu0 0.0
    %484 = vmatpush1.msra.mxu0 0.0
    %485 = vmatprep.subr.mxu0 0.0
    %486 = vmatpush1.msra.mxu0 0.0
    %487 = vmatprep.subr.mxu0 0.0
    %488 = vmatpush1.msra.mxu0 0.0
    %489 = vmatprep.subr.mxu0 0.0
    %490 = vmatpush1.msra.mxu0 0.0
    %491 = vmatprep.subr.mxu0 0.0
    %492 = vmatpush1.msra.mxu0 0.0
    %493 = vmatprep.subr.mxu0 0.0
    %494 = vmatpush1.msra.mxu0 0.0
    %495 = vmatprep.subr.mxu0 0.0
    %496 = vmatpush1.msra.mxu0 0.0
    %497 = vmatprep.subr.mxu0 0.0
    %498 = vmatpush1.msra.mxu0 0.0
    %499 = vmatprep.subr.mxu0 0.0
    %500 = vmatpush1.msra.mxu0 0.0
    %501 = vmatprep.subr.mxu0 0.0
    %502 = vmatpush1.msra.mxu0 0.0
    %503 = vmatprep.subr.mxu0 0.0
    %504 = vmatpush1.msra.mxu0 0.0
    %505 = vmatprep.subr.mxu0 0.0
    %506 = vmatpush1.msra.mxu0 0.0
    %507 = vmatprep.subr.mxu0 0.0
    %508 = vmatpush1.msra.mxu0 0.0
    %509 = vmatprep.subr.mxu0 0.0
    %510 = vmatpush1.msra.mxu0 0.0
    %511 = vmatprep.subr.mxu0 0.0
    %512 = vmatpush1.msra.mxu0 0.0
    %513 = vmatprep.subr.mxu0 0.0
    %514 = vmatpush1.msra.mxu0 0.0
    %515 = vmatprep.subr.mxu0 0.0
    %516 = vmatpush1.msra.mxu0 0.0
    %517 = vmatprep.subr.mxu0 0.0
    %518 = vmatpush1.msra.mxu0 0.0
    %519 = vmatprep.subr.mxu0 0.0
    %520 = vmatpush1.msra.mxu0 0.0
    %521 = vmatprep.subr.mxu0 0.0
    %522 = vmatpush1.msra.mxu0 0.0
    %523 = vmatprep.subr.mxu0 0.0
    %524 = vmatpush1.msra.mxu0 0.0
    %525 = vmatprep.subr.mxu0 0.0
    %526 = vmatpush1.msra.mxu0 0.0
    %527 = vmatprep.subr.mxu0 0.0
    %528 = vmatpush1.msra.mxu0 0.0
    %529 = vmatprep.subr.mxu0 0.0
    %530 = vmatpush1.msra.mxu0 0.0
    %531 = vmatprep.subr.mxu0 0.0
    %532 = vmatpush1.msra.mxu0 0.0
    %533 = vmatprep.subr.mxu0 0.0
    %534 = vmatpush1.msra.mxu0 0.0
    %535 = vmatprep.subr.mxu0 0.0
    %536 = vmatpush1.msra.mxu0 0.0
    %537 = vmatprep.mubr.f32.mxu0 0.0
    %538 = vmatmul.mubr.f32.gmra.mrb[0].mxu0 %v471
    %v539 = vpop.f32.mrb[0].mxu0
    %v540 = vadd.f32 0.0, %v539
    %v541 = vpop.f32.mrb[0].mxu0
    %542 = vdwg.mxu0
    %v543 = vadd.f32 %v464, %v540
    %v544 = vld [vmem:[#allocation5] sm:$0x3]
    %v545 = vxor.u32 %v543, 2147483648
    %v546 = vmul.f32 %v545, 1.442695
    %v547 = vpow.pop %v546
    %v548 = vadd.f32 %v547, 1.0
    %v549 = vrcp.pop %v548
    %v550 = vmul.f32 1.0, %v549
    %v551 = vtanh.pop %v543
    %553 = vrot.lane.b32.xlu0 %v544, 32
    %v554 = vpop.permute.xlu0 %553
    %v556 = vmul.f32 %v550, %v554
    %558 = vrot.lane.b32.xlu0 %v551, 64
    %v559 = vpop.permute.xlu0 %558
    %v561 = vmul.f32 %v550, %v559
    %563 = vrot.lane.b32.xlu0 %v561, 32
    %v564 = vpop.permute.xlu0 %563
    %v566 = vadd.f32 %v556, %v564
    %v567 = vtanh.pop %v566
    %569 = vrot.lane.b32.xlu0 %v567, 64
    %v570 = vpop.permute.xlu0 %569
    %v572 = vmul.f32 %v550, %v570
    %574 = vrot.lane.b32.xlu0 %v572, 32
    %v575 = vpop.permute.xlu0 %574
    %577 = vst.msk [vmem:[#allocation4] sm:$0x3] %vm84, %v575
    %579 = vrot.lane.b32.xlu0 %v566, 96
    %v580 = vpop.permute.xlu0 %579
    %582 = vst.msk [vmem:[#allocation5] sm:$0x3] %vm84, %v580
    %583 = vrot.lane.b32.xlu0 %v572, 64
    %v584 = vpop.permute.xlu0 %583
    %s586 = scalar_lea.vmem [#allocation14], 12
    %587 = vst.msk [vmem:[%s586] sm:$0x3] %vm339, %v584
    %s588 = scalar_lea.vmem [#allocation6], 4
    %v589 = vld [vmem:[%s588] sm:$0x3]
    %v590 = vld [vmem:[#allocation2] sm:$0x3]
    %v591 = vld [vmem:[#allocation11] sm:$0xff]
    %v592 = vld [vmem:[#allocation11 + $0x8] sm:$0xff]
    %v593 = vld [vmem:[#allocation11 + $0x10] sm:$0xff]
    %v594 = vld [vmem:[#allocation11 + $0x18] sm:$0xff]
    %v596 = vsel %vm100, %v590, 0
    %598 = vmatprep.subr.mxu0 0.0
    %599 = vmatpush1.msra.mxu0 %v591
    %600 = vmatprep.subr.mxu0 0.0
    %601 = vmatpush1.msra.mxu0 %v592
    %602 = vmatprep.subr.mxu0 0.0
    %603 = vmatpush1.msra.mxu0 %v593
    %604 = vmatprep.subr.mxu0 0.0
    %605 = vmatpush1.msra.mxu0 %v594
    %606 = vmatprep.subr.mxu0 0.0
    %607 = vmatpush1.msra.mxu0 0.0
    %608 = vmatprep.subr.mxu0 0.0
    %609 = vmatpush1.msra.mxu0 0.0
    %610 = vmatprep.subr.mxu0 0.0
    %611 = vmatpush1.msra.mxu0 0.0
    %612 = vmatprep.subr.mxu0 0.0
    %613 = vmatpush1.msra.mxu0 0.0
    %614 = vmatprep.subr.mxu0 0.0
    %615 = vmatpush1.msra.mxu0 0.0
    %616 = vmatprep.subr.mxu0 0.0
    %617 = vmatpush1.msra.mxu0 0.0
    %618 = vmatprep.subr.mxu0 0.0
    %619 = vmatpush1.msra.mxu0 0.0
    %620 = vmatprep.subr.mxu0 0.0
    %621 = vmatpush1.msra.mxu0 0.0
    %622 = vmatprep.subr.mxu0 0.0
    %623 = vmatpush1.msra.mxu0 0.0
    %624 = vmatprep.subr.mxu0 0.0
    %625 = vmatpush1.msra.mxu0 0.0
    %626 = vmatprep.subr.mxu0 0.0
    %627 = vmatpush1.msra.mxu0 0.0
    %628 = vmatprep.subr.mxu0 0.0
    %629 = vmatpush1.msra.mxu0 0.0
    %630 = vmatprep.subr.mxu0 0.0
    %631 = vmatpush1.msra.mxu0 0.0
    %632 = vmatprep.subr.mxu0 0.0
    %633 = vmatpush1.msra.mxu0 0.0
    %634 = vmatprep.subr.mxu0 0.0
    %635 = vmatpush1.msra.mxu0 0.0
    %636 = vmatprep.subr.mxu0 0.0
    %637 = vmatpush1.msra.mxu0 0.0
    %638 = vmatprep.subr.mxu0 0.0
    %639 = vmatpush1.msra.mxu0 0.0
    %640 = vmatprep.subr.mxu0 0.0
    %641 = vmatpush1.msra.mxu0 0.0
    %642 = vmatprep.subr.mxu0 0.0
    %643 = vmatpush1.msra.mxu0 0.0
    %644 = vmatprep.subr.mxu0 0.0
    %645 = vmatpush1.msra.mxu0 0.0
    %646 = vmatprep.subr.mxu0 0.0
    %647 = vmatpush1.msra.mxu0 0.0
    %648 = vmatprep.subr.mxu0 0.0
    %649 = vmatpush1.msra.mxu0 0.0
    %650 = vmatprep.subr.mxu0 0.0
    %651 = vmatpush1.msra.mxu0 0.0
    %652 = vmatprep.subr.mxu0 0.0
    %653 = vmatpush1.msra.mxu0 0.0
    %654 = vmatprep.subr.mxu0 0.0
    %655 = vmatpush1.msra.mxu0 0.0
    %656 = vmatprep.subr.mxu0 0.0
    %657 = vmatpush1.msra.mxu0 0.0
    %658 = vmatprep.subr.mxu0 0.0
    %659 = vmatpush1.msra.mxu0 0.0
    %660 = vmatprep.subr.mxu0 0.0
    %661 = vmatpush1.msra.mxu0 0.0
    %662 = vmatprep.mubr.f32.mxu0 0.0
    %663 = vmatmul.mubr.f32.gmra.mrb[0].mxu0 %v596
    %v664 = vpop.f32.mrb[0].mxu0
    %v665 = vadd.f32 0.0, %v664
    %v666 = vpop.f32.mrb[0].mxu0
    %667 = vdwg.mxu0
    %v668 = vadd.f32 %v589, %v665
    %v669 = vld [vmem:[#allocation3] sm:$0x3]
    %v670 = vxor.u32 %v668, 2147483648
    %v671 = vmul.f32 %v670, 1.442695
    %v672 = vpow.pop %v671
    %v673 = vadd.f32 %v672, 1.0
    %v674 = vrcp.pop %v673
    %v675 = vmul.f32 1.0, %v674
    %v676 = vtanh.pop %v668
    %678 = vrot.lane.b32.xlu0 %v669, 32
    %v679 = vpop.permute.xlu0 %678
    %v681 = vmul.f32 %v675, %v679
    %683 = vrot.lane.b32.xlu0 %v676, 64
    %v684 = vpop.permute.xlu0 %683
    %v686 = vmul.f32 %v675, %v684
    %688 = vrot.lane.b32.xlu0 %v686, 32
    %v689 = vpop.permute.xlu0 %688
    %v691 = vadd.f32 %v681, %v689
    %v692 = vtanh.pop %v691
    %694 = vrot.lane.b32.xlu0 %v692, 64
    %v695 = vpop.permute.xlu0 %694
    %v697 = vmul.f32 %v675, %v695
    %699 = vrot.lane.b32.xlu0 %v697, 32
    %v700 = vpop.permute.xlu0 %699
    %702 = vst.msk [vmem:[#allocation2] sm:$0x3] %vm84, %v700
    %704 = vrot.lane.b32.xlu0 %v691, 96
    %v705 = vpop.permute.xlu0 %704
    %707 = vst.msk [vmem:[#allocation3] sm:$0x3] %vm84, %v705
    %s708 = scalar_lea.vmem [#allocation14], 4
    %709 = vst.msk [vmem:[%s708] sm:$0x3] %vm84, %v700
    %s710 = scalar_lea.vmem [#allocation9], 10
    %v711 = vld [vmem:[%s710] sm:$0x3]
    %v712 = vld [vmem:[#allocation4] sm:$0x3]
    %v713 = vld [vmem:[#allocation12] sm:$0xff]
    %v714 = vld [vmem:[#allocation12 + $0x8] sm:$0xff]
    %v715 = vld [vmem:[#allocation12 + $0x10] sm:$0xff]
    %v716 = vld [vmem:[#allocation12 + $0x18] sm:$0xff]
    %v718 = vsel %vm100, %v712, 0
    %720 = vmatprep.subr.mxu0 0.0
    %721 = vmatpush1.msra.mxu0 %v713
    %722 = vmatprep.subr.mxu0 0.0
    %723 = vmatpush1.msra.mxu0 %v714
    %724 = vmatprep.subr.mxu0 0.0
    %725 = vmatpush1.msra.mxu0 %v715
    %726 = vmatprep.subr.mxu0 0.0
    %727 = vmatpush1.msra.mxu0 %v716
    %728 = vmatprep.subr.mxu0 0.0
    %729 = vmatpush1.msra.mxu0 0.0
    %730 = vmatprep.subr.mxu0 0.0
    %731 = vmatpush1.msra.mxu0 0.0
    %732 = vmatprep.subr.mxu0 0.0
    %733 = vmatpush1.msra.mxu0 0.0
    %734 = vmatprep.subr.mxu0 0.0
    %735 = vmatpush1.msra.mxu0 0.0
    %736 = vmatprep.subr.mxu0 0.0
    %737 = vmatpush1.msra.mxu0 0.0
    %738 = vmatprep.subr.mxu0 0.0
    %739 = vmatpush1.msra.mxu0 0.0
    %740 = vmatprep.subr.mxu0 0.0
    %741 = vmatpush1.msra.mxu0 0.0
    %742 = vmatprep.subr.mxu0 0.0
    %743 = vmatpush1.msra.mxu0 0.0
    %744 = vmatprep.subr.mxu0 0.0
    %745 = vmatpush1.msra.mxu0 0.0
    %746 = vmatprep.subr.mxu0 0.0
    %747 = vmatpush1.msra.mxu0 0.0
    %748 = vmatprep.subr.mxu0 0.0
    %749 = vmatpush1.msra.mxu0 0.0
    %750 = vmatprep.subr.mxu0 0.0
    %751 = vmatpush1.msra.mxu0 0.0
    %752 = vmatprep.subr.mxu0 0.0
    %753 = vmatpush1.msra.mxu0 0.0
    %754 = vmatprep.subr.mxu0 0.0
    %755 = vmatpush1.msra.mxu0 0.0
    %756 = vmatprep.subr.mxu0 0.0
    %757 = vmatpush1.msra.mxu0 0.0
    %758 = vmatprep.subr.mxu0 0.0
    %759 = vmatpush1.msra.mxu0 0.0
    %760 = vmatprep.subr.mxu0 0.0
    %761 = vmatpush1.msra.mxu0 0.0
    %762 = vmatprep.subr.mxu0 0.0
    %763 = vmatpush1.msra.mxu0 0.0
    %764 = vmatprep.subr.mxu0 0.0
    %765 = vmatpush1.msra.mxu0 0.0
    %766 = vmatprep.subr.mxu0 0.0
    %767 = vmatpush1.msra.mxu0 0.0
    %768 = vmatprep.subr.mxu0 0.0
    %769 = vmatpush1.msra.mxu0 0.0
    %770 = vmatprep.subr.mxu0 0.0
    %771 = vmatpush1.msra.mxu0 0.0
    %772 = vmatprep.subr.mxu0 0.0
    %773 = vmatpush1.msra.mxu0 0.0
    %774 = vmatprep.subr.mxu0 0.0
    %775 = vmatpush1.msra.mxu0 0.0
    %776 = vmatprep.subr.mxu0 0.0
    %777 = vmatpush1.msra.mxu0 0.0
    %778 = vmatprep.subr.mxu0 0.0
    %779 = vmatpush1.msra.mxu0 0.0
    %780 = vmatprep.subr.mxu0 0.0
    %781 = vmatpush1.msra.mxu0 0.0
    %782 = vmatprep.subr.mxu0 0.0
    %783 = vmatpush1.msra.mxu0 0.0
    %784 = vmatprep.mubr.f32.mxu0 0.0
    %785 = vmatmul.mubr.f32.gmra.mrb[0].mxu0 %v718
    %v786 = vpop.f32.mrb[0].mxu0
    %v787 = vadd.f32 0.0, %v786
    %v788 = vpop.f32.mrb[0].mxu0
    %789 = vdwg.mxu0
    %v790 = vadd.f32 %v711, %v787
    %v791 = vld [vmem:[#allocation5] sm:$0x3]
    %v792 = vxor.u32 %v790, 2147483648
    %v793 = vmul.f32 %v792, 1.442695
    %v794 = vpow.pop %v793
    %v795 = vadd.f32 %v794, 1.0
    %v796 = vrcp.pop %v795
    %v797 = vmul.f32 1.0, %v796
    %v798 = vtanh.pop %v790
    %800 = vrot.lane.b32.xlu0 %v791, 32
    %v801 = vpop.permute.xlu0 %800
    %v803 = vmul.f32 %v797, %v801
    %805 = vrot.lane.b32.xlu0 %v798, 64
    %v806 = vpop.permute.xlu0 %805
    %v808 = vmul.f32 %v797, %v806
    %810 = vrot.lane.b32.xlu0 %v808, 32
    %v811 = vpop.permute.xlu0 %810
    %v813 = vadd.f32 %v803, %v811
    %v814 = vtanh.pop %v813
    %816 = vrot.lane.b32.xlu0 %v814, 64
    %v817 = vpop.permute.xlu0 %816
    %v819 = vmul.f32 %v797, %v817
    %821 = vrot.lane.b32.xlu0 %v819, 32
    %v822 = vpop.permute.xlu0 %821
    %824 = vst.msk [vmem:[#allocation4] sm:$0x3] %vm84, %v822
    %826 = vrot.lane.b32.xlu0 %v813, 96
    %v827 = vpop.permute.xlu0 %826
    %829 = vst.msk [vmem:[#allocation5] sm:$0x3] %vm84, %v827
    %830 = vrot.lane.b32.xlu0 %v819, 64
    %v831 = vpop.permute.xlu0 %830
    %s833 = scalar_lea.vmem [#allocation14], 10
    %834 = vst.msk [vmem:[%s833] sm:$0x3] %vm339, %v831
    %s835 = scalar_lea.vmem [#allocation6], 6
    %v836 = vld [vmem:[%s835] sm:$0x3]
    %v837 = vld [vmem:[#allocation2] sm:$0x3]
    %v838 = vld [vmem:[#allocation11] sm:$0xff]
    %v839 = vld [vmem:[#allocation11 + $0x8] sm:$0xff]
    %v840 = vld [vmem:[#allocation11 + $0x10] sm:$0xff]
    %v841 = vld [vmem:[#allocation11 + $0x18] sm:$0xff]
    %v843 = vsel %vm100, %v837, 0
    %845 = vmatprep.subr.mxu0 0.0
    %846 = vmatpush1.msra.mxu0 %v838
    %847 = vmatprep.subr.mxu0 0.0
    %848 = vmatpush1.msra.mxu0 %v839
    %849 = vmatprep.subr.mxu0 0.0
    %850 = vmatpush1.msra.mxu0 %v840
    %851 = vmatprep.subr.mxu0 0.0
    %852 = vmatpush1.msra.mxu0 %v841
    %853 = vmatprep.subr.mxu0 0.0
    %854 = vmatpush1.msra.mxu0 0.0
    %855 = vmatprep.subr.mxu0 0.0
    %856 = vmatpush1.msra.mxu0 0.0
    %857 = vmatprep.subr.mxu0 0.0
    %858 = vmatpush1.msra.mxu0 0.0
    %859 = vmatprep.subr.mxu0 0.0
    %860 = vmatpush1.msra.mxu0 0.0
    %861 = vmatprep.subr.mxu0 0.0
    %862 = vmatpush1.msra.mxu0 0.0
    %863 = vmatprep.subr.mxu0 0.0
    %864 = vmatpush1.msra.mxu0 0.0
    %865 = vmatprep.subr.mxu0 0.0
    %866 = vmatpush1.msra.mxu0 0.0
    %867 = vmatprep.subr.mxu0 0.0
    %868 = vmatpush1.msra.mxu0 0.0
    %869 = vmatprep.subr.mxu0 0.0
    %870 = vmatpush1.msra.mxu0 0.0
    %871 = vmatprep.subr.mxu0 0.0
    %872 = vmatpush1.msra.mxu0 0.0
    %873 = vmatprep.subr.mxu0 0.0
    %874 = vmatpush1.msra.mxu0 0.0
    %875 = vmatprep.subr.mxu0 0.0
    %876 = vmatpush1.msra.mxu0 0.0
    %877 = vmatprep.subr.mxu0 0.0
    %878 = vmatpush1.msra.mxu0 0.0
    %879 = vmatprep.subr.mxu0 0.0
    %880 = vmatpush1.msra.mxu0 0.0
    %881 = vmatprep.subr.mxu0 0.0
    %882 = vmatpush1.msra.mxu0 0.0
    %883 = vmatprep.subr.mxu0 0.0
    %884 = vmatpush1.msra.mxu0 0.0
    %885 = vmatprep.subr.mxu0 0.0
    %886 = vmatpush1.msra.mxu0 0.0
    %887 = vmatprep.subr.mxu0 0.0
    %888 = vmatpush1.msra.mxu0 0.0
    %889 = vmatprep.subr.mxu0 0.0
    %890 = vmatpush1.msra.mxu0 0.0
    %891 = vmatprep.subr.mxu0 0.0
    %892 = vmatpush1.msra.mxu0 0.0
    %893 = vmatprep.subr.mxu0 0.0
    %894 = vmatpush1.msra.mxu0 0.0
    %895 = vmatprep.subr.mxu0 0.0
    %896 = vmatpush1.msra.mxu0 0.0
    %897 = vmatprep.subr.mxu0 0.0
    %898 = vmatpush1.msra.mxu0 0.0
    %899 = vmatprep.subr.mxu0 0.0
    %900 = vmatpush1.msra.mxu0 0.0
    %901 = vmatprep.subr.mxu0 0.0
    %902 = vmatpush1.msra.mxu0 0.0
    %903 = vmatprep.subr.mxu0 0.0
    %904 = vmatpush1.msra.mxu0 0.0
    %905 = vmatprep.subr.mxu0 0.0
    %906 = vmatpush1.msra.mxu0 0.0
    %907 = vmatprep.subr.mxu0 0.0
    %908 = vmatpush1.msra.mxu0 0.0
    %909 = vmatprep.mubr.f32.mxu0 0.0
    %910 = vmatmul.mubr.f32.gmra.mrb[0].mxu0 %v843
    %v911 = vpop.f32.mrb[0].mxu0
    %v912 = vadd.f32 0.0, %v911
    %v913 = vpop.f32.mrb[0].mxu0
    %914 = vdwg.mxu0
    %v915 = vadd.f32 %v836, %v912
    %v916 = vld [vmem:[#allocation3] sm:$0x3]
    %v917 = vxor.u32 %v915, 2147483648
    %v918 = vmul.f32 %v917, 1.442695
    %v919 = vpow.pop %v918
    %v920 = vadd.f32 %v919, 1.0
    %v921 = vrcp.pop %v920
    %v922 = vmul.f32 1.0, %v921
    %v923 = vtanh.pop %v915
    %925 = vrot.lane.b32.xlu0 %v916, 32
    %v926 = vpop.permute.xlu0 %925
    %v928 = vmul.f32 %v922, %v926
    %930 = vrot.lane.b32.xlu0 %v923, 64
    %v931 = vpop.permute.xlu0 %930
    %v933 = vmul.f32 %v922, %v931
    %935 = vrot.lane.b32.xlu0 %v933, 32
    %v936 = vpop.permute.xlu0 %935
    %v938 = vadd.f32 %v928, %v936
    %v939 = vtanh.pop %v938
    %941 = vrot.lane.b32.xlu0 %v939, 64
    %v942 = vpop.permute.xlu0 %941
    %v944 = vmul.f32 %v922, %v942
    %946 = vrot.lane.b32.xlu0 %v944, 32
    %v947 = vpop.permute.xlu0 %946
    %949 = vst.msk [vmem:[#allocation2] sm:$0x3] %vm84, %v947
    %951 = vrot.lane.b32.xlu0 %v938, 96
    %v952 = vpop.permute.xlu0 %951
    %954 = vst.msk [vmem:[#allocation3] sm:$0x3] %vm84, %v952
    %s955 = scalar_lea.vmem [#allocation14], 6
    %956 = vst.msk [vmem:[%s955] sm:$0x3] %vm84, %v947
    %s957 = scalar_lea.vmem [#allocation9], 8
    %v958 = vld [vmem:[%s957] sm:$0x3]
    %v959 = vld [vmem:[#allocation4] sm:$0x3]
    %v960 = vld [vmem:[#allocation12] sm:$0xff]
    %v961 = vld [vmem:[#allocation12 + $0x8] sm:$0xff]
    %v962 = vld [vmem:[#allocation12 + $0x10] sm:$0xff]
    %v963 = vld [vmem:[#allocation12 + $0x18] sm:$0xff]
    %v965 = vsel %vm100, %v959, 0
    %967 = vmatprep.subr.mxu0 0.0
    %968 = vmatpush1.msra.mxu0 %v960
    %969 = vmatprep.subr.mxu0 0.0
    %970 = vmatpush1.msra.mxu0 %v961
    %971 = vmatprep.subr.mxu0 0.0
    %972 = vmatpush1.msra.mxu0 %v962
    %973 = vmatprep.subr.mxu0 0.0
    %974 = vmatpush1.msra.mxu0 %v963
    %975 = vmatprep.subr.mxu0 0.0
    %976 = vmatpush1.msra.mxu0 0.0
    %977 = vmatprep.subr.mxu0 0.0
    %978 = vmatpush1.msra.mxu0 0.0
    %979 = vmatprep.subr.mxu0 0.0
    %980 = vmatpush1.msra.mxu0 0.0
    %981 = vmatprep.subr.mxu0 0.0
    %982 = vmatpush1.msra.mxu0 0.0
    %983 = vmatprep.subr.mxu0 0.0
    %984 = vmatpush1.msra.mxu0 0.0
    %985 = vmatprep.subr.mxu0 0.0
    %986 = vmatpush1.msra.mxu0 0.0
    %987 = vmatprep.subr.mxu0 0.0
    %988 = vmatpush1.msra.mxu0 0.0
    %989 = vmatprep.subr.mxu0 0.0
    %990 = vmatpush1.msra.mxu0 0.0
    %991 = vmatprep.subr.mxu0 0.0
    %992 = vmatpush1.msra.mxu0 0.0
    %993 = vmatprep.subr.mxu0 0.0
    %994 = vmatpush1.msra.mxu0 0.0
    %995 = vmatprep.subr.mxu0 0.0
    %996 = vmatpush1.msra.mxu0 0.0
    %997 = vmatprep.subr.mxu0 0.0
    %998 = vmatpush1.msra.mxu0 0.0
    %999 = vmatprep.subr.mxu0 0.0
    %1000 = vmatpush1.msra.mxu0 0.0
    %1001 = vmatprep.subr.mxu0 0.0
    %1002 = vmatpush1.msra.mxu0 0.0
    %1003 = vmatprep.subr.mxu0 0.0
    %1004 = vmatpush1.msra.mxu0 0.0
    %1005 = vmatprep.subr.mxu0 0.0
    %1006 = vmatpush1.msra.mxu0 0.0
    %1007 = vmatprep.subr.mxu0 0.0
    %1008 = vmatpush1.msra.mxu0 0.0
    %1009 = vmatprep.subr.mxu0 0.0
    %1010 = vmatpush1.msra.mxu0 0.0
    %1011 = vmatprep.subr.mxu0 0.0
    %1012 = vmatpush1.msra.mxu0 0.0
    %1013 = vmatprep.subr.mxu0 0.0
    %1014 = vmatpush1.msra.mxu0 0.0
    %1015 = vmatprep.subr.mxu0 0.0
    %1016 = vmatpush1.msra.mxu0 0.0
    %1017 = vmatprep.subr.mxu0 0.0
    %1018 = vmatpush1.msra.mxu0 0.0
    %1019 = vmatprep.subr.mxu0 0.0
    %1020 = vmatpush1.msra.mxu0 0.0
    %1021 = vmatprep.subr.mxu0 0.0
    %1022 = vmatpush1.msra.mxu0 0.0
    %1023 = vmatprep.subr.mxu0 0.0
    %1024 = vmatpush1.msra.mxu0 0.0
    %1025 = vmatprep.subr.mxu0 0.0
    %1026 = vmatpush1.msra.mxu0 0.0
    %1027 = vmatprep.subr.mxu0 0.0
    %1028 = vmatpush1.msra.mxu0 0.0
    %1029 = vmatprep.subr.mxu0 0.0
    %1030 = vmatpush1.msra.mxu0 0.0
    %1031 = vmatprep.mubr.f32.mxu0 0.0
    %1032 = vmatmul.mubr.f32.gmra.mrb[0].mxu0 %v965
    %v1033 = vpop.f32.mrb[0].mxu0
    %v1034 = vadd.f32 0.0, %v1033
    %v1035 = vpop.f32.mrb[0].mxu0
    %1036 = vdwg.mxu0
    %v1037 = vadd.f32 %v958, %v1034
    %v1038 = vld [vmem:[#allocation5] sm:$0x3]
    %v1039 = vxor.u32 %v1037, 2147483648
    %v1040 = vmul.f32 %v1039, 1.442695
    %v1041 = vpow.pop %v1040
    %v1042 = vadd.f32 %v1041, 1.0
    %v1043 = vrcp.pop %v1042
    %v1044 = vmul.f32 1.0, %v1043
    %v1045 = vtanh.pop %v1037
    %1047 = vrot.lane.b32.xlu0 %v1038, 32
    %v1048 = vpop.permute.xlu0 %1047
    %v1050 = vmul.f32 %v1044, %v1048
    %1052 = vrot.lane.b32.xlu0 %v1045, 64
    %v1053 = vpop.permute.xlu0 %1052
    %v1055 = vmul.f32 %v1044, %v1053
    %1057 = vrot.lane.b32.xlu0 %v1055, 32
    %v1058 = vpop.permute.xlu0 %1057
    %v1060 = vadd.f32 %v1050, %v1058
    %v1061 = vtanh.pop %v1060
    %1063 = vrot.lane.b32.xlu0 %v1061, 64
    %v1064 = vpop.permute.xlu0 %1063
    %v1066 = vmul.f32 %v1044, %v1064
    %1068 = vrot.lane.b32.xlu0 %v1066, 32
    %v1069 = vpop.permute.xlu0 %1068
    %1071 = vst.msk [vmem:[#allocation4] sm:$0x3] %vm84, %v1069
    %1073 = vrot.lane.b32.xlu0 %v1060, 96
    %v1074 = vpop.permute.xlu0 %1073
    %1076 = vst.msk [vmem:[#allocation5] sm:$0x3] %vm84, %v1074
    %1077 = vrot.lane.b32.xlu0 %v1066, 64
    %v1078 = vpop.permute.xlu0 %1077
    %s1080 = scalar_lea.vmem [#allocation14], 8
    %1081 = vst.msk [vmem:[%s1080] sm:$0x3] %vm339, %v1078
    %s1082 = scalar_lea.vmem [#allocation6], 8
    %v1083 = vld [vmem:[%s1082] sm:$0x3]
    %v1084 = vld [vmem:[#allocation2] sm:$0x3]
    %v1085 = vld [vmem:[#allocation11] sm:$0xff]
    %v1086 = vld [vmem:[#allocation11 + $0x8] sm:$0xff]
    %v1087 = vld [vmem:[#allocation11 + $0x10] sm:$0xff]
    %v1088 = vld [vmem:[#allocation11 + $0x18] sm:$0xff]
    %v1090 = vsel %vm100, %v1084, 0
    %1092 = vmatprep.subr.mxu0 0.0
    %1093 = vmatpush1.msra.mxu0 %v1085
    %1094 = vmatprep.subr.mxu0 0.0
    %1095 = vmatpush1.msra.mxu0 %v1086
    %1096 = vmatprep.subr.mxu0 0.0
    %1097 = vmatpush1.msra.mxu0 %v1087
    %1098 = vmatprep.subr.mxu0 0.0
    %1099 = vmatpush1.msra.mxu0 %v1088
    %1100 = vmatprep.subr.mxu0 0.0
    %1101 = vmatpush1.msra.mxu0 0.0
    %1102 = vmatprep.subr.mxu0 0.0
    %1103 = vmatpush1.msra.mxu0 0.0
    %1104 = vmatprep.subr.mxu0 0.0
    %1105 = vmatpush1.msra.mxu0 0.0
    %1106 = vmatprep.subr.mxu0 0.0
    %1107 = vmatpush1.msra.mxu0 0.0
    %1108 = vmatprep.subr.mxu0 0.0
    %1109 = vmatpush1.msra.mxu0 0.0
    %1110 = vmatprep.subr.mxu0 0.0
    %1111 = vmatpush1.msra.mxu0 0.0
    %1112 = vmatprep.subr.mxu0 0.0
    %1113 = vmatpush1.msra.mxu0 0.0
    %1114 = vmatprep.subr.mxu0 0.0
    %1115 = vmatpush1.msra.mxu0 0.0
    %1116 = vmatprep.subr.mxu0 0.0
    %1117 = vmatpush1.msra.mxu0 0.0
    %1118 = vmatprep.subr.mxu0 0.0
    %1119 = vmatpush1.msra.mxu0 0.0
    %1120 = vmatprep.subr.mxu0 0.0
    %1121 = vmatpush1.msra.mxu0 0.0
    %1122 = vmatprep.subr.mxu0 0.0
    %1123 = vmatpush1.msra.mxu0 0.0
    %1124 = vmatprep.subr.mxu0 0.0
    %1125 = vmatpush1.msra.mxu0 0.0
    %1126 = vmatprep.subr.mxu0 0.0
    %1127 = vmatpush1.msra.mxu0 0.0
    %1128 = vmatprep.subr.mxu0 0.0
    %1129 = vmatpush1.msra.mxu0 0.0
    %1130 = vmatprep.subr.mxu0 0.0
    %1131 = vmatpush1.msra.mxu0 0.0
    %1132 = vmatprep.subr.mxu0 0.0
    %1133 = vmatpush1.msra.mxu0 0.0
    %1134 = vmatprep.subr.mxu0 0.0
    %1135 = vmatpush1.msra.mxu0 0.0
    %1136 = vmatprep.subr.mxu0 0.0
    %1137 = vmatpush1.msra.mxu0 0.0
    %1138 = vmatprep.subr.mxu0 0.0
    %1139 = vmatpush1.msra.mxu0 0.0
    %1140 = vmatprep.subr.mxu0 0.0
    %1141 = vmatpush1.msra.mxu0 0.0
    %1142 = vmatprep.subr.mxu0 0.0
    %1143 = vmatpush1.msra.mxu0 0.0
    %1144 = vmatprep.subr.mxu0 0.0
    %1145 = vmatpush1.msra.mxu0 0.0
    %1146 = vmatprep.subr.mxu0 0.0
    %1147 = vmatpush1.msra.mxu0 0.0
    %1148 = vmatprep.subr.mxu0 0.0
    %1149 = vmatpush1.msra.mxu0 0.0
    %1150 = vmatprep.subr.mxu0 0.0
    %1151 = vmatpush1.msra.mxu0 0.0
    %1152 = vmatprep.subr.mxu0 0.0
    %1153 = vmatpush1.msra.mxu0 0.0
    %1154 = vmatprep.subr.mxu0 0.0
    %1155 = vmatpush1.msra.mxu0 0.0
    %1156 = vmatprep.mubr.f32.mxu0 0.0
    %1157 = vmatmul.mubr.f32.gmra.mrb[0].mxu0 %v1090
    %v1158 = vpop.f32.mrb[0].mxu0
    %v1159 = vadd.f32 0.0, %v1158
    %v1160 = vpop.f32.mrb[0].mxu0
    %1161 = vdwg.mxu0
    %v1162 = vadd.f32 %v1083, %v1159
    %v1163 = vld [vmem:[#allocation3] sm:$0x3]
    %v1164 = vxor.u32 %v1162, 2147483648
    %v1165 = vmul.f32 %v1164, 1.442695
    %v1166 = vpow.pop %v1165
    %v1167 = vadd.f32 %v1166, 1.0
    %v1168 = vrcp.pop %v1167
    %v1169 = vmul.f32 1.0, %v1168
    %v1170 = vtanh.pop %v1162
    %1172 = vrot.lane.b32.xlu0 %v1163, 32
    %v1173 = vpop.permute.xlu0 %1172
    %v1175 = vmul.f32 %v1169, %v1173
    %1177 = vrot.lane.b32.xlu0 %v1170, 64
    %v1178 = vpop.permute.xlu0 %1177
    %v1180 = vmul.f32 %v1169, %v1178
    %1182 = vrot.lane.b32.xlu0 %v1180, 32
    %v1183 = vpop.permute.xlu0 %1182
    %v1185 = vadd.f32 %v1175, %v1183
    %v1186 = vtanh.pop %v1185
    %1188 = vrot.lane.b32.xlu0 %v1186, 64
    %v1189 = vpop.permute.xlu0 %1188
    %v1191 = vmul.f32 %v1169, %v1189
    %1193 = vrot.lane.b32.xlu0 %v1191, 32
    %v1194 = vpop.permute.xlu0 %1193
    %1196 = vst.msk [vmem:[#allocation2] sm:$0x3] %vm84, %v1194
    %1198 = vrot.lane.b32.xlu0 %v1185, 96
    %v1199 = vpop.permute.xlu0 %1198
    %1201 = vst.msk [vmem:[#allocation3] sm:$0x3] %vm84, %v1199
    %1202 = vst.msk [vmem:[%s1080] sm:$0x3] %vm84, %v1194
    %s1203 = scalar_lea.vmem [#allocation9], 6
    %v1204 = vld [vmem:[%s1203] sm:$0x3]
    %v1205 = vld [vmem:[#allocation4] sm:$0x3]
    %v1206 = vld [vmem:[#allocation12] sm:$0xff]
    %v1207 = vld [vmem:[#allocation12 + $0x8] sm:$0xff]
    %v1208 = vld [vmem:[#allocation12 + $0x10] sm:$0xff]
    %v1209 = vld [vmem:[#allocation12 + $0x18] sm:$0xff]
    %v1211 = vsel %vm100, %v1205, 0
    %1213 = vmatprep.subr.mxu0 0.0
    %1214 = vmatpush1.msra.mxu0 %v1206
    %1215 = vmatprep.subr.mxu0 0.0
    %1216 = vmatpush1.msra.mxu0 %v1207
    %1217 = vmatprep.subr.mxu0 0.0
    %1218 = vmatpush1.msra.mxu0 %v1208
    %1219 = vmatprep.subr.mxu0 0.0
    %1220 = vmatpush1.msra.mxu0 %v1209
    %1221 = vmatprep.subr.mxu0 0.0
    %1222 = vmatpush1.msra.mxu0 0.0
    %1223 = vmatprep.subr.mxu0 0.0
    %1224 = vmatpush1.msra.mxu0 0.0
    %1225 = vmatprep.subr.mxu0 0.0
    %1226 = vmatpush1.msra.mxu0 0.0
    %1227 = vmatprep.subr.mxu0 0.0
    %1228 = vmatpush1.msra.mxu0 0.0
    %1229 = vmatprep.subr.mxu0 0.0
    %1230 = vmatpush1.msra.mxu0 0.0
    %1231 = vmatprep.subr.mxu0 0.0
    %1232 = vmatpush1.msra.mxu0 0.0
    %1233 = vmatprep.subr.mxu0 0.0
    %1234 = vmatpush1.msra.mxu0 0.0
    %1235 = vmatprep.subr.mxu0 0.0
    %1236 = vmatpush1.msra.mxu0 0.0
    %1237 = vmatprep.subr.mxu0 0.0
    %1238 = vmatpush1.msra.mxu0 0.0
    %1239 = vmatprep.subr.mxu0 0.0
    %1240 = vmatpush1.msra.mxu0 0.0
    %1241 = vmatprep.subr.mxu0 0.0
    %1242 = vmatpush1.msra.mxu0 0.0
    %1243 = vmatprep.subr.mxu0 0.0
    %1244 = vmatpush1.msra.mxu0 0.0
    %1245 = vmatprep.subr.mxu0 0.0
    %1246 = vmatpush1.msra.mxu0 0.0
    %1247 = vmatprep.subr.mxu0 0.0
    %1248 = vmatpush1.msra.mxu0 0.0
    %1249 = vmatprep.subr.mxu0 0.0
    %1250 = vmatpush1.msra.mxu0 0.0
    %1251 = vmatprep.subr.mxu0 0.0
    %1252 = vmatpush1.msra.mxu0 0.0
    %1253 = vmatprep.subr.mxu0 0.0
    %1254 = vmatpush1.msra.mxu0 0.0
    %1255 = vmatprep.subr.mxu0 0.0
    %1256 = vmatpush1.msra.mxu0 0.0
    %1257 = vmatprep.subr.mxu0 0.0
    %1258 = vmatpush1.msra.mxu0 0.0
    %1259 = vmatprep.subr.mxu0 0.0
    %1260 = vmatpush1.msra.mxu0 0.0
    %1261 = vmatprep.subr.mxu0 0.0
    %1262 = vmatpush1.msra.mxu0 0.0
    %1263 = vmatprep.subr.mxu0 0.0
    %1264 = vmatpush1.msra.mxu0 0.0
    %1265 = vmatprep.subr.mxu0 0.0
    %1266 = vmatpush1.msra.mxu0 0.0
    %1267 = vmatprep.subr.mxu0 0.0
    %1268 = vmatpush1.msra.mxu0 0.0
    %1269 = vmatprep.subr.mxu0 0.0
    %1270 = vmatpush1.msra.mxu0 0.0
    %1271 = vmatprep.subr.mxu0 0.0
    %1272 = vmatpush1.msra.mxu0 0.0
    %1273 = vmatprep.subr.mxu0 0.0
    %1274 = vmatpush1.msra.mxu0 0.0
    %1275 = vmatprep.subr.mxu0 0.0
    %1276 = vmatpush1.msra.mxu0 0.0
    %1277 = vmatprep.mubr.f32.mxu0 0.0
    %1278 = vmatmul.mubr.f32.gmra.mrb[0].mxu0 %v1211
    %v1279 = vpop.f32.mrb[0].mxu0
    %v1280 = vadd.f32 0.0, %v1279
    %v1281 = vpop.f32.mrb[0].mxu0
    %1282 = vdwg.mxu0
    %v1283 = vadd.f32 %v1204, %v1280
    %v1284 = vld [vmem:[#allocation5] sm:$0x3]
    %v1285 = vxor.u32 %v1283, 2147483648
    %v1286 = vmul.f32 %v1285, 1.442695
    %v1287 = vpow.pop %v1286
    %v1288 = vadd.f32 %v1287, 1.0
    %v1289 = vrcp.pop %v1288
    %v1290 = vmul.f32 1.0, %v1289
    %v1291 = vtanh.pop %v1283
    %1293 = vrot.lane.b32.xlu0 %v1284, 32
    %v1294 = vpop.permute.xlu0 %1293
    %v1296 = vmul.f32 %v1290, %v1294
    %1298 = vrot.lane.b32.xlu0 %v1291, 64
    %v1299 = vpop.permute.xlu0 %1298
    %v1301 = vmul.f32 %v1290, %v1299
    %1303 = vrot.lane.b32.xlu0 %v1301, 32
    %v1304 = vpop.permute.xlu0 %1303
    %v1306 = vadd.f32 %v1296, %v1304
    %v1307 = vtanh.pop %v1306
    %1309 = vrot.lane.b32.xlu0 %v1307, 64
    %v1310 = vpop.permute.xlu0 %1309
    %v1312 = vmul.f32 %v1290, %v1310
    %1314 = vrot.lane.b32.xlu0 %v1312, 32
    %v1315 = vpop.permute.xlu0 %1314
    %1317 = vst.msk [vmem:[#allocation4] sm:$0x3] %vm84, %v1315
    %1319 = vrot.lane.b32.xlu0 %v1306, 96
    %v1320 = vpop.permute.xlu0 %1319
    %1322 = vst.msk [vmem:[#allocation5] sm:$0x3] %vm84, %v1320
    %1323 = vrot.lane.b32.xlu0 %v1312, 64
    %v1324 = vpop.permute.xlu0 %1323
    %1326 = vst.msk [vmem:[%s955] sm:$0x3] %vm339, %v1324
    %s1327 = scalar_lea.vmem [#allocation6], 10
    %v1328 = vld [vmem:[%s1327] sm:$0x3]
    %v1329 = vld [vmem:[#allocation2] sm:$0x3]
    %v1330 = vld [vmem:[#allocation11] sm:$0xff]
    %v1331 = vld [vmem:[#allocation11 + $0x8] sm:$0xff]
    %v1332 = vld [vmem:[#allocation11 + $0x10] sm:$0xff]
    %v1333 = vld [vmem:[#allocation11 + $0x18] sm:$0xff]
    %v1335 = vsel %vm100, %v1329, 0
    %1337 = vmatprep.subr.mxu0 0.0
    %1338 = vmatpush1.msra.mxu0 %v1330
    %1339 = vmatprep.subr.mxu0 0.0
    %1340 = vmatpush1.msra.mxu0 %v1331
    %1341 = vmatprep.subr.mxu0 0.0
    %1342 = vmatpush1.msra.mxu0 %v1332
    %1343 = vmatprep.subr.mxu0 0.0
    %1344 = vmatpush1.msra.mxu0 %v1333
    %1345 = vmatprep.subr.mxu0 0.0
    %1346 = vmatpush1.msra.mxu0 0.0
    %1347 = vmatprep.subr.mxu0 0.0
    %1348 = vmatpush1.msra.mxu0 0.0
    %1349 = vmatprep.subr.mxu0 0.0
    %1350 = vmatpush1.msra.mxu0 0.0
    %1351 = vmatprep.subr.mxu0 0.0
    %1352 = vmatpush1.msra.mxu0 0.0
    %1353 = vmatprep.subr.mxu0 0.0
    %1354 = vmatpush1.msra.mxu0 0.0
    %1355 = vmatprep.subr.mxu0 0.0
    %1356 = vmatpush1.msra.mxu0 0.0
    %1357 = vmatprep.subr.mxu0 0.0
    %1358 = vmatpush1.msra.mxu0 0.0
    %1359 = vmatprep.subr.mxu0 0.0
    %1360 = vmatpush1.msra.mxu0 0.0
    %1361 = vmatprep.subr.mxu0 0.0
    %1362 = vmatpush1.msra.mxu0 0.0
    %1363 = vmatprep.subr.mxu0 0.0
    %1364 = vmatpush1.msra.mxu0 0.0
    %1365 = vmatprep.subr.mxu0 0.0
    %1366 = vmatpush1.msra.mxu0 0.0
    %1367 = vmatprep.subr.mxu0 0.0
    %1368 = vmatpush1.msra.mxu0 0.0
    %1369 = vmatprep.subr.mxu0 0.0
    %1370 = vmatpush1.msra.mxu0 0.0
    %1371 = vmatprep.subr.mxu0 0.0
    %1372 = vmatpush1.msra.mxu0 0.0
    %1373 = vmatprep.subr.mxu0 0.0
    %1374 = vmatpush1.msra.mxu0 0.0
    %1375 = vmatprep.subr.mxu0 0.0
    %1376 = vmatpush1.msra.mxu0 0.0
    %1377 = vmatprep.subr.mxu0 0.0
    %1378 = vmatpush1.msra.mxu0 0.0
    %1379 = vmatprep.subr.mxu0 0.0
    %1380 = vmatpush1.msra.mxu0 0.0
    %1381 = vmatprep.subr.mxu0 0.0
    %1382 = vmatpush1.msra.mxu0 0.0
    %1383 = vmatprep.subr.mxu0 0.0
    %1384 = vmatpush1.msra.mxu0 0.0
    %1385 = vmatprep.subr.mxu0 0.0
    %1386 = vmatpush1.msra.mxu0 0.0
    %1387 = vmatprep.subr.mxu0 0.0
    %1388 = vmatpush1.msra.mxu0 0.0
    %1389 = vmatprep.subr.mxu0 0.0
    %1390 = vmatpush1.msra.mxu0 0.0
    %1391 = vmatprep.subr.mxu0 0.0
    %1392 = vmatpush1.msra.mxu0 0.0
    %1393 = vmatprep.subr.mxu0 0.0
    %1394 = vmatpush1.msra.mxu0 0.0
    %1395 = vmatprep.subr.mxu0 0.0
    %1396 = vmatpush1.msra.mxu0 0.0
    %1397 = vmatprep.subr.mxu0 0.0
    %1398 = vmatpush1.msra.mxu0 0.0
    %1399 = vmatprep.subr.mxu0 0.0
    %1400 = vmatpush1.msra.mxu0 0.0
    %1401 = vmatprep.mubr.f32.mxu0 0.0
    %1402 = vmatmul.mubr.f32.gmra.mrb[0].mxu0 %v1335
    %v1403 = vpop.f32.mrb[0].mxu0
    %v1404 = vadd.f32 0.0, %v1403
    %v1405 = vpop.f32.mrb[0].mxu0
    %1406 = vdwg.mxu0
    %v1407 = vadd.f32 %v1328, %v1404
    %v1408 = vld [vmem:[#allocation3] sm:$0x3]
    %v1409 = vxor.u32 %v1407, 2147483648
    %v1410 = vmul.f32 %v1409, 1.442695
    %v1411 = vpow.pop %v1410
    %v1412 = vadd.f32 %v1411, 1.0
    %v1413 = vrcp.pop %v1412
    %v1414 = vmul.f32 1.0, %v1413
    %v1415 = vtanh.pop %v1407
    %1417 = vrot.lane.b32.xlu0 %v1408, 32
    %v1418 = vpop.permute.xlu0 %1417
    %v1420 = vmul.f32 %v1414, %v1418
    %1422 = vrot.lane.b32.xlu0 %v1415, 64
    %v1423 = vpop.permute.xlu0 %1422
    %v1425 = vmul.f32 %v1414, %v1423
    %1427 = vrot.lane.b32.xlu0 %v1425, 32
    %v1428 = vpop.permute.xlu0 %1427
    %v1430 = vadd.f32 %v1420, %v1428
    %v1431 = vtanh.pop %v1430
    %1433 = vrot.lane.b32.xlu0 %v1431, 64
    %v1434 = vpop.permute.xlu0 %1433
    %v1436 = vmul.f32 %v1414, %v1434
    %1438 = vrot.lane.b32.xlu0 %v1436, 32
    %v1439 = vpop.permute.xlu0 %1438
    %1441 = vst.msk [vmem:[#allocation2] sm:$0x3] %vm84, %v1439
    %1443 = vrot.lane.b32.xlu0 %v1430, 96
    %v1444 = vpop.permute.xlu0 %1443
    %1446 = vst.msk [vmem:[#allocation3] sm:$0x3] %vm84, %v1444
    %1447 = vst.msk [vmem:[%s833] sm:$0x3] %vm84, %v1439
    %s1448 = scalar_lea.vmem [#allocation9], 4
    %v1449 = vld [vmem:[%s1448] sm:$0x3]
    %v1450 = vld [vmem:[#allocation4] sm:$0x3]
    %v1451 = vld [vmem:[#allocation12] sm:$0xff]
    %v1452 = vld [vmem:[#allocation12 + $0x8] sm:$0xff]
    %v1453 = vld [vmem:[#allocation12 + $0x10] sm:$0xff]
    %v1454 = vld [vmem:[#allocation12 + $0x18] sm:$0xff]
    %v1456 = vsel %vm100, %v1450, 0
    %1458 = vmatprep.subr.mxu0 0.0
    %1459 = vmatpush1.msra.mxu0 %v1451
    %1460 = vmatprep.subr.mxu0 0.0
    %1461 = vmatpush1.msra.mxu0 %v1452
    %1462 = vmatprep.subr.mxu0 0.0
    %1463 = vmatpush1.msra.mxu0 %v1453
    %1464 = vmatprep.subr.mxu0 0.0
    %1465 = vmatpush1.msra.mxu0 %v1454
    %1466 = vmatprep.subr.mxu0 0.0
    %1467 = vmatpush1.msra.mxu0 0.0
    %1468 = vmatprep.subr.mxu0 0.0
    %1469 = vmatpush1.msra.mxu0 0.0
    %1470 = vmatprep.subr.mxu0 0.0
    %1471 = vmatpush1.msra.mxu0 0.0
    %1472 = vmatprep.subr.mxu0 0.0
    %1473 = vmatpush1.msra.mxu0 0.0
    %1474 = vmatprep.subr.mxu0 0.0
    %1475 = vmatpush1.msra.mxu0 0.0
    %1476 = vmatprep.subr.mxu0 0.0
    %1477 = vmatpush1.msra.mxu0 0.0
    %1478 = vmatprep.subr.mxu0 0.0
    %1479 = vmatpush1.msra.mxu0 0.0
    %1480 = vmatprep.subr.mxu0 0.0
    %1481 = vmatpush1.msra.mxu0 0.0
    %1482 = vmatprep.subr.mxu0 0.0
    %1483 = vmatpush1.msra.mxu0 0.0
    %1484 = vmatprep.subr.mxu0 0.0
    %1485 = vmatpush1.msra.mxu0 0.0
    %1486 = vmatprep.subr.mxu0 0.0
    %1487 = vmatpush1.msra.mxu0 0.0
    %1488 = vmatprep.subr.mxu0 0.0
    %1489 = vmatpush1.msra.mxu0 0.0
    %1490 = vmatprep.subr.mxu0 0.0
    %1491 = vmatpush1.msra.mxu0 0.0
    %1492 = vmatprep.subr.mxu0 0.0
    %1493 = vmatpush1.msra.mxu0 0.0
    %1494 = vmatprep.subr.mxu0 0.0
    %1495 = vmatpush1.msra.mxu0 0.0
    %1496 = vmatprep.subr.mxu0 0.0
    %1497 = vmatpush1.msra.mxu0 0.0
    %1498 = vmatprep.subr.mxu0 0.0
    %1499 = vmatpush1.msra.mxu0 0.0
    %1500 = vmatprep.subr.mxu0 0.0
    %1501 = vmatpush1.msra.mxu0 0.0
    %1502 = vmatprep.subr.mxu0 0.0
    %1503 = vmatpush1.msra.mxu0 0.0
    %1504 = vmatprep.subr.mxu0 0.0
    %1505 = vmatpush1.msra.mxu0 0.0
    %1506 = vmatprep.subr.mxu0 0.0
    %1507 = vmatpush1.msra.mxu0 0.0
    %1508 = vmatprep.subr.mxu0 0.0
    %1509 = vmatpush1.msra.mxu0 0.0
    %1510 = vmatprep.subr.mxu0 0.0
    %1511 = vmatpush1.msra.mxu0 0.0
    %1512 = vmatprep.subr.mxu0 0.0
    %1513 = vmatpush1.msra.mxu0 0.0
    %1514 = vmatprep.subr.mxu0 0.0
    %1515 = vmatpush1.msra.mxu0 0.0
    %1516 = vmatprep.subr.mxu0 0.0
    %1517 = vmatpush1.msra.mxu0 0.0
    %1518 = vmatprep.subr.mxu0 0.0
    %1519 = vmatpush1.msra.mxu0 0.0
    %1520 = vmatprep.subr.mxu0 0.0
    %1521 = vmatpush1.msra.mxu0 0.0
    %1522 = vmatprep.mubr.f32.mxu0 0.0
    %1523 = vmatmul.mubr.f32.gmra.mrb[0].mxu0 %v1456
    %v1524 = vpop.f32.mrb[0].mxu0
    %v1525 = vadd.f32 0.0, %v1524
    %v1526 = vpop.f32.mrb[0].mxu0
    %1527 = vdwg.mxu0
    %v1528 = vadd.f32 %v1449, %v1525
    %v1529 = vld [vmem:[#allocation5] sm:$0x3]
    %v1530 = vxor.u32 %v1528, 2147483648
    %v1531 = vmul.f32 %v1530, 1.442695
    %v1532 = vpow.pop %v1531
    %v1533 = vadd.f32 %v1532, 1.0
    %v1534 = vrcp.pop %v1533
    %v1535 = vmul.f32 1.0, %v1534
    %v1536 = vtanh.pop %v1528
    %1538 = vrot.lane.b32.xlu0 %v1529, 32
    %v1539 = vpop.permute.xlu0 %1538
    %v1541 = vmul.f32 %v1535, %v1539
    %1543 = vrot.lane.b32.xlu0 %v1536, 64
    %v1544 = vpop.permute.xlu0 %1543
    %v1546 = vmul.f32 %v1535, %v1544
    %1548 = vrot.lane.b32.xlu0 %v1546, 32
    %v1549 = vpop.permute.xlu0 %1548
    %v1551 = vadd.f32 %v1541, %v1549
    %v1552 = vtanh.pop %v1551
    %1554 = vrot.lane.b32.xlu0 %v1552, 64
    %v1555 = vpop.permute.xlu0 %1554
    %v1557 = vmul.f32 %v1535, %v1555
    %1559 = vrot.lane.b32.xlu0 %v1557, 32
    %v1560 = vpop.permute.xlu0 %1559
    %1562 = vst.msk [vmem:[#allocation4] sm:$0x3] %vm84, %v1560
    %1564 = vrot.lane.b32.xlu0 %v1551, 96
    %v1565 = vpop.permute.xlu0 %1564
    %1567 = vst.msk [vmem:[#allocation5] sm:$0x3] %vm84, %v1565
    %1568 = vrot.lane.b32.xlu0 %v1557, 64
    %v1569 = vpop.permute.xlu0 %1568
    %1571 = vst.msk [vmem:[%s708] sm:$0x3] %vm339, %v1569
    %s1572 = scalar_lea.vmem [#allocation6], 12
    %v1573 = vld [vmem:[%s1572] sm:$0x3]
    %v1574 = vld [vmem:[#allocation2] sm:$0x3]
    %v1575 = vld [vmem:[#allocation11] sm:$0xff]
    %v1576 = vld [vmem:[#allocation11 + $0x8] sm:$0xff]
    %v1577 = vld [vmem:[#allocation11 + $0x10] sm:$0xff]
    %v1578 = vld [vmem:[#allocation11 + $0x18] sm:$0xff]
    %v1580 = vsel %vm100, %v1574, 0
    %1582 = vmatprep.subr.mxu0 0.0
    %1583 = vmatpush1.msra.mxu0 %v1575
    %1584 = vmatprep.subr.mxu0 0.0
    %1585 = vmatpush1.msra.mxu0 %v1576
    %1586 = vmatprep.subr.mxu0 0.0
    %1587 = vmatpush1.msra.mxu0 %v1577
    %1588 = vmatprep.subr.mxu0 0.0
    %1589 = vmatpush1.msra.mxu0 %v1578
    %1590 = vmatprep.subr.mxu0 0.0
    %1591 = vmatpush1.msra.mxu0 0.0
    %1592 = vmatprep.subr.mxu0 0.0
    %1593 = vmatpush1.msra.mxu0 0.0
    %1594 = vmatprep.subr.mxu0 0.0
    %1595 = vmatpush1.msra.mxu0 0.0
    %1596 = vmatprep.subr.mxu0 0.0
    %1597 = vmatpush1.msra.mxu0 0.0
    %1598 = vmatprep.subr.mxu0 0.0
    %1599 = vmatpush1.msra.mxu0 0.0
    %1600 = vmatprep.subr.mxu0 0.0
    %1601 = vmatpush1.msra.mxu0 0.0
    %1602 = vmatprep.subr.mxu0 0.0
    %1603 = vmatpush1.msra.mxu0 0.0
    %1604 = vmatprep.subr.mxu0 0.0
    %1605 = vmatpush1.msra.mxu0 0.0
    %1606 = vmatprep.subr.mxu0 0.0
    %1607 = vmatpush1.msra.mxu0 0.0
    %1608 = vmatprep.subr.mxu0 0.0
    %1609 = vmatpush1.msra.mxu0 0.0
    %1610 = vmatprep.subr.mxu0 0.0
    %1611 = vmatpush1.msra.mxu0 0.0
    %1612 = vmatprep.subr.mxu0 0.0
    %1613 = vmatpush1.msra.mxu0 0.0
    %1614 = vmatprep.subr.mxu0 0.0
    %1615 = vmatpush1.msra.mxu0 0.0
    %1616 = vmatprep.subr.mxu0 0.0
    %1617 = vmatpush1.msra.mxu0 0.0
    %1618 = vmatprep.subr.mxu0 0.0
    %1619 = vmatpush1.msra.mxu0 0.0
    %1620 = vmatprep.subr.mxu0 0.0
    %1621 = vmatpush1.msra.mxu0 0.0
    %1622 = vmatprep.subr.mxu0 0.0
    %1623 = vmatpush1.msra.mxu0 0.0
    %1624 = vmatprep.subr.mxu0 0.0
    %1625 = vmatpush1.msra.mxu0 0.0
    %1626 = vmatprep.subr.mxu0 0.0
    %1627 = vmatpush1.msra.mxu0 0.0
    %1628 = vmatprep.subr.mxu0 0.0
    %1629 = vmatpush1.msra.mxu0 0.0
    %1630 = vmatprep.subr.mxu0 0.0
    %1631 = vmatpush1.msra.mxu0 0.0
    %1632 = vmatprep.subr.mxu0 0.0
    %1633 = vmatpush1.msra.mxu0 0.0
    %1634 = vmatprep.subr.mxu0 0.0
    %1635 = vmatpush1.msra.mxu0 0.0
    %1636 = vmatprep.subr.mxu0 0.0
    %1637 = vmatpush1.msra.mxu0 0.0
    %1638 = vmatprep.subr.mxu0 0.0
    %1639 = vmatpush1.msra.mxu0 0.0
    %1640 = vmatprep.subr.mxu0 0.0
    %1641 = vmatpush1.msra.mxu0 0.0
    %1642 = vmatprep.subr.mxu0 0.0
    %1643 = vmatpush1.msra.mxu0 0.0
    %1644 = vmatprep.subr.mxu0 0.0
    %1645 = vmatpush1.msra.mxu0 0.0
    %1646 = vmatprep.mubr.f32.mxu0 0.0
    %1647 = vmatmul.mubr.f32.gmra.mrb[0].mxu0 %v1580
    %v1648 = vpop.f32.mrb[0].mxu0
    %v1649 = vadd.f32 0.0, %v1648
    %v1650 = vpop.f32.mrb[0].mxu0
    %1651 = vdwg.mxu0
    %v1652 = vadd.f32 %v1573, %v1649
    %v1653 = vld [vmem:[#allocation3] sm:$0x3]
    %v1654 = vxor.u32 %v1652, 2147483648
    %v1655 = vmul.f32 %v1654, 1.442695
    %v1656 = vpow.pop %v1655
    %v1657 = vadd.f32 %v1656, 1.0
    %v1658 = vrcp.pop %v1657
    %v1659 = vmul.f32 1.0, %v1658
    %v1660 = vtanh.pop %v1652
    %1662 = vrot.lane.b32.xlu0 %v1653, 32
    %v1663 = vpop.permute.xlu0 %1662
    %v1665 = vmul.f32 %v1659, %v1663
    %1667 = vrot.lane.b32.xlu0 %v1660, 64
    %v1668 = vpop.permute.xlu0 %1667
    %v1670 = vmul.f32 %v1659, %v1668
    %1672 = vrot.lane.b32.xlu0 %v1670, 32
    %v1673 = vpop.permute.xlu0 %1672
    %v1675 = vadd.f32 %v1665, %v1673
    %v1676 = vtanh.pop %v1675
    %1678 = vrot.lane.b32.xlu0 %v1676, 64
    %v1679 = vpop.permute.xlu0 %1678
    %v1681 = vmul.f32 %v1659, %v1679
    %1683 = vrot.lane.b32.xlu0 %v1681, 32
    %v1684 = vpop.permute.xlu0 %1683
    %1686 = vst.msk [vmem:[#allocation2] sm:$0x3] %vm84, %v1684
    %1688 = vrot.lane.b32.xlu0 %v1675, 96
    %v1689 = vpop.permute.xlu0 %1688
    %1691 = vst.msk [vmem:[#allocation3] sm:$0x3] %vm84, %v1689
    %1692 = vst.msk [vmem:[%s586] sm:$0x3] %vm84, %v1684
    %s1693 = scalar_lea.vmem [#allocation9], 2
    %v1694 = vld [vmem:[%s1693] sm:$0x3]
    %v1695 = vld [vmem:[#allocation4] sm:$0x3]
    %v1696 = vld [vmem:[#allocation12] sm:$0xff]
    %v1697 = vld [vmem:[#allocation12 + $0x8] sm:$0xff]
    %v1698 = vld [vmem:[#allocation12 + $0x10] sm:$0xff]
    %v1699 = vld [vmem:[#allocation12 + $0x18] sm:$0xff]
    %v1701 = vsel %vm100, %v1695, 0
    %1703 = vmatprep.subr.mxu0 0.0
    %1704 = vmatpush1.msra.mxu0 %v1696
    %1705 = vmatprep.subr.mxu0 0.0
    %1706 = vmatpush1.msra.mxu0 %v1697
    %1707 = vmatprep.subr.mxu0 0.0
    %1708 = vmatpush1.msra.mxu0 %v1698
    %1709 = vmatprep.subr.mxu0 0.0
    %1710 = vmatpush1.msra.mxu0 %v1699
    %1711 = vmatprep.subr.mxu0 0.0
    %1712 = vmatpush1.msra.mxu0 0.0
    %1713 = vmatprep.subr.mxu0 0.0
    %1714 = vmatpush1.msra.mxu0 0.0
    %1715 = vmatprep.subr.mxu0 0.0
    %1716 = vmatpush1.msra.mxu0 0.0
    %1717 = vmatprep.subr.mxu0 0.0
    %1718 = vmatpush1.msra.mxu0 0.0
    %1719 = vmatprep.subr.mxu0 0.0
    %1720 = vmatpush1.msra.mxu0 0.0
    %1721 = vmatprep.subr.mxu0 0.0
    %1722 = vmatpush1.msra.mxu0 0.0
    %1723 = vmatprep.subr.mxu0 0.0
    %1724 = vmatpush1.msra.mxu0 0.0
    %1725 = vmatprep.subr.mxu0 0.0
    %1726 = vmatpush1.msra.mxu0 0.0
    %1727 = vmatprep.subr.mxu0 0.0
    %1728 = vmatpush1.msra.mxu0 0.0
    %1729 = vmatprep.subr.mxu0 0.0
    %1730 = vmatpush1.msra.mxu0 0.0
    %1731 = vmatprep.subr.mxu0 0.0
    %1732 = vmatpush1.msra.mxu0 0.0
    %1733 = vmatprep.subr.mxu0 0.0
    %1734 = vmatpush1.msra.mxu0 0.0
    %1735 = vmatprep.subr.mxu0 0.0
    %1736 = vmatpush1.msra.mxu0 0.0
    %1737 = vmatprep.subr.mxu0 0.0
    %1738 = vmatpush1.msra.mxu0 0.0
    %1739 = vmatprep.subr.mxu0 0.0
    %1740 = vmatpush1.msra.mxu0 0.0
    %1741 = vmatprep.subr.mxu0 0.0
    %1742 = vmatpush1.msra.mxu0 0.0
    %1743 = vmatprep.subr.mxu0 0.0
    %1744 = vmatpush1.msra.mxu0 0.0
    %1745 = vmatprep.subr.mxu0 0.0
    %1746 = vmatpush1.msra.mxu0 0.0
    %1747 = vmatprep.subr.mxu0 0.0
    %1748 = vmatpush1.msra.mxu0 0.0
    %1749 = vmatprep.subr.mxu0 0.0
    %1750 = vmatpush1.msra.mxu0 0.0
    %1751 = vmatprep.subr.mxu0 0.0
    %1752 = vmatpush1.msra.mxu0 0.0
    %1753 = vmatprep.subr.mxu0 0.0
    %1754 = vmatpush1.msra.mxu0 0.0
    %1755 = vmatprep.subr.mxu0 0.0
    %1756 = vmatpush1.msra.mxu0 0.0
    %1757 = vmatprep.subr.mxu0 0.0
    %1758 = vmatpush1.msra.mxu0 0.0
    %1759 = vmatprep.subr.mxu0 0.0
    %1760 = vmatpush1.msra.mxu0 0.0
    %1761 = vmatprep.subr.mxu0 0.0
    %1762 = vmatpush1.msra.mxu0 0.0
    %1763 = vmatprep.subr.mxu0 0.0
    %1764 = vmatpush1.msra.mxu0 0.0
    %1765 = vmatprep.subr.mxu0 0.0
    %1766 = vmatpush1.msra.mxu0 0.0
    %1767 = vmatprep.mubr.f32.mxu0 0.0
    %1768 = vmatmul.mubr.f32.gmra.mrb[0].mxu0 %v1701
    %v1769 = vpop.f32.mrb[0].mxu0
    %v1770 = vadd.f32 0.0, %v1769
    %v1771 = vpop.f32.mrb[0].mxu0
    %1772 = vdwg.mxu0
    %v1773 = vadd.f32 %v1694, %v1770
    %v1774 = vld [vmem:[#allocation5] sm:$0x3]
    %v1775 = vxor.u32 %v1773, 2147483648
    %v1776 = vmul.f32 %v1775, 1.442695
    %v1777 = vpow.pop %v1776
    %v1778 = vadd.f32 %v1777, 1.0
    %v1779 = vrcp.pop %v1778
    %v1780 = vmul.f32 1.0, %v1779
    %v1781 = vtanh.pop %v1773
    %1783 = vrot.lane.b32.xlu0 %v1774, 32
    %v1784 = vpop.permute.xlu0 %1783
    %v1786 = vmul.f32 %v1780, %v1784
    %1788 = vrot.lane.b32.xlu0 %v1781, 64
    %v1789 = vpop.permute.xlu0 %1788
    %v1791 = vmul.f32 %v1780, %v1789
    %1793 = vrot.lane.b32.xlu0 %v1791, 32
    %v1794 = vpop.permute.xlu0 %1793
    %v1796 = vadd.f32 %v1786, %v1794
    %v1797 = vtanh.pop %v1796
    %1799 = vrot.lane.b32.xlu0 %v1797, 64
    %v1800 = vpop.permute.xlu0 %1799
    %v1802 = vmul.f32 %v1780, %v1800
    %1804 = vrot.lane.b32.xlu0 %v1802, 32
    %v1805 = vpop.permute.xlu0 %1804
    %1807 = vst.msk [vmem:[#allocation4] sm:$0x3] %vm84, %v1805
    %1809 = vrot.lane.b32.xlu0 %v1796, 96
    %v1810 = vpop.permute.xlu0 %1809
    %1812 = vst.msk [vmem:[#allocation5] sm:$0x3] %vm84, %v1810
    %1813 = vrot.lane.b32.xlu0 %v1802, 64
    %v1814 = vpop.permute.xlu0 %1813
    %1816 = vst.msk [vmem:[%s461] sm:$0x3] %vm339, %v1814
    %s1817 = scalar_lea.vmem [#allocation6], 14
    %v1818 = vld [vmem:[%s1817] sm:$0x3]
    %v1819 = vld [vmem:[#allocation2] sm:$0x3]
    %v1820 = vld [vmem:[#allocation11] sm:$0xff]
    %v1821 = vld [vmem:[#allocation11 + $0x8] sm:$0xff]
    %v1822 = vld [vmem:[#allocation11 + $0x10] sm:$0xff]
    %v1823 = vld [vmem:[#allocation11 + $0x18] sm:$0xff]
    %v1825 = vsel %vm100, %v1819, 0
    %1827 = vmatprep.subr.mxu0 0.0
    %1828 = vmatpush1.msra.mxu0 %v1820
    %1829 = vmatprep.subr.mxu0 0.0
    %1830 = vmatpush1.msra.mxu0 %v1821
    %1831 = vmatprep.subr.mxu0 0.0
    %1832 = vmatpush1.msra.mxu0 %v1822
    %1833 = vmatprep.subr.mxu0 0.0
    %1834 = vmatpush1.msra.mxu0 %v1823
    %1835 = vmatprep.subr.mxu0 0.0
    %1836 = vmatpush1.msra.mxu0 0.0
    %1837 = vmatprep.subr.mxu0 0.0
    %1838 = vmatpush1.msra.mxu0 0.0
    %1839 = vmatprep.subr.mxu0 0.0
    %1840 = vmatpush1.msra.mxu0 0.0
    %1841 = vmatprep.subr.mxu0 0.0
    %1842 = vmatpush1.msra.mxu0 0.0
    %1843 = vmatprep.subr.mxu0 0.0
    %1844 = vmatpush1.msra.mxu0 0.0
    %1845 = vmatprep.subr.mxu0 0.0
    %1846 = vmatpush1.msra.mxu0 0.0
    %1847 = vmatprep.subr.mxu0 0.0
    %1848 = vmatpush1.msra.mxu0 0.0
    %1849 = vmatprep.subr.mxu0 0.0
    %1850 = vmatpush1.msra.mxu0 0.0
    %1851 = vmatprep.subr.mxu0 0.0
    %1852 = vmatpush1.msra.mxu0 0.0
    %1853 = vmatprep.subr.mxu0 0.0
    %1854 = vmatpush1.msra.mxu0 0.0
    %1855 = vmatprep.subr.mxu0 0.0
    %1856 = vmatpush1.msra.mxu0 0.0
    %1857 = vmatprep.subr.mxu0 0.0
    %1858 = vmatpush1.msra.mxu0 0.0
    %1859 = vmatprep.subr.mxu0 0.0
    %1860 = vmatpush1.msra.mxu0 0.0
    %1861 = vmatprep.subr.mxu0 0.0
    %1862 = vmatpush1.msra.mxu0 0.0
    %1863 = vmatprep.subr.mxu0 0.0
    %1864 = vmatpush1.msra.mxu0 0.0
    %1865 = vmatprep.subr.mxu0 0.0
    %1866 = vmatpush1.msra.mxu0 0.0
    %1867 = vmatprep.subr.mxu0 0.0
    %1868 = vmatpush1.msra.mxu0 0.0
    %1869 = vmatprep.subr.mxu0 0.0
    %1870 = vmatpush1.msra.mxu0 0.0
    %1871 = vmatprep.subr.mxu0 0.0
    %1872 = vmatpush1.msra.mxu0 0.0
    %1873 = vmatprep.subr.mxu0 0.0
    %1874 = vmatpush1.msra.mxu0 0.0
    %1875 = vmatprep.subr.mxu0 0.0
    %1876 = vmatpush1.msra.mxu0 0.0
    %1877 = vmatprep.subr.mxu0 0.0
    %1878 = vmatpush1.msra.mxu0 0.0
    %1879 = vmatprep.subr.mxu0 0.0
    %1880 = vmatpush1.msra.mxu0 0.0
    %1881 = vmatprep.subr.mxu0 0.0
    %1882 = vmatpush1.msra.mxu0 0.0
    %1883 = vmatprep.subr.mxu0 0.0
    %1884 = vmatpush1.msra.mxu0 0.0
    %1885 = vmatprep.subr.mxu0 0.0
    %1886 = vmatpush1.msra.mxu0 0.0
    %1887 = vmatprep.subr.mxu0 0.0
    %1888 = vmatpush1.msra.mxu0 0.0
    %1889 = vmatprep.subr.mxu0 0.0
    %1890 = vmatpush1.msra.mxu0 0.0
    %1891 = vmatprep.mubr.f32.mxu0 0.0
    %1892 = vmatmul.mubr.f32.gmra.mrb[0].mxu0 %v1825
    %v1893 = vpop.f32.mrb[0].mxu0
    %v1894 = vadd.f32 0.0, %v1893
    %v1895 = vpop.f32.mrb[0].mxu0
    %1896 = vdwg.mxu0
    %v1897 = vadd.f32 %v1818, %v1894
    %v1898 = vld [vmem:[#allocation3] sm:$0x3]
    %v1899 = vxor.u32 %v1897, 2147483648
    %v1900 = vmul.f32 %v1899, 1.442695
    %v1901 = vpow.pop %v1900
    %v1902 = vadd.f32 %v1901, 1.0
    %v1903 = vrcp.pop %v1902
    %v1904 = vmul.f32 1.0, %v1903
    %v1905 = vtanh.pop %v1897
    %1907 = vrot.lane.b32.xlu0 %v1898, 32
    %v1908 = vpop.permute.xlu0 %1907
    %v1910 = vmul.f32 %v1904, %v1908
    %1912 = vrot.lane.b32.xlu0 %v1905, 64
    %v1913 = vpop.permute.xlu0 %1912
    %v1915 = vmul.f32 %v1904, %v1913
    %1917 = vrot.lane.b32.xlu0 %v1915, 32
    %v1918 = vpop.permute.xlu0 %1917
    %v1920 = vadd.f32 %v1910, %v1918
    %v1921 = vtanh.pop %v1920
    %1923 = vrot.lane.b32.xlu0 %v1921, 64
    %v1924 = vpop.permute.xlu0 %1923
    %v1926 = vmul.f32 %v1904, %v1924
    %1928 = vrot.lane.b32.xlu0 %v1926, 32
    %v1929 = vpop.permute.xlu0 %1928
    %1931 = vst.msk [vmem:[#allocation2] sm:$0x3] %vm84, %v1929
    %1933 = vrot.lane.b32.xlu0 %v1920, 96
    %v1934 = vpop.permute.xlu0 %1933
    %1936 = vst.msk [vmem:[#allocation3] sm:$0x3] %vm84, %v1934
    %1937 = vst.msk [vmem:[%s338] sm:$0x3] %vm84, %v1929
    %v1938 = vld [vmem:[#allocation9] sm:$0x3]
    %v1939 = vld [vmem:[#allocation4] sm:$0x3]
    %v1940 = vld [vmem:[#allocation12] sm:$0xff]
    %v1941 = vld [vmem:[#allocation12 + $0x8] sm:$0xff]
    %v1942 = vld [vmem:[#allocation12 + $0x10] sm:$0xff]
    %v1943 = vld [vmem:[#allocation12 + $0x18] sm:$0xff]
    %v1945 = vsel %vm100, %v1939, 0
    %1947 = vmatprep.subr.mxu0 0.0
    %1948 = vmatpush1.msra.mxu0 %v1940
    %1949 = vmatprep.subr.mxu0 0.0
    %1950 = vmatpush1.msra.mxu0 %v1941
    %1951 = vmatprep.subr.mxu0 0.0
    %1952 = vmatpush1.msra.mxu0 %v1942
    %1953 = vmatprep.subr.mxu0 0.0
    %1954 = vmatpush1.msra.mxu0 %v1943
    %1955 = vmatprep.subr.mxu0 0.0
    %1956 = vmatpush1.msra.mxu0 0.0
    %1957 = vmatprep.subr.mxu0 0.0
    %1958 = vmatpush1.msra.mxu0 0.0
    %1959 = vmatprep.subr.mxu0 0.0
    %1960 = vmatpush1.msra.mxu0 0.0
    %1961 = vmatprep.subr.mxu0 0.0
    %1962 = vmatpush1.msra.mxu0 0.0
    %1963 = vmatprep.subr.mxu0 0.0
    %1964 = vmatpush1.msra.mxu0 0.0
    %1965 = vmatprep.subr.mxu0 0.0
    %1966 = vmatpush1.msra.mxu0 0.0
    %1967 = vmatprep.subr.mxu0 0.0
    %1968 = vmatpush1.msra.mxu0 0.0
    %1969 = vmatprep.subr.mxu0 0.0
    %1970 = vmatpush1.msra.mxu0 0.0
    %1971 = vmatprep.subr.mxu0 0.0
    %1972 = vmatpush1.msra.mxu0 0.0
    %1973 = vmatprep.subr.mxu0 0.0
    %1974 = vmatpush1.msra.mxu0 0.0
    %1975 = vmatprep.subr.mxu0 0.0
    %1976 = vmatpush1.msra.mxu0 0.0
    %1977 = vmatprep.subr.mxu0 0.0
    %1978 = vmatpush1.msra.mxu0 0.0
    %1979 = vmatprep.subr.mxu0 0.0
    %1980 = vmatpush1.msra.mxu0 0.0
    %1981 = vmatprep.subr.mxu0 0.0
    %1982 = vmatpush1.msra.mxu0 0.0
    %1983 = vmatprep.subr.mxu0 0.0
    %1984 = vmatpush1.msra.mxu0 0.0
    %1985 = vmatprep.subr.mxu0 0.0
    %1986 = vmatpush1.msra.mxu0 0.0
    %1987 = vmatprep.subr.mxu0 0.0
    %1988 = vmatpush1.msra.mxu0 0.0
    %1989 = vmatprep.subr.mxu0 0.0
    %1990 = vmatpush1.msra.mxu0 0.0
    %1991 = vmatprep.subr.mxu0 0.0
    %1992 = vmatpush1.msra.mxu0 0.0
    %1993 = vmatprep.subr.mxu0 0.0
    %1994 = vmatpush1.msra.mxu0 0.0
    %1995 = vmatprep.subr.mxu0 0.0
    %1996 = vmatpush1.msra.mxu0 0.0
    %1997 = vmatprep.subr.mxu0 0.0
    %1998 = vmatpush1.msra.mxu0 0.0
    %1999 = vmatprep.subr.mxu0 0.0
    %2000 = vmatpush1.msra.mxu0 0.0
    %2001 = vmatprep.subr.mxu0 0.0
    %2002 = vmatpush1.msra.mxu0 0.0
    %2003 = vmatprep.subr.mxu0 0.0
    %2004 = vmatpush1.msra.mxu0 0.0
    %2005 = vmatprep.subr.mxu0 0.0
    %2006 = vmatpush1.msra.mxu0 0.0
    %2007 = vmatprep.subr.mxu0 0.0
    %2008 = vmatpush1.msra.mxu0 0.0
    %2009 = vmatprep.subr.mxu0 0.0
    %2010 = vmatpush1.msra.mxu0 0.0
    %2011 = vmatprep.mubr.f32.mxu0 0.0
    %2012 = vmatmul.mubr.f32.gmra.mrb[0].mxu0 %v1945
    %v2013 = vpop.f32.mrb[0].mxu0
    %v2014 = vadd.f32 0.0, %v2013
    %v2015 = vpop.f32.mrb[0].mxu0
    %2016 = vdwg.mxu0
    %v2017 = vadd.f32 %v1938, %v2014
    %v2018 = vld [vmem:[#allocation5] sm:$0x3]
    %v2019 = vxor.u32 %v2017, 2147483648
    %v2020 = vmul.f32 %v2019, 1.442695
    %v2021 = vpow.pop %v2020
    %v2022 = vadd.f32 %v2021, 1.0
    %v2023 = vrcp.pop %v2022
    %v2024 = vmul.f32 1.0, %v2023
    %v2025 = vtanh.pop %v2017
    %2027 = vrot.lane.b32.xlu0 %v2018, 32
    %v2028 = vpop.permute.xlu0 %2027
    %v2030 = vmul.f32 %v2024, %v2028
    %2032 = vrot.lane.b32.xlu0 %v2025, 64
    %v2033 = vpop.permute.xlu0 %2032
    %v2035 = vmul.f32 %v2024, %v2033
    %2037 = vrot.lane.b32.xlu0 %v2035, 32
    %v2038 = vpop.permute.xlu0 %2037
    %v2040 = vadd.f32 %v2030, %v2038
    %v2041 = vtanh.pop %v2040
    %2043 = vrot.lane.b32.xlu0 %v2041, 64
    %v2044 = vpop.permute.xlu0 %2043
    %v2046 = vmul.f32 %v2024, %v2044
    %2048 = vrot.lane.b32.xlu0 %v2046, 32
    %v2049 = vpop.permute.xlu0 %2048
    %2051 = vst.msk [vmem:[#allocation4] sm:$0x3] %vm84, %v2049
    %2053 = vrot.lane.b32.xlu0 %v2040, 96
    %v2054 = vpop.permute.xlu0 %2053
    %2056 = vst.msk [vmem:[#allocation5] sm:$0x3] %vm84, %v2054
    %2057 = vrot.lane.b32.xlu0 %v2046, 64
    %v2058 = vpop.permute.xlu0 %2057
    %2060 = vst.msk [vmem:[#allocation14] sm:$0x3] %vm339, %v2058
    %v2061 = vld [vmem:[#allocation2] sm:$0x3]
    %2062 = vst.msk [vmem:[#allocation15] sm:$0x3] %vm84, %v2061
    %v2063 = vld [vmem:[#allocation4] sm:$0x3]
    %s2064 = scalar_lea.vmem [#allocation15], 2
    %2065 = vst.msk [vmem:[%s2064] sm:$0x3] %vm84, %v2063
    %v2066 = vld [vmem:[#allocation3] sm:$0x3]
    %2067 = vst.msk [vmem:[#allocation17] sm:$0x3] %vm84, %v2066
    %v2068 = vld [vmem:[#allocation5] sm:$0x3]
    %s2069 = scalar_lea.vmem [#allocation17], 2
    %2070 = vst.msk [vmem:[%s2069] sm:$0x3] %vm84, %v2068
    // Predicated region
    $region42: #{tpu_custom_call.1} parent=1 // pred_check
      _
    $region43: #{tpu_custom_call.1} parent=1 // pred_check_branch
      %2072 = sbr.rel (0) target = $region45
    $region44: #{tpu_custom_call.1} parent=1 // pred_region
      %s2074 = ssub.s32 256, 256
      %2075 = vsyncadd [#allocation8], %s2074
      %s2076 = sshll.u32 [#allocation14], 4
      %s2077 = int_to_ptr.vmem [resolvable:$true] %s2076
      %2082 = dma.vmem_to_hbm [thread:$0]  %s2077, 256, %s6, [#allocation8], 32, 32, 2
    $region45: #{tpu_custom_call.1} parent=1 // pred_fallthru
      _
    // Predicated region
    $region46: #{tpu_custom_call.1} parent=1 // pred_check
      _
    $region47: #{tpu_custom_call.1} parent=1 // pred_check_branch
      %2084 = sbr.rel (0) target = $region49
    $region48: #{tpu_custom_call.1} parent=1 // pred_region
      %s2086 = ssub.s32 64, 64
      %2087 = vsyncadd [#allocation16], %s2086
      %s2088 = sshll.u32 [#allocation15], 4
      %s2089 = int_to_ptr.vmem [resolvable:$true] %s2088
      %2094 = dma.vmem_to_hbm [thread:$0]  %s2089, 64, %s7, [#allocation16], 32, 32, 2
    $region49: #{tpu_custom_call.1} parent=1 // pred_fallthru
      _
    // Predicated region
    $region50: #{tpu_custom_call.1} parent=1 // pred_check
      _
    $region51: #{tpu_custom_call.1} parent=1 // pred_check_branch
      %2096 = sbr.rel (0) target = $region53
    $region52: #{tpu_custom_call.1} parent=1 // pred_region
      %s2098 = ssub.s32 64, 64
      %2099 = vsyncadd [#allocation16], %s2098
      %s2100 = sshll.u32 [#allocation17], 4
      %s2101 = int_to_ptr.vmem [resolvable:$true] %s2100
      %2106 = dma.vmem_to_hbm [thread:$0]  %s2101, 64, %s8, [#allocation16], 32, 32, 2
    $region53: #{tpu_custom_call.1} parent=1 // pred_fallthru
      _
    // Predicated region
    $region54: #{tpu_custom_call.1} parent=1 // pred_check
      _
    $region55: #{tpu_custom_call.1} parent=1 // pred_check_branch
      %2108 = sbr.rel (0) target = $region57
    $region56: #{tpu_custom_call.1} parent=1 // pred_region
      %2109 = dma.done [#allocation8], 256
    $region57: #{tpu_custom_call.1} parent=1 // pred_fallthru
      _
    // Predicated region
    $region58: #{tpu_custom_call.1} parent=1 // pred_check
      _
    $region59: #{tpu_custom_call.1} parent=1 // pred_check_branch
      %2111 = sbr.rel (0) target = $region61
    $region60: #{tpu_custom_call.1} parent=1 // pred_region
      %2112 = dma.done [#allocation16], 64
    $region61: #{tpu_custom_call.1} parent=1 // pred_fallthru
      _
    // Predicated region
    $region62: #{tpu_custom_call.1} parent=1 // pred_check
      _
    $region63: #{tpu_custom_call.1} parent=1 // pred_check_branch
      %2114 = sbr.rel (0) target = $region65
    $region64: #{tpu_custom_call.1} parent=1 // pred_region
      %2115 = dma.done [#allocation16], 64
    $region65: #{tpu_custom_call.1} parent=1 // pred_fallthru
      _
    %2116 = vsyncpa [#allocation7], 1
    %2117 = vsyncpa [#allocation10], 1
    %2118 = vsyncpa [#allocation13], 1
    %2119 = vsyncpa [#allocation8], 1
    %2120 = vsyncpa [#allocation16], 1

</llo_original>
